<compile_context>
chip_gen: v6e
topology: v6e:2x2x1
jax: 0.10.0
libtpu: 0.0.40
codegen_flags: <defaults>
</compile_context>

<pallas_src>
import functools

import jax
import jax.numpy as jnp
from jax import lax
from jax.experimental import pallas as pl
from jax.experimental.pallas import tpu as pltpu

EPS = 1e-5


def _voxrex_kernel(x_ref, s1_ref, b1_ref, m1_ref, s2_ref, b2_ref, m2_ref,
                   o_ref, *, d):
    """One batch-block per grid step.

    x_ref : (B*D, HWC)      f32   lane-dense input slab (batch*depth rows)
    s*/b* : (1, HWC)        f32   folded BN scale / bias, tiled over H*W
    m*    : (3*HWC, HWC)    bf16  K-concatenated conv "plane" matrices
                                  rows [kd*HWC:(kd+1)*HWC] hold tap kd
    o_ref : (B*D, HWC)      f32   lane-dense output slab
    d     : depth extent (static), for per-batch-element halo masking
    """
    nd, hwc = x_ref.shape

    # Row r of the flattened slab holds (batch = r // d, depth = r % d); its
    # depth-1 / depth+1 neighbours are out of range exactly at the per-batch
    # boundaries -> mask those rows to zero after the shift.
    row = lax.broadcasted_iota(jnp.int32, (nd, hwc), 0)
    depth = row % d
    keep_prev = depth != 0
    keep_next = depth != (d - 1)

    def bn_relu(v, s_ref, b_ref):
        # Inference BatchNorm folded to a per-channel affine (pre-tiled over
        # H*W so it is a lane-dense broadcast), then ReLU.
        return jnp.maximum(v * s_ref[...] + b_ref[...], 0.0)

    def conv3x3x3(y, m_ref):
        # 'SAME' 3x3x3 conv as ONE bf16 MXU matmul with f32 accumulation:
        #   lhs[r] = [ y[r-1] | y[r] | y[r+1] ]   (zeros at depth halos)
        #   rhs    = [ M0 ; M1 ; M2 ]             (kh, kw, cin->cout folded in)
        y_prev = jnp.where(keep_prev, jnp.roll(y, 1, axis=0), 0.0)
        y_next = jnp.where(keep_next, jnp.roll(y, -1, axis=0), 0.0)
        lhs = jnp.concatenate([y_prev, y, y_next], axis=-1).astype(jnp.bfloat16)
        return jnp.dot(lhs, m_ref[...], preferred_element_type=jnp.float32)

    x = x_ref[...]
    y1 = bn_relu(x, s1_ref, b1_ref)
    z1 = conv3x3x3(y1, m1_ref)
    y2 = bn_relu(z1, s2_ref, b2_ref)
    z2 = conv3x3x3(y2, m2_ref)
    # Residual straight from the resident input block.
    o_ref[...] = (z2 + x).astype(o_ref.dtype)


def _shift_matrix(n, offset, dtype):
    # S[i, j] = 1  iff  i == j + offset   (i = input index, j = output index)
    i = jnp.arange(n)
    return (i[:, None] == i[None, :] + offset).astype(dtype)


def _build_cat_plane_mat(w_t, H, W):
    """PyTorch Conv3d weight (Cout, Cin, 3, 3, 3) -> (3*H*W*Cin, H*W*Cout).

    Rows [kd*HWC : (kd+1)*HWC] hold
      M[kd][(h_in*W + w_in)*Cin + ci, (h*W + w)*Cout + co] =
          w_t[co, ci, kd, h_in - h + 1, w_in - w + 1]   (0 if tap out of range)
    so that  conv(y)[d] = [ypad[d-1] | ypad[d] | ypad[d+1]] @ M_cat
    with H/W zero-padding encoded by the shift-matrix structure.
    """
    dt = w_t.dtype
    mats = []
    for kd in range(3):
        m = None
        for kh in range(3):
            sh = _shift_matrix(H, kh - 1, dt)
            for kw in range(3):
                sw = _shift_matrix(W, kw - 1, dt)
                wk = w_t[:, :, kd, kh, kw].T          # (Cin, Cout)
                contrib = jnp.kron(jnp.kron(sh, sw), wk)
                m = contrib if m is None else m + contrib
        mats.append(m)
    return jnp.concatenate(mats, axis=0)              # (3*HWC_in, HWC_out)


def voxrex_forward(x_ncdhw, scale1, bias1, w1_t, scale2, bias2, w2_t,
                   *, batch_block=None):
    """x_ncdhw: (N, C, D, H, W) f32 -> same shape. VoxRex forward (inference BN)."""
    N, C, D, H, W = x_ncdhw.shape
    HWC = H * W * C
    if batch_block is None:
        batch_block = N          # whole batch in one grid step at toy shapes
    assert N % batch_block == 0
    num_blocks = N // batch_block
    BD = batch_block * D

    # Lane-dense activations: NCDHW -> NDHWC -> (N*D, H*W*C).
    x = jnp.transpose(x_ncdhw, (0, 2, 3, 4, 1)).reshape(N * D, HWC)

    # Per-channel BN affine tiled over H*W so it broadcasts over the lane dim.
    def tile_c(v):
        return jnp.tile(v.reshape(1, C), (1, H * W))       # (1, HWC)

    s1, b1 = tile_c(scale1), tile_c(bias1)
    s2, b2 = tile_c(scale2), tile_c(bias2)

    # Conv weights -> K-concatenated plane matrices, stored bf16 for the MXU.
    m1 = _build_cat_plane_mat(w1_t, H, W).astype(jnp.bfloat16)
    m2 = _build_cat_plane_mat(w2_t, H, W).astype(jnp.bfloat16)

    def _const_spec(shape):
        return pl.BlockSpec(shape, lambda i: (0,) * len(shape))

    kernel = functools.partial(_voxrex_kernel, d=D)

    out = pl.pallas_call(
        kernel,
        out_shape=jax.ShapeDtypeStruct((N * D, HWC), x.dtype),
        grid_spec=pltpu.PrefetchScalarGridSpec(
            num_scalar_prefetch=0,
            grid=(num_blocks,),
            in_specs=[
                pl.BlockSpec((BD, HWC), lambda i: (i, 0)),
                _const_spec((1, HWC)),
                _const_spec((1, HWC)),
                _const_spec((3 * HWC, HWC)),
                _const_spec((1, HWC)),
                _const_spec((1, HWC)),
                _const_spec((3 * HWC, HWC)),
            ],
            out_specs=pl.BlockSpec((BD, HWC), lambda i: (i, 0)),
        ),
        compiler_params=pltpu.CompilerParams(
            # Single grid step for the toy shape -> nothing to shard; only
            # shard the batch-block axis when there are several blocks.
            dimension_semantics=(("parallel",) if num_blocks > 1
                                 else ("arbitrary",)),
            vmem_limit_bytes=32 * 1024 * 1024,
        ),
    )(x, s1, b1, m1, s2, b2, m2)

    out = out.reshape(N, D, H, W, C)
    return jnp.transpose(out, (0, 4, 1, 2, 3))              # back to NCDHW


def make_params(key, C):
    """Deterministic synthetic parameters (shapes match the PyTorch module)."""
    ks = jax.random.split(key, 10)

    def bn(k0, k1, k2, k3):
        gamma = 1.0 + 0.1 * jax.random.normal(k0, (C,), jnp.float32)
        beta = 0.1 * jax.random.normal(k1, (C,), jnp.float32)
        mean = 0.1 * jax.random.normal(k2, (C,), jnp.float32)
        var = 0.5 + jnp.abs(jax.random.normal(k3, (C,), jnp.float32))
        scale = gamma / jnp.sqrt(var + EPS)
        bias = beta - mean * scale
        return scale, bias

    scale1, bias1 = bn(ks[0], ks[1], ks[2], ks[3])
    scale2, bias2 = bn(ks[4], ks[5], ks[6], ks[7])
    # PyTorch Conv3d weight layout: (Cout, Cin, kD, kH, kW), bias=False.
    w1_t = 0.1 * jax.random.normal(ks[8], (C, C, 3, 3, 3), jnp.float32)
    w2_t = 0.1 * jax.random.normal(ks[9], (C, C, 3, 3, 3), jnp.float32)
    return scale1, bias1, w1_t, scale2, bias2, w2_t


def reference_forward(x_ncdhw, scale1, bias1, w1_t, scale2, bias2, w2_t):
    """Pure-JAX reference (lax.conv) for validation."""
    x = jnp.transpose(x_ncdhw, (0, 2, 3, 4, 1))              # NDHWC
    dn = ('NDHWC', 'DHWIO', 'NDHWC')
    w1 = jnp.transpose(w1_t, (2, 3, 4, 1, 0))                # DHWIO
    w2 = jnp.transpose(w2_t, (2, 3, 4, 1, 0))
    y1 = jnp.maximum(x * scale1 + bias1, 0.0)
    z1 = lax.conv_general_dilated(y1, w1, (1, 1, 1), 'SAME',
                                  dimension_numbers=dn)
    y2 = jnp.maximum(z1 * scale2 + bias2, 0.0)
    z2 = lax.conv_general_dilated(y2, w2, (1, 1, 1), 'SAME',
                                  dimension_numbers=dn)
    return jnp.transpose(z2 + x, (0, 4, 1, 2, 3))            # NCDHW


if __name__ == "__main__":
    N, C, D, H, W = 2, 8, 8, 8, 8
    key = jax.random.PRNGKey(0)
    k_x, k_p = jax.random.split(key)
    x = jax.random.normal(k_x, (N, C, D, H, W), jnp.float32)   # NCDHW, like PyTorch

    scale1, bias1, w1_t, scale2, bias2, w2_t = make_params(k_p, C)

    out = jax.jit(voxrex_forward)(x, scale1, bias1, w1_t, scale2, bias2, w2_t)
    out = jax.block_until_ready(out)

    ref = reference_forward(x, scale1, bias1, w1_t, scale2, bias2, w2_t)
    assert out.shape == (N, C, D, H, W)
    assert jnp.allclose(out, ref, atol=3e-2, rtol=3e-2), (
        "mismatch vs reference, max abs diff = "
        f"{float(jnp.max(jnp.abs(out - ref)))}")

    print("KERNEL_OK")
</pallas_src>

<mosaic_0001>
module attributes {stable_mosaic.version = 11 : i64} {
  func.func @_voxrex_kernel(%arg0: i32, %arg1: memref<16x512xf32, #tpu.memory_space<vmem>>, %arg2: memref<1x512xf32, #tpu.memory_space<vmem>>, %arg3: memref<1x512xf32, #tpu.memory_space<vmem>>, %arg4: memref<1536x512xbf16, #tpu.memory_space<vmem>>, %arg5: memref<1x512xf32, #tpu.memory_space<vmem>>, %arg6: memref<1x512xf32, #tpu.memory_space<vmem>>, %arg7: memref<1536x512xbf16, #tpu.memory_space<vmem>>, %arg8: memref<16x512xf32, #tpu.memory_space<vmem>>) attributes {dimension_semantics = [#tpu.dimension_semantics<arbitrary>], iteration_bounds = array<i64: 1>, scalar_prefetch = 0 : i64, scratch_operands = 0 : i64, tpu.core_type = #tpu.core_type<tc>, window_params = [{transform_indices = @transform_0, window_bounds = array<i64: 16, 512>}, {pipeline_mode = #tpu.pipeline_mode<synchronous>, transform_indices = @transform_1, window_bounds = array<i64: 1, 512>}, {pipeline_mode = #tpu.pipeline_mode<synchronous>, transform_indices = @transform_2, window_bounds = array<i64: 1, 512>}, {pipeline_mode = #tpu.pipeline_mode<synchronous>, transform_indices = @transform_3, window_bounds = array<i64: 1536, 512>}, {pipeline_mode = #tpu.pipeline_mode<synchronous>, transform_indices = @transform_4, window_bounds = array<i64: 1, 512>}, {pipeline_mode = #tpu.pipeline_mode<synchronous>, transform_indices = @transform_5, window_bounds = array<i64: 1, 512>}, {pipeline_mode = #tpu.pipeline_mode<synchronous>, transform_indices = @transform_6, window_bounds = array<i64: 1536, 512>}, {transform_indices = @transform_7, window_bounds = array<i64: 16, 512>}]} {
    %0 = tpu.iota {dimensions = array<i32: 0>} : vector<16x512xi32>
    %c8_i32 = arith.constant 8 : i32
    %c0_i32 = arith.constant 0 : i32
    %1 = arith.cmpi eq, %c8_i32, %c0_i32 : i32
    %c1_i32 = arith.constant 1 : i32
    %2 = arith.select %1, %c1_i32, %c8_i32 : i32
    %3 = vector.broadcast %2 : i32 to vector<16x512xi32>
    %4 = arith.remsi %0, %3 : vector<16x512xi32>
    %c0_i32_0 = arith.constant 0 : i32
    %5 = vector.broadcast %c0_i32_0 : i32 to vector<16x512xi32>
    %6 = arith.cmpi ne, %4, %5 : vector<16x512xi32>
    %c0_i32_1 = arith.constant 0 : i32
    %7 = vector.broadcast %c0_i32_1 : i32 to vector<16x512xi32>
    %8 = arith.cmpi slt, %4, %7 : vector<16x512xi32>
    %c0_i32_2 = arith.constant 0 : i32
    %9 = arith.cmpi slt, %2, %c0_i32_2 : i32
    %10 = vector.broadcast %9 : i1 to vector<16x512xi1>
    %11 = vector.broadcast %10 : vector<16x512xi1> to vector<16x512xi1>
    %12 = arith.xori %8, %11 : vector<16x512xi1>
    %13 = arith.andi %12, %6 : vector<16x512xi1>
    %14 = vector.broadcast %2 : i32 to vector<16x512xi32>
    %15 = arith.addi %4, %14 : vector<16x512xi32>
    %16 = arith.select %13, %15, %4 : vector<16x512xi1>, vector<16x512xi32>
    %c0_i32_3 = arith.constant 0 : i32
    %17 = vector.broadcast %c0_i32_3 : i32 to vector<16x512xi32>
    %18 = arith.cmpi ne, %16, %17 : vector<16x512xi32>
    %c7_i32 = arith.constant 7 : i32
    %19 = vector.broadcast %c7_i32 : i32 to vector<16x512xi32>
    %20 = arith.cmpi ne, %16, %19 : vector<16x512xi32>
    %c0 = arith.constant 0 : index
    %c0_4 = arith.constant 0 : index
    %21 = vector.load %arg1[%c0, %c0_4] : memref<16x512xf32, #tpu.memory_space<vmem>>, vector<16x512xf32>
    %c0_5 = arith.constant 0 : index
    %c0_6 = arith.constant 0 : index
    %22 = vector.load %arg2[%c0_5, %c0_6] : memref<1x512xf32, #tpu.memory_space<vmem>>, vector<1x512xf32>
    %23 = vector.broadcast %22 : vector<1x512xf32> to vector<16x512xf32>
    %24 = arith.mulf %21, %23 : vector<16x512xf32>
    %c0_7 = arith.constant 0 : index
    %c0_8 = arith.constant 0 : index
    %25 = vector.load %arg3[%c0_7, %c0_8] : memref<1x512xf32, #tpu.memory_space<vmem>>, vector<1x512xf32>
    %26 = vector.broadcast %25 : vector<1x512xf32> to vector<16x512xf32>
    %27 = arith.addf %24, %26 : vector<16x512xf32>
    %cst = arith.constant 0.000000e+00 : f32
    %28 = vector.broadcast %cst : f32 to vector<16x512xf32>
    %29 = arith.maximumf %27, %28 : vector<16x512xf32>
    %30 = vector.extract_strided_slice %29 {offsets = [15, 0], sizes = [1, 512], strides = [1, 1]} : vector<16x512xf32> to vector<1x512xf32>
    %31 = vector.extract_strided_slice %29 {offsets = [0, 0], sizes = [15, 512], strides = [1, 1]} : vector<16x512xf32> to vector<15x512xf32>
    %32 = tpu.concatenate %30, %31 in 0 : vector<1x512xf32>, vector<15x512xf32> -> vector<16x512xf32>
    %cst_9 = arith.constant 0.000000e+00 : f32
    %33 = vector.broadcast %cst_9 : f32 to vector<16x512xf32>
    %34 = arith.select %18, %32, %33 : vector<16x512xi1>, vector<16x512xf32>
    %35 = vector.extract_strided_slice %29 {offsets = [1, 0], sizes = [15, 512], strides = [1, 1]} : vector<16x512xf32> to vector<15x512xf32>
    %36 = vector.extract_strided_slice %29 {offsets = [0, 0], sizes = [1, 512], strides = [1, 1]} : vector<16x512xf32> to vector<1x512xf32>
    %37 = tpu.concatenate %35, %36 in 0 : vector<15x512xf32>, vector<1x512xf32> -> vector<16x512xf32>
    %cst_10 = arith.constant 0.000000e+00 : f32
    %38 = vector.broadcast %cst_10 : f32 to vector<16x512xf32>
    %39 = arith.select %20, %37, %38 : vector<16x512xi1>, vector<16x512xf32>
    %40 = tpu.concatenate %34, %29, %39 in 1 : vector<16x512xf32>, vector<16x512xf32>, vector<16x512xf32> -> vector<16x1536xf32>
    %41 = arith.truncf %40 : vector<16x1536xf32> to vector<16x1536xbf16>
    %c0_11 = arith.constant 0 : index
    %c0_12 = arith.constant 0 : index
    %42 = vector.load %arg4[%c0_11, %c0_12] : memref<1536x512xbf16, #tpu.memory_space<vmem>>, vector<1536x512xbf16>
    %cst_13 = arith.constant dense<0.000000e+00> : vector<16x512xf32>
    %43 = tpu.matmul %41, %42, %cst_13 {dimension_numbers = #tpu.dot_dimension_numbers<[1], [0], [0], [1], [0, 0, 1, 1], [], []>} : vector<16x1536xbf16>, vector<1536x512xbf16>, vector<16x512xf32> -> vector<16x512xf32>
    %c0_14 = arith.constant 0 : index
    %c0_15 = arith.constant 0 : index
    %44 = vector.load %arg5[%c0_14, %c0_15] : memref<1x512xf32, #tpu.memory_space<vmem>>, vector<1x512xf32>
    %45 = vector.broadcast %44 : vector<1x512xf32> to vector<16x512xf32>
    %46 = arith.mulf %43, %45 : vector<16x512xf32>
    %c0_16 = arith.constant 0 : index
    %c0_17 = arith.constant 0 : index
    %47 = vector.load %arg6[%c0_16, %c0_17] : memref<1x512xf32, #tpu.memory_space<vmem>>, vector<1x512xf32>
    %48 = vector.broadcast %47 : vector<1x512xf32> to vector<16x512xf32>
    %49 = arith.addf %46, %48 : vector<16x512xf32>
    %cst_18 = arith.constant 0.000000e+00 : f32
    %50 = vector.broadcast %cst_18 : f32 to vector<16x512xf32>
    %51 = arith.maximumf %49, %50 : vector<16x512xf32>
    %52 = vector.extract_strided_slice %51 {offsets = [15, 0], sizes = [1, 512], strides = [1, 1]} : vector<16x512xf32> to vector<1x512xf32>
    %53 = vector.extract_strided_slice %51 {offsets = [0, 0], sizes = [15, 512], strides = [1, 1]} : vector<16x512xf32> to vector<15x512xf32>
    %54 = tpu.concatenate %52, %53 in 0 : vector<1x512xf32>, vector<15x512xf32> -> vector<16x512xf32>
    %cst_19 = arith.constant 0.000000e+00 : f32
    %55 = vector.broadcast %cst_19 : f32 to vector<16x512xf32>
    %56 = arith.select %18, %54, %55 : vector<16x512xi1>, vector<16x512xf32>
    %57 = vector.extract_strided_slice %51 {offsets = [1, 0], sizes = [15, 512], strides = [1, 1]} : vector<16x512xf32> to vector<15x512xf32>
    %58 = vector.extract_strided_slice %51 {offsets = [0, 0], sizes = [1, 512], strides = [1, 1]} : vector<16x512xf32> to vector<1x512xf32>
    %59 = tpu.concatenate %57, %58 in 0 : vector<15x512xf32>, vector<1x512xf32> -> vector<16x512xf32>
    %cst_20 = arith.constant 0.000000e+00 : f32
    %60 = vector.broadcast %cst_20 : f32 to vector<16x512xf32>
    %61 = arith.select %20, %59, %60 : vector<16x512xi1>, vector<16x512xf32>
    %62 = tpu.concatenate %56, %51, %61 in 1 : vector<16x512xf32>, vector<16x512xf32>, vector<16x512xf32> -> vector<16x1536xf32>
    %63 = arith.truncf %62 : vector<16x1536xf32> to vector<16x1536xbf16>
    %c0_21 = arith.constant 0 : index
    %c0_22 = arith.constant 0 : index
    %64 = vector.load %arg7[%c0_21, %c0_22] : memref<1536x512xbf16, #tpu.memory_space<vmem>>, vector<1536x512xbf16>
    %cst_23 = arith.constant dense<0.000000e+00> : vector<16x512xf32>
    %65 = tpu.matmul %63, %64, %cst_23 {dimension_numbers = #tpu.dot_dimension_numbers<[1], [0], [0], [1], [0, 0, 1, 1], [], []>} : vector<16x1536xbf16>, vector<1536x512xbf16>, vector<16x512xf32> -> vector<16x512xf32>
    %66 = arith.addf %65, %21 : vector<16x512xf32>
    %c0_24 = arith.constant 0 : index
    %c0_25 = arith.constant 0 : index
    %67 = vector.load %arg8[%c0_24, %c0_25] : memref<16x512xf32, #tpu.memory_space<vmem>>, vector<16x512xf32>
    tpu.vector_store %arg8[%c0_24, %c0_25], %66 {strides = array<i32>} : memref<16x512xf32, #tpu.memory_space<vmem>>, vector<16x512xf32>,
    return
  }
  func.func @transform_0(%arg0: i32) -> (i32, i32) {
    %c0_i32 = arith.constant 0 : i32
    %c0_i32_0 = arith.constant 0 : i32
    return %arg0, %c0_i32 : i32, i32
  }
  func.func @transform_1(%arg0: i32) -> (i32, i32) {
    %c0_i32 = arith.constant 0 : i32
    %c0_i32_0 = arith.constant 0 : i32
    %c0_i32_1 = arith.constant 0 : i32
    return %c0_i32, %c0_i32_0 : i32, i32
  }
  func.func @transform_2(%arg0: i32) -> (i32, i32) {
    %c0_i32 = arith.constant 0 : i32
    %c0_i32_0 = arith.constant 0 : i32
    %c0_i32_1 = arith.constant 0 : i32
    return %c0_i32, %c0_i32_0 : i32, i32
  }
  func.func @transform_3(%arg0: i32) -> (i32, i32) {
    %c0_i32 = arith.constant 0 : i32
    %c0_i32_0 = arith.constant 0 : i32
    %c0_i32_1 = arith.constant 0 : i32
    return %c0_i32, %c0_i32_0 : i32, i32
  }
  func.func @transform_4(%arg0: i32) -> (i32, i32) {
    %c0_i32 = arith.constant 0 : i32
    %c0_i32_0 = arith.constant 0 : i32
    %c0_i32_1 = arith.constant 0 : i32
    return %c0_i32, %c0_i32_0 : i32, i32
  }
  func.func @transform_5(%arg0: i32) -> (i32, i32) {
    %c0_i32 = arith.constant 0 : i32
    %c0_i32_0 = arith.constant 0 : i32
    %c0_i32_1 = arith.constant 0 : i32
    return %c0_i32, %c0_i32_0 : i32, i32
  }
  func.func @transform_6(%arg0: i32) -> (i32, i32) {
    %c0_i32 = arith.constant 0 : i32
    %c0_i32_0 = arith.constant 0 : i32
    %c0_i32_1 = arith.constant 0 : i32
    return %c0_i32, %c0_i32_0 : i32, i32
  }
  func.func @transform_7(%arg0: i32) -> (i32, i32) {
    %c0_i32 = arith.constant 0 : i32
    %c0_i32_0 = arith.constant 0 : i32
    return %arg0, %c0_i32 : i32, i32
  }
}

</mosaic_0001>

<llo_original>
// kernel: voxrex_forward.1
$region0: #{voxrex_forward.1}
  #allocation0 [shape = 'u32[]', space=smem, size = 0x4, offset = 0x4, fixed_abs, tag = 'smem constant byte address 0x4 - core index']
  #allocation1 [shape = 'u32[144,128]{1,0:T(1,128)}', space=vmem, size = 0x12000, scoped, tag = 'internal scratch']
  %s0 = inlined_call_operand.vmem [shape: f32[16,512], index: 0, kind: input, shape index: {}]
  %s1 = inlined_call_operand.vmem [shape: f32[1,512], index: 1, kind: input, shape index: {}]
  %s2 = inlined_call_operand.vmem [shape: f32[1,512], index: 2, kind: input, shape index: {}]
  %s3 = inlined_call_operand.vmem [shape: bf16[1536,512], index: 3, kind: input, shape index: {}]
  %s4 = inlined_call_operand.vmem [shape: f32[1,512], index: 4, kind: input, shape index: {}]
  %s5 = inlined_call_operand.vmem [shape: f32[1,512], index: 5, kind: input, shape index: {}]
  %s6 = inlined_call_operand.vmem [shape: bf16[1536,512], index: 6, kind: input, shape index: {}]
  %s7 = inlined_call_operand.vmem [shape: f32[16,512], index: 7, kind: output, shape index: {}]
  %s8 = sld [smem:[#allocation0]]
  $region38: #{voxrex_forward.1} parent=0
    _
  %s10 = ssub.s32 1, %s8
  %s11 = scalar_select 0, %s10, %s8
  // Predicated region
  $region2: #{voxrex_forward.1} parent=0 // pred_check
    _
  $region3: #{voxrex_forward.1} parent=0 // pred_check_branch
    %13 = sbr.rel (0) target = $region5
  $region4: #{voxrex_forward.1} parent=0 // pred_region
    _
  $region5: #{voxrex_forward.1} parent=0 // pred_fallthru
    _
  // Predicated region
  $region6: #{voxrex_forward.1} parent=0 // pred_check
    _
  $region7: #{voxrex_forward.1} parent=0 // pred_check_branch
    %15 = sbr.rel (0) target = $region9
  $region8: #{voxrex_forward.1} parent=0 // pred_region
    _
  $region9: #{voxrex_forward.1} parent=0 // pred_fallthru
    _
  // Predicated region
  $region10: #{voxrex_forward.1} parent=0 // pred_check
    _
  $region11: #{voxrex_forward.1} parent=0 // pred_check_branch
    %17 = sbr.rel (0) target = $region13
  $region12: #{voxrex_forward.1} parent=0 // pred_region
    _
  $region13: #{voxrex_forward.1} parent=0 // pred_fallthru
    _
  // Predicated region
  $region14: #{voxrex_forward.1} parent=0 // pred_check
    _
  $region15: #{voxrex_forward.1} parent=0 // pred_check_branch
    %19 = sbr.rel (0) target = $region17
  $region16: #{voxrex_forward.1} parent=0 // pred_region
    _
  $region17: #{voxrex_forward.1} parent=0 // pred_fallthru
    _
  // Predicated region
  $region18: #{voxrex_forward.1} parent=0 // pred_check
    _
  $region19: #{voxrex_forward.1} parent=0 // pred_check_branch
    %21 = sbr.rel (0) target = $region21
  $region20: #{voxrex_forward.1} parent=0 // pred_region
    _
  $region21: #{voxrex_forward.1} parent=0 // pred_fallthru
    _
  // Predicated region
  $region22: #{voxrex_forward.1} parent=0 // pred_check
    _
  $region23: #{voxrex_forward.1} parent=0 // pred_check_branch
    %23 = sbr.rel (0) target = $region25
  $region24: #{voxrex_forward.1} parent=0 // pred_region
    _
  $region25: #{voxrex_forward.1} parent=0 // pred_fallthru
    _
  // Predicated region
  $region26: #{voxrex_forward.1} parent=0 // pred_check
    _
  $region27: #{voxrex_forward.1} parent=0 // pred_check_branch
    %25 = sbr.rel (0) target = $region29
  $region28: #{voxrex_forward.1} parent=0 // pred_region
    _
  $region29: #{voxrex_forward.1} parent=0 // pred_fallthru
    _
  %v26 = vlaneseq
  %v27 = vshrl.u32 %v26, 7
  %v28 = vadd.s32 %v27, 8
  %vm29 = vcmp.lt.s32.totalorder %v27, 0
  %v30 = vsub.s32 0, %v27
  %v31 = vsel %vm29, %v30, %v27
  %v32 = vshrl.u32 %v31, 3
  %v33 = vand.u32 %v31, 7
  %v34 = vsub.s32 0, %v33
  %v35 = vsel %vm29, %v34, %v33
  %vm36 = vcmp.lt.s32.totalorder %v28, 0
  %v37 = vsub.s32 0, %v28
  %v38 = vsel %vm36, %v37, %v28
  %v39 = vshrl.u32 %v38, 3
  %v40 = vand.u32 %v38, 7
  %v41 = vsub.s32 0, %v40
  %v42 = vsel %vm36, %v41, %v40
  %vm43 = vcmp.ne.s32.totalorder %v35, 0
  %vm44 = vcmp.ne.s32.totalorder %v42, 0
  %vm45 = vcmp.lt.s32.totalorder %v35, 0
  %vm46 = vcmp.lt.s32.totalorder %v42, 0
  %vm47 = vmand %vm45, %vm43
  %vm48 = vmand %vm46, %vm44
  %v49 = vadd.s32 %v35, 8
  %v50 = vadd.s32 %v42, 8
  %v51 = vsel %vm47, %v49, %v35
  %v52 = vsel %vm48, %v50, %v42
  %vm53 = vcmp.ne.s32.totalorder %v51, 0
  %vm54 = vcmp.ne.s32.totalorder %v52, 0
  %vm55 = vcmp.ne.s32.totalorder %v51, 7
  %vm56 = vcmp.ne.s32.totalorder %v52, 7
  %v57 = vld [vmem:[%s0] sm:$0xff]
  %v58 = vld [vmem:[%s0 + $0x8] sm:$0xff]
  %v59 = vld [vmem:[%s0 + $0x10] sm:$0xff]
  %v60 = vld [vmem:[%s0 + $0x18] sm:$0xff]
  %v61 = vld [vmem:[%s0 + $0x20] sm:$0xff]
  %v62 = vld [vmem:[%s0 + $0x28] sm:$0xff]
  %v63 = vld [vmem:[%s0 + $0x30] sm:$0xff]
  %v64 = vld [vmem:[%s0 + $0x38] sm:$0xff]
  %v65 = vld [vmem:[%s1] sm:$0xf]
  %v67 = vlaneseq
  %v68 = vshrl.u32 %v67, 7
  %v69 = vsub.s32 0, %v68
  %v70 = vrot.slane %v65, %v69
  %v71 = vlaneseq
  %v72 = vshrl.u32 %v71, 7
  %v73 = vsub.s32 1, %v72
  %v74 = vrot.slane %v65, %v73
  %v75 = vlaneseq
  %v76 = vshrl.u32 %v75, 7
  %v77 = vsub.s32 2, %v76
  %v78 = vrot.slane %v65, %v77
  %v79 = vlaneseq
  %v80 = vshrl.u32 %v79, 7
  %v81 = vsub.s32 3, %v80
  %v82 = vrot.slane %v65, %v81
  %v87 = vmul.f32 %v57, %v70
  %v88 = vmul.f32 %v58, %v74
  %v89 = vmul.f32 %v59, %v78
  %v90 = vmul.f32 %v60, %v82
  %v91 = vmul.f32 %v61, %v70
  %v92 = vmul.f32 %v62, %v74
  %v93 = vmul.f32 %v63, %v78
  %v94 = vmul.f32 %v64, %v82
  %v95 = vld [vmem:[%s2] sm:$0xf]
  %v97 = vlaneseq
  %v98 = vshrl.u32 %v97, 7
  %v99 = vsub.s32 0, %v98
  %v100 = vrot.slane %v95, %v99
  %v101 = vlaneseq
  %v102 = vshrl.u32 %v101, 7
  %v103 = vsub.s32 1, %v102
  %v104 = vrot.slane %v95, %v103
  %v105 = vlaneseq
  %v106 = vshrl.u32 %v105, 7
  %v107 = vsub.s32 2, %v106
  %v108 = vrot.slane %v95, %v107
  %v109 = vlaneseq
  %v110 = vshrl.u32 %v109, 7
  %v111 = vsub.s32 3, %v110
  %v112 = vrot.slane %v95, %v111
  %v117 = vadd.f32 %v87, %v100
  %v118 = vadd.f32 %v88, %v104
  %v119 = vadd.f32 %v89, %v108
  %v120 = vadd.f32 %v90, %v112
  %v121 = vadd.f32 %v91, %v100
  %v122 = vadd.f32 %v92, %v104
  %v123 = vadd.f32 %v93, %v108
  %v124 = vadd.f32 %v94, %v112
  %v125 = vmax.f32 %v117, 0.0
  %v126 = vmax.f32 %v118, 0.0
  %v127 = vmax.f32 %v119, 0.0
  %v128 = vmax.f32 %v120, 0.0
  %v129 = vmax.f32 %v121, 0.0
  %v130 = vmax.f32 %v122, 0.0
  %v131 = vmax.f32 %v123, 0.0
  %v132 = vmax.f32 %v124, 0.0
  %v137 = vrot.slane %v129, 7
  %v138 = vrot.slane %v130, 7
  %v139 = vrot.slane %v131, 7
  %v140 = vrot.slane %v132, 7
  %vm149 = vcmask 1040384
  %v150 = vrot.slane %v125, 7
  %v151 = vrot.slane %v126, 7
  %v152 = vrot.slane %v127, 7
  %v153 = vrot.slane %v128, 7
  %v154 = vsel %vm149, %v150, %v137
  %v155 = vsel %vm149, %v151, %v138
  %v156 = vsel %vm149, %v152, %v139
  %v157 = vsel %vm149, %v153, %v140
  %v166 = vsel %vm149, %v137, %v150
  %v167 = vsel %vm149, %v138, %v151
  %v168 = vsel %vm149, %v139, %v152
  %v169 = vsel %vm149, %v140, %v153
  %v170 = vsel %vm53, %v166, 0.0
  %v171 = vsel %vm53, %v167, 0.0
  %v172 = vsel %vm53, %v168, 0.0
  %v173 = vsel %vm53, %v169, 0.0
  %v174 = vsel %vm54, %v154, 0.0
  %v175 = vsel %vm54, %v155, 0.0
  %v176 = vsel %vm54, %v156, 0.0
  %v177 = vsel %vm54, %v157, 0.0
  %vm178 = vcmask 1046528
  %v179 = vrot.slane %v125, 1
  %v180 = vrot.slane %v129, 1
  %v181 = vsel %vm178, %v179, %v180
  %v182 = vrot.slane %v126, 1
  %v183 = vrot.slane %v130, 1
  %v184 = vsel %vm178, %v182, %v183
  %v185 = vrot.slane %v127, 1
  %v186 = vrot.slane %v131, 1
  %v187 = vsel %vm178, %v185, %v186
  %v188 = vrot.slane %v128, 1
  %v189 = vrot.slane %v132, 1
  %v190 = vsel %vm178, %v188, %v189
  %v203 = vsel %vm178, %v180, %v179
  %v204 = vsel %vm178, %v183, %v182
  %v205 = vsel %vm178, %v186, %v185
  %v206 = vsel %vm178, %v189, %v188
  %v207 = vsel %vm55, %v181, 0.0
  %v208 = vsel %vm55, %v184, 0.0
  %v209 = vsel %vm55, %v187, 0.0
  %v210 = vsel %vm55, %v190, 0.0
  %v211 = vsel %vm56, %v203, 0.0
  %v212 = vsel %vm56, %v204, 0.0
  %v213 = vsel %vm56, %v205, 0.0
  %v214 = vsel %vm56, %v206, 0.0
  %v215 = vpack.c.bf16 %v174, %v170
  %v216 = vpack.c.bf16 %v175, %v171
  %v217 = vpack.c.bf16 %v176, %v172
  %v218 = vpack.c.bf16 %v177, %v173
  %v219 = vpack.c.bf16 %v129, %v125
  %v220 = vpack.c.bf16 %v130, %v126
  %v221 = vpack.c.bf16 %v131, %v127
  %v222 = vpack.c.bf16 %v132, %v128
  %v223 = vpack.c.bf16 %v211, %v207
  %v224 = vpack.c.bf16 %v212, %v208
  %v225 = vpack.c.bf16 %v213, %v209
  %v226 = vpack.c.bf16 %v214, %v210
  %v227 = vld [vmem:[%s3] sm:$0xff]
  %v228 = vld [vmem:[%s3 + $0x8] sm:$0xff]
  %v229 = vld [vmem:[%s3 + $0x10] sm:$0xff]
  %v230 = vld [vmem:[%s3 + $0x18] sm:$0xff]
  %v231 = vld [vmem:[%s3 + $0x20] sm:$0xff]
  %v232 = vld [vmem:[%s3 + $0x28] sm:$0xff]
  %v233 = vld [vmem:[%s3 + $0x30] sm:$0xff]
  %v234 = vld [vmem:[%s3 + $0x38] sm:$0xff]
  %v235 = vld [vmem:[%s3 + $0x40] sm:$0xff]
  %v236 = vld [vmem:[%s3 + $0x48] sm:$0xff]
  %v237 = vld [vmem:[%s3 + $0x50] sm:$0xff]
  %v238 = vld [vmem:[%s3 + $0x58] sm:$0xff]
  %v239 = vld [vmem:[%s3 + $0x60] sm:$0xff]
  %v240 = vld [vmem:[%s3 + $0x68] sm:$0xff]
  %v241 = vld [vmem:[%s3 + $0x70] sm:$0xff]
  %v242 = vld [vmem:[%s3 + $0x78] sm:$0xff]
  %v243 = vld [vmem:[%s3 + $0x80] sm:$0xff]
  %v244 = vld [vmem:[%s3 + $0x88] sm:$0xff]
  %v245 = vld [vmem:[%s3 + $0x90] sm:$0xff]
  %v246 = vld [vmem:[%s3 + $0x98] sm:$0xff]
  %v247 = vld [vmem:[%s3 + $0xa0] sm:$0xff]
  %v248 = vld [vmem:[%s3 + $0xa8] sm:$0xff]
  %v249 = vld [vmem:[%s3 + $0xb0] sm:$0xff]
  %v250 = vld [vmem:[%s3 + $0xb8] sm:$0xff]
  %v251 = vld [vmem:[%s3 + $0xc0] sm:$0xff]
  %v252 = vld [vmem:[%s3 + $0xc8] sm:$0xff]
  %v253 = vld [vmem:[%s3 + $0xd0] sm:$0xff]
  %v254 = vld [vmem:[%s3 + $0xd8] sm:$0xff]
  %v255 = vld [vmem:[%s3 + $0xe0] sm:$0xff]
  %v256 = vld [vmem:[%s3 + $0xe8] sm:$0xff]
  %v257 = vld [vmem:[%s3 + $0xf0] sm:$0xff]
  %v258 = vld [vmem:[%s3 + $0xf8] sm:$0xff]
  %v259 = vld [vmem:[%s3 + $0x100] sm:$0xff]
  %v260 = vld [vmem:[%s3 + $0x108] sm:$0xff]
  %v261 = vld [vmem:[%s3 + $0x110] sm:$0xff]
  %v262 = vld [vmem:[%s3 + $0x118] sm:$0xff]
  %v263 = vld [vmem:[%s3 + $0x120] sm:$0xff]
  %v264 = vld [vmem:[%s3 + $0x128] sm:$0xff]
  %v265 = vld [vmem:[%s3 + $0x130] sm:$0xff]
  %v266 = vld [vmem:[%s3 + $0x138] sm:$0xff]
  %v267 = vld [vmem:[%s3 + $0x140] sm:$0xff]
  %v268 = vld [vmem:[%s3 + $0x148] sm:$0xff]
  %v269 = vld [vmem:[%s3 + $0x150] sm:$0xff]
  %v270 = vld [vmem:[%s3 + $0x158] sm:$0xff]
  %v271 = vld [vmem:[%s3 + $0x160] sm:$0xff]
  %v272 = vld [vmem:[%s3 + $0x168] sm:$0xff]
  %v273 = vld [vmem:[%s3 + $0x170] sm:$0xff]
  %v274 = vld [vmem:[%s3 + $0x178] sm:$0xff]
  %v275 = vld [vmem:[%s3 + $0x180] sm:$0xff]
  %v276 = vld [vmem:[%s3 + $0x188] sm:$0xff]
  %v277 = vld [vmem:[%s3 + $0x190] sm:$0xff]
  %v278 = vld [vmem:[%s3 + $0x198] sm:$0xff]
  %v279 = vld [vmem:[%s3 + $0x1a0] sm:$0xff]
  %v280 = vld [vmem:[%s3 + $0x1a8] sm:$0xff]
  %v281 = vld [vmem:[%s3 + $0x1b0] sm:$0xff]
  %v282 = vld [vmem:[%s3 + $0x1b8] sm:$0xff]
  %v283 = vld [vmem:[%s3 + $0x1c0] sm:$0xff]
  %v284 = vld [vmem:[%s3 + $0x1c8] sm:$0xff]
  %v285 = vld [vmem:[%s3 + $0x1d0] sm:$0xff]
  %v286 = vld [vmem:[%s3 + $0x1d8] sm:$0xff]
  %v287 = vld [vmem:[%s3 + $0x1e0] sm:$0xff]
  %v288 = vld [vmem:[%s3 + $0x1e8] sm:$0xff]
  %v289 = vld [vmem:[%s3 + $0x1f0] sm:$0xff]
  %v290 = vld [vmem:[%s3 + $0x1f8] sm:$0xff]
  %v291 = vld [vmem:[%s3 + $0x200] sm:$0xff]
  %v292 = vld [vmem:[%s3 + $0x208] sm:$0xff]
  %v293 = vld [vmem:[%s3 + $0x210] sm:$0xff]
  %v294 = vld [vmem:[%s3 + $0x218] sm:$0xff]
  %v295 = vld [vmem:[%s3 + $0x220] sm:$0xff]
  %v296 = vld [vmem:[%s3 + $0x228] sm:$0xff]
  %v297 = vld [vmem:[%s3 + $0x230] sm:$0xff]
  %v298 = vld [vmem:[%s3 + $0x238] sm:$0xff]
  %v299 = vld [vmem:[%s3 + $0x240] sm:$0xff]
  %v300 = vld [vmem:[%s3 + $0x248] sm:$0xff]
  %v301 = vld [vmem:[%s3 + $0x250] sm:$0xff]
  %v302 = vld [vmem:[%s3 + $0x258] sm:$0xff]
  %v303 = vld [vmem:[%s3 + $0x260] sm:$0xff]
  %v304 = vld [vmem:[%s3 + $0x268] sm:$0xff]
  %v305 = vld [vmem:[%s3 + $0x270] sm:$0xff]
  %v306 = vld [vmem:[%s3 + $0x278] sm:$0xff]
  %v307 = vld [vmem:[%s3 + $0x280] sm:$0xff]
  %v308 = vld [vmem:[%s3 + $0x288] sm:$0xff]
  %v309 = vld [vmem:[%s3 + $0x290] sm:$0xff]
  %v310 = vld [vmem:[%s3 + $0x298] sm:$0xff]
  %v311 = vld [vmem:[%s3 + $0x2a0] sm:$0xff]
  %v312 = vld [vmem:[%s3 + $0x2a8] sm:$0xff]
  %v313 = vld [vmem:[%s3 + $0x2b0] sm:$0xff]
  %v314 = vld [vmem:[%s3 + $0x2b8] sm:$0xff]
  %v315 = vld [vmem:[%s3 + $0x2c0] sm:$0xff]
  %v316 = vld [vmem:[%s3 + $0x2c8] sm:$0xff]
  %v317 = vld [vmem:[%s3 + $0x2d0] sm:$0xff]
  %v318 = vld [vmem:[%s3 + $0x2d8] sm:$0xff]
  %v319 = vld [vmem:[%s3 + $0x2e0] sm:$0xff]
  %v320 = vld [vmem:[%s3 + $0x2e8] sm:$0xff]
  %v321 = vld [vmem:[%s3 + $0x2f0] sm:$0xff]
  %v322 = vld [vmem:[%s3 + $0x2f8] sm:$0xff]
  %v323 = vld [vmem:[%s3 + $0x300] sm:$0xff]
  %v324 = vld [vmem:[%s3 + $0x308] sm:$0xff]
  %v325 = vld [vmem:[%s3 + $0x310] sm:$0xff]
  %v326 = vld [vmem:[%s3 + $0x318] sm:$0xff]
  %v327 = vld [vmem:[%s3 + $0x320] sm:$0xff]
  %v328 = vld [vmem:[%s3 + $0x328] sm:$0xff]
  %v329 = vld [vmem:[%s3 + $0x330] sm:$0xff]
  %v330 = vld [vmem:[%s3 + $0x338] sm:$0xff]
  %v331 = vld [vmem:[%s3 + $0x340] sm:$0xff]
  %v332 = vld [vmem:[%s3 + $0x348] sm:$0xff]
  %v333 = vld [vmem:[%s3 + $0x350] sm:$0xff]
  %v334 = vld [vmem:[%s3 + $0x358] sm:$0xff]
  %v335 = vld [vmem:[%s3 + $0x360] sm:$0xff]
  %v336 = vld [vmem:[%s3 + $0x368] sm:$0xff]
  %v337 = vld [vmem:[%s3 + $0x370] sm:$0xff]
  %v338 = vld [vmem:[%s3 + $0x378] sm:$0xff]
  %v339 = vld [vmem:[%s3 + $0x380] sm:$0xff]
  %v340 = vld [vmem:[%s3 + $0x388] sm:$0xff]
  %v341 = vld [vmem:[%s3 + $0x390] sm:$0xff]
  %v342 = vld [vmem:[%s3 + $0x398] sm:$0xff]
  %v343 = vld [vmem:[%s3 + $0x3a0] sm:$0xff]
  %v344 = vld [vmem:[%s3 + $0x3a8] sm:$0xff]
  %v345 = vld [vmem:[%s3 + $0x3b0] sm:$0xff]
  %v346 = vld [vmem:[%s3 + $0x3b8] sm:$0xff]
  %v347 = vld [vmem:[%s3 + $0x3c0] sm:$0xff]
  %v348 = vld [vmem:[%s3 + $0x3c8] sm:$0xff]
  %v349 = vld [vmem:[%s3 + $0x3d0] sm:$0xff]
  %v350 = vld [vmem:[%s3 + $0x3d8] sm:$0xff]
  %v351 = vld [vmem:[%s3 + $0x3e0] sm:$0xff]
  %v352 = vld [vmem:[%s3 + $0x3e8] sm:$0xff]
  %v353 = vld [vmem:[%s3 + $0x3f0] sm:$0xff]
  %v354 = vld [vmem:[%s3 + $0x3f8] sm:$0xff]
  %v355 = vld [vmem:[%s3 + $0x400] sm:$0xff]
  %v356 = vld [vmem:[%s3 + $0x408] sm:$0xff]
  %v357 = vld [vmem:[%s3 + $0x410] sm:$0xff]
  %v358 = vld [vmem:[%s3 + $0x418] sm:$0xff]
  %v359 = vld [vmem:[%s3 + $0x420] sm:$0xff]
  %v360 = vld [vmem:[%s3 + $0x428] sm:$0xff]
  %v361 = vld [vmem:[%s3 + $0x430] sm:$0xff]
  %v362 = vld [vmem:[%s3 + $0x438] sm:$0xff]
  %v363 = vld [vmem:[%s3 + $0x440] sm:$0xff]
  %v364 = vld [vmem:[%s3 + $0x448] sm:$0xff]
  %v365 = vld [vmem:[%s3 + $0x450] sm:$0xff]
  %v366 = vld [vmem:[%s3 + $0x458] sm:$0xff]
  %v367 = vld [vmem:[%s3 + $0x460] sm:$0xff]
  %v368 = vld [vmem:[%s3 + $0x468] sm:$0xff]
  %v369 = vld [vmem:[%s3 + $0x470] sm:$0xff]
  %v370 = vld [vmem:[%s3 + $0x478] sm:$0xff]
  %v371 = vld [vmem:[%s3 + $0x480] sm:$0xff]
  %v372 = vld [vmem:[%s3 + $0x488] sm:$0xff]
  %v373 = vld [vmem:[%s3 + $0x490] sm:$0xff]
  %v374 = vld [vmem:[%s3 + $0x498] sm:$0xff]
  %v375 = vld [vmem:[%s3 + $0x4a0] sm:$0xff]
  %v376 = vld [vmem:[%s3 + $0x4a8] sm:$0xff]
  %v377 = vld [vmem:[%s3 + $0x4b0] sm:$0xff]
  %v378 = vld [vmem:[%s3 + $0x4b8] sm:$0xff]
  %v379 = vld [vmem:[%s3 + $0x4c0] sm:$0xff]
  %v380 = vld [vmem:[%s3 + $0x4c8] sm:$0xff]
  %v381 = vld [vmem:[%s3 + $0x4d0] sm:$0xff]
  %v382 = vld [vmem:[%s3 + $0x4d8] sm:$0xff]
  %v383 = vld [vmem:[%s3 + $0x4e0] sm:$0xff]
  %v384 = vld [vmem:[%s3 + $0x4e8] sm:$0xff]
  %v385 = vld [vmem:[%s3 + $0x4f0] sm:$0xff]
  %v386 = vld [vmem:[%s3 + $0x4f8] sm:$0xff]
  %v387 = vld [vmem:[%s3 + $0x500] sm:$0xff]
  %v388 = vld [vmem:[%s3 + $0x508] sm:$0xff]
  %v389 = vld [vmem:[%s3 + $0x510] sm:$0xff]
  %v390 = vld [vmem:[%s3 + $0x518] sm:$0xff]
  %v391 = vld [vmem:[%s3 + $0x520] sm:$0xff]
  %v392 = vld [vmem:[%s3 + $0x528] sm:$0xff]
  %v393 = vld [vmem:[%s3 + $0x530] sm:$0xff]
  %v394 = vld [vmem:[%s3 + $0x538] sm:$0xff]
  %v395 = vld [vmem:[%s3 + $0x540] sm:$0xff]
  %v396 = vld [vmem:[%s3 + $0x548] sm:$0xff]
  %v397 = vld [vmem:[%s3 + $0x550] sm:$0xff]
  %v398 = vld [vmem:[%s3 + $0x558] sm:$0xff]
  %v399 = vld [vmem:[%s3 + $0x560] sm:$0xff]
  %v400 = vld [vmem:[%s3 + $0x568] sm:$0xff]
  %v401 = vld [vmem:[%s3 + $0x570] sm:$0xff]
  %v402 = vld [vmem:[%s3 + $0x578] sm:$0xff]
  %v403 = vld [vmem:[%s3 + $0x580] sm:$0xff]
  %v404 = vld [vmem:[%s3 + $0x588] sm:$0xff]
  %v405 = vld [vmem:[%s3 + $0x590] sm:$0xff]
  %v406 = vld [vmem:[%s3 + $0x598] sm:$0xff]
  %v407 = vld [vmem:[%s3 + $0x5a0] sm:$0xff]
  %v408 = vld [vmem:[%s3 + $0x5a8] sm:$0xff]
  %v409 = vld [vmem:[%s3 + $0x5b0] sm:$0xff]
  %v410 = vld [vmem:[%s3 + $0x5b8] sm:$0xff]
  %v411 = vld [vmem:[%s3 + $0x5c0] sm:$0xff]
  %v412 = vld [vmem:[%s3 + $0x5c8] sm:$0xff]
  %v413 = vld [vmem:[%s3 + $0x5d0] sm:$0xff]
  %v414 = vld [vmem:[%s3 + $0x5d8] sm:$0xff]
  %v415 = vld [vmem:[%s3 + $0x5e0] sm:$0xff]
  %v416 = vld [vmem:[%s3 + $0x5e8] sm:$0xff]
  %v417 = vld [vmem:[%s3 + $0x5f0] sm:$0xff]
  %v418 = vld [vmem:[%s3 + $0x5f8] sm:$0xff]
  %v419 = vld [vmem:[%s3 + $0x600] sm:$0xff]
  %v420 = vld [vmem:[%s3 + $0x608] sm:$0xff]
  %v421 = vld [vmem:[%s3 + $0x610] sm:$0xff]
  %v422 = vld [vmem:[%s3 + $0x618] sm:$0xff]
  %v423 = vld [vmem:[%s3 + $0x620] sm:$0xff]
  %v424 = vld [vmem:[%s3 + $0x628] sm:$0xff]
  %v425 = vld [vmem:[%s3 + $0x630] sm:$0xff]
  %v426 = vld [vmem:[%s3 + $0x638] sm:$0xff]
  %v427 = vld [vmem:[%s3 + $0x640] sm:$0xff]
  %v428 = vld [vmem:[%s3 + $0x648] sm:$0xff]
  %v429 = vld [vmem:[%s3 + $0x650] sm:$0xff]
  %v430 = vld [vmem:[%s3 + $0x658] sm:$0xff]
  %v431 = vld [vmem:[%s3 + $0x660] sm:$0xff]
  %v432 = vld [vmem:[%s3 + $0x668] sm:$0xff]
  %v433 = vld [vmem:[%s3 + $0x670] sm:$0xff]
  %v434 = vld [vmem:[%s3 + $0x678] sm:$0xff]
  %v435 = vld [vmem:[%s3 + $0x680] sm:$0xff]
  %v436 = vld [vmem:[%s3 + $0x688] sm:$0xff]
  %v437 = vld [vmem:[%s3 + $0x690] sm:$0xff]
  %v438 = vld [vmem:[%s3 + $0x698] sm:$0xff]
  %v439 = vld [vmem:[%s3 + $0x6a0] sm:$0xff]
  %v440 = vld [vmem:[%s3 + $0x6a8] sm:$0xff]
  %v441 = vld [vmem:[%s3 + $0x6b0] sm:$0xff]
  %v442 = vld [vmem:[%s3 + $0x6b8] sm:$0xff]
  %v443 = vld [vmem:[%s3 + $0x6c0] sm:$0xff]
  %v444 = vld [vmem:[%s3 + $0x6c8] sm:$0xff]
  %v445 = vld [vmem:[%s3 + $0x6d0] sm:$0xff]
  %v446 = vld [vmem:[%s3 + $0x6d8] sm:$0xff]
  %v447 = vld [vmem:[%s3 + $0x6e0] sm:$0xff]
  %v448 = vld [vmem:[%s3 + $0x6e8] sm:$0xff]
  %v449 = vld [vmem:[%s3 + $0x6f0] sm:$0xff]
  %v450 = vld [vmem:[%s3 + $0x6f8] sm:$0xff]
  %v451 = vld [vmem:[%s3 + $0x700] sm:$0xff]
  %v452 = vld [vmem:[%s3 + $0x708] sm:$0xff]
  %v453 = vld [vmem:[%s3 + $0x710] sm:$0xff]
  %v454 = vld [vmem:[%s3 + $0x718] sm:$0xff]
  %v455 = vld [vmem:[%s3 + $0x720] sm:$0xff]
  %v456 = vld [vmem:[%s3 + $0x728] sm:$0xff]
  %v457 = vld [vmem:[%s3 + $0x730] sm:$0xff]
  %v458 = vld [vmem:[%s3 + $0x738] sm:$0xff]
  %v459 = vld [vmem:[%s3 + $0x740] sm:$0xff]
  %v460 = vld [vmem:[%s3 + $0x748] sm:$0xff]
  %v461 = vld [vmem:[%s3 + $0x750] sm:$0xff]
  %v462 = vld [vmem:[%s3 + $0x758] sm:$0xff]
  %v463 = vld [vmem:[%s3 + $0x760] sm:$0xff]
  %v464 = vld [vmem:[%s3 + $0x768] sm:$0xff]
  %v465 = vld [vmem:[%s3 + $0x770] sm:$0xff]
  %v466 = vld [vmem:[%s3 + $0x778] sm:$0xff]
  %v467 = vld [vmem:[%s3 + $0x780] sm:$0xff]
  %v468 = vld [vmem:[%s3 + $0x788] sm:$0xff]
  %v469 = vld [vmem:[%s3 + $0x790] sm:$0xff]
  %v470 = vld [vmem:[%s3 + $0x798] sm:$0xff]
  %v471 = vld [vmem:[%s3 + $0x7a0] sm:$0xff]
  %v472 = vld [vmem:[%s3 + $0x7a8] sm:$0xff]
  %v473 = vld [vmem:[%s3 + $0x7b0] sm:$0xff]
  %v474 = vld [vmem:[%s3 + $0x7b8] sm:$0xff]
  %v475 = vld [vmem:[%s3 + $0x7c0] sm:$0xff]
  %v476 = vld [vmem:[%s3 + $0x7c8] sm:$0xff]
  %v477 = vld [vmem:[%s3 + $0x7d0] sm:$0xff]
  %v478 = vld [vmem:[%s3 + $0x7d8] sm:$0xff]
  %v479 = vld [vmem:[%s3 + $0x7e0] sm:$0xff]
  %v480 = vld [vmem:[%s3 + $0x7e8] sm:$0xff]
  %v481 = vld [vmem:[%s3 + $0x7f0] sm:$0xff]
  %v482 = vld [vmem:[%s3 + $0x7f8] sm:$0xff]
  %v483 = vld [vmem:[%s3 + $0x800] sm:$0xff]
  %v484 = vld [vmem:[%s3 + $0x808] sm:$0xff]
  %v485 = vld [vmem:[%s3 + $0x810] sm:$0xff]
  %v486 = vld [vmem:[%s3 + $0x818] sm:$0xff]
  %v487 = vld [vmem:[%s3 + $0x820] sm:$0xff]
  %v488 = vld [vmem:[%s3 + $0x828] sm:$0xff]
  %v489 = vld [vmem:[%s3 + $0x830] sm:$0xff]
  %v490 = vld [vmem:[%s3 + $0x838] sm:$0xff]
  %v491 = vld [vmem:[%s3 + $0x840] sm:$0xff]
  %v492 = vld [vmem:[%s3 + $0x848] sm:$0xff]
  %v493 = vld [vmem:[%s3 + $0x850] sm:$0xff]
  %v494 = vld [vmem:[%s3 + $0x858] sm:$0xff]
  %v495 = vld [vmem:[%s3 + $0x860] sm:$0xff]
  %v496 = vld [vmem:[%s3 + $0x868] sm:$0xff]
  %v497 = vld [vmem:[%s3 + $0x870] sm:$0xff]
  %v498 = vld [vmem:[%s3 + $0x878] sm:$0xff]
  %v499 = vld [vmem:[%s3 + $0x880] sm:$0xff]
  %v500 = vld [vmem:[%s3 + $0x888] sm:$0xff]
  %v501 = vld [vmem:[%s3 + $0x890] sm:$0xff]
  %v502 = vld [vmem:[%s3 + $0x898] sm:$0xff]
  %v503 = vld [vmem:[%s3 + $0x8a0] sm:$0xff]
  %v504 = vld [vmem:[%s3 + $0x8a8] sm:$0xff]
  %v505 = vld [vmem:[%s3 + $0x8b0] sm:$0xff]
  %v506 = vld [vmem:[%s3 + $0x8b8] sm:$0xff]
  %v507 = vld [vmem:[%s3 + $0x8c0] sm:$0xff]
  %v508 = vld [vmem:[%s3 + $0x8c8] sm:$0xff]
  %v509 = vld [vmem:[%s3 + $0x8d0] sm:$0xff]
  %v510 = vld [vmem:[%s3 + $0x8d8] sm:$0xff]
  %v511 = vld [vmem:[%s3 + $0x8e0] sm:$0xff]
  %v512 = vld [vmem:[%s3 + $0x8e8] sm:$0xff]
  %v513 = vld [vmem:[%s3 + $0x8f0] sm:$0xff]
  %v514 = vld [vmem:[%s3 + $0x8f8] sm:$0xff]
  %v515 = vld [vmem:[%s3 + $0x900] sm:$0xff]
  %v516 = vld [vmem:[%s3 + $0x908] sm:$0xff]
  %v517 = vld [vmem:[%s3 + $0x910] sm:$0xff]
  %v518 = vld [vmem:[%s3 + $0x918] sm:$0xff]
  %v519 = vld [vmem:[%s3 + $0x920] sm:$0xff]
  %v520 = vld [vmem:[%s3 + $0x928] sm:$0xff]
  %v521 = vld [vmem:[%s3 + $0x930] sm:$0xff]
  %v522 = vld [vmem:[%s3 + $0x938] sm:$0xff]
  %v523 = vld [vmem:[%s3 + $0x940] sm:$0xff]
  %v524 = vld [vmem:[%s3 + $0x948] sm:$0xff]
  %v525 = vld [vmem:[%s3 + $0x950] sm:$0xff]
  %v526 = vld [vmem:[%s3 + $0x958] sm:$0xff]
  %v527 = vld [vmem:[%s3 + $0x960] sm:$0xff]
  %v528 = vld [vmem:[%s3 + $0x968] sm:$0xff]
  %v529 = vld [vmem:[%s3 + $0x970] sm:$0xff]
  %v530 = vld [vmem:[%s3 + $0x978] sm:$0xff]
  %v531 = vld [vmem:[%s3 + $0x980] sm:$0xff]
  %v532 = vld [vmem:[%s3 + $0x988] sm:$0xff]
  %v533 = vld [vmem:[%s3 + $0x990] sm:$0xff]
  %v534 = vld [vmem:[%s3 + $0x998] sm:$0xff]
  %v535 = vld [vmem:[%s3 + $0x9a0] sm:$0xff]
  %v536 = vld [vmem:[%s3 + $0x9a8] sm:$0xff]
  %v537 = vld [vmem:[%s3 + $0x9b0] sm:$0xff]
  %v538 = vld [vmem:[%s3 + $0x9b8] sm:$0xff]
  %v539 = vld [vmem:[%s3 + $0x9c0] sm:$0xff]
  %v540 = vld [vmem:[%s3 + $0x9c8] sm:$0xff]
  %v541 = vld [vmem:[%s3 + $0x9d0] sm:$0xff]
  %v542 = vld [vmem:[%s3 + $0x9d8] sm:$0xff]
  %v543 = vld [vmem:[%s3 + $0x9e0] sm:$0xff]
  %v544 = vld [vmem:[%s3 + $0x9e8] sm:$0xff]
  %v545 = vld [vmem:[%s3 + $0x9f0] sm:$0xff]
  %v546 = vld [vmem:[%s3 + $0x9f8] sm:$0xff]
  %v547 = vld [vmem:[%s3 + $0xa00] sm:$0xff]
  %v548 = vld [vmem:[%s3 + $0xa08] sm:$0xff]
  %v549 = vld [vmem:[%s3 + $0xa10] sm:$0xff]
  %v550 = vld [vmem:[%s3 + $0xa18] sm:$0xff]
  %v551 = vld [vmem:[%s3 + $0xa20] sm:$0xff]
  %v552 = vld [vmem:[%s3 + $0xa28] sm:$0xff]
  %v553 = vld [vmem:[%s3 + $0xa30] sm:$0xff]
  %v554 = vld [vmem:[%s3 + $0xa38] sm:$0xff]
  %v555 = vld [vmem:[%s3 + $0xa40] sm:$0xff]
  %v556 = vld [vmem:[%s3 + $0xa48] sm:$0xff]
  %v557 = vld [vmem:[%s3 + $0xa50] sm:$0xff]
  %v558 = vld [vmem:[%s3 + $0xa58] sm:$0xff]
  %v559 = vld [vmem:[%s3 + $0xa60] sm:$0xff]
  %v560 = vld [vmem:[%s3 + $0xa68] sm:$0xff]
  %v561 = vld [vmem:[%s3 + $0xa70] sm:$0xff]
  %v562 = vld [vmem:[%s3 + $0xa78] sm:$0xff]
  %v563 = vld [vmem:[%s3 + $0xa80] sm:$0xff]
  %v564 = vld [vmem:[%s3 + $0xa88] sm:$0xff]
  %v565 = vld [vmem:[%s3 + $0xa90] sm:$0xff]
  %v566 = vld [vmem:[%s3 + $0xa98] sm:$0xff]
  %v567 = vld [vmem:[%s3 + $0xaa0] sm:$0xff]
  %v568 = vld [vmem:[%s3 + $0xaa8] sm:$0xff]
  %v569 = vld [vmem:[%s3 + $0xab0] sm:$0xff]
  %v570 = vld [vmem:[%s3 + $0xab8] sm:$0xff]
  %v571 = vld [vmem:[%s3 + $0xac0] sm:$0xff]
  %v572 = vld [vmem:[%s3 + $0xac8] sm:$0xff]
  %v573 = vld [vmem:[%s3 + $0xad0] sm:$0xff]
  %v574 = vld [vmem:[%s3 + $0xad8] sm:$0xff]
  %v575 = vld [vmem:[%s3 + $0xae0] sm:$0xff]
  %v576 = vld [vmem:[%s3 + $0xae8] sm:$0xff]
  %v577 = vld [vmem:[%s3 + $0xaf0] sm:$0xff]
  %v578 = vld [vmem:[%s3 + $0xaf8] sm:$0xff]
  %v579 = vld [vmem:[%s3 + $0xb00] sm:$0xff]
  %v580 = vld [vmem:[%s3 + $0xb08] sm:$0xff]
  %v581 = vld [vmem:[%s3 + $0xb10] sm:$0xff]
  %v582 = vld [vmem:[%s3 + $0xb18] sm:$0xff]
  %v583 = vld [vmem:[%s3 + $0xb20] sm:$0xff]
  %v584 = vld [vmem:[%s3 + $0xb28] sm:$0xff]
  %v585 = vld [vmem:[%s3 + $0xb30] sm:$0xff]
  %v586 = vld [vmem:[%s3 + $0xb38] sm:$0xff]
  %v587 = vld [vmem:[%s3 + $0xb40] sm:$0xff]
  %v588 = vld [vmem:[%s3 + $0xb48] sm:$0xff]
  %v589 = vld [vmem:[%s3 + $0xb50] sm:$0xff]
  %v590 = vld [vmem:[%s3 + $0xb58] sm:$0xff]
  %v591 = vld [vmem:[%s3 + $0xb60] sm:$0xff]
  %v592 = vld [vmem:[%s3 + $0xb68] sm:$0xff]
  %v593 = vld [vmem:[%s3 + $0xb70] sm:$0xff]
  %v594 = vld [vmem:[%s3 + $0xb78] sm:$0xff]
  %v595 = vld [vmem:[%s3 + $0xb80] sm:$0xff]
  %v596 = vld [vmem:[%s3 + $0xb88] sm:$0xff]
  %v597 = vld [vmem:[%s3 + $0xb90] sm:$0xff]
  %v598 = vld [vmem:[%s3 + $0xb98] sm:$0xff]
  %v599 = vld [vmem:[%s3 + $0xba0] sm:$0xff]
  %v600 = vld [vmem:[%s3 + $0xba8] sm:$0xff]
  %v601 = vld [vmem:[%s3 + $0xbb0] sm:$0xff]
  %v602 = vld [vmem:[%s3 + $0xbb8] sm:$0xff]
  %v603 = vld [vmem:[%s3 + $0xbc0] sm:$0xff]
  %v604 = vld [vmem:[%s3 + $0xbc8] sm:$0xff]
  %v605 = vld [vmem:[%s3 + $0xbd0] sm:$0xff]
  %v606 = vld [vmem:[%s3 + $0xbd8] sm:$0xff]
  %v607 = vld [vmem:[%s3 + $0xbe0] sm:$0xff]
  %v608 = vld [vmem:[%s3 + $0xbe8] sm:$0xff]
  %v609 = vld [vmem:[%s3 + $0xbf0] sm:$0xff]
  %v610 = vld [vmem:[%s3 + $0xbf8] sm:$0xff]
  %v995 = vunpack.c.l.b16 %v227
  %v996 = vunpack.c.h.b16 %v227
  %v997 = vunpack.c.l.b16 %v228
  %v998 = vunpack.c.h.b16 %v228
  %v999 = vunpack.c.l.b16 %v229
  %v1000 = vunpack.c.h.b16 %v229
  %v1001 = vunpack.c.l.b16 %v230
  %v1002 = vunpack.c.h.b16 %v230
  %v1003 = vunpack.c.l.b16 %v231
  %v1004 = vunpack.c.h.b16 %v231
  %v1005 = vunpack.c.l.b16 %v232
  %v1006 = vunpack.c.h.b16 %v232
  %v1007 = vunpack.c.l.b16 %v233
  %v1008 = vunpack.c.h.b16 %v233
  %v1009 = vunpack.c.l.b16 %v234
  %v1010 = vunpack.c.h.b16 %v234
  %v1011 = vunpack.c.l.b16 %v235
  %v1012 = vunpack.c.h.b16 %v235
  %v1013 = vunpack.c.l.b16 %v236
  %v1014 = vunpack.c.h.b16 %v236
  %v1015 = vunpack.c.l.b16 %v237
  %v1016 = vunpack.c.h.b16 %v237
  %v1017 = vunpack.c.l.b16 %v238
  %v1018 = vunpack.c.h.b16 %v238
  %v1019 = vunpack.c.l.b16 %v239
  %v1020 = vunpack.c.h.b16 %v239
  %v1021 = vunpack.c.l.b16 %v240
  %v1022 = vunpack.c.h.b16 %v240
  %v1023 = vunpack.c.l.b16 %v241
  %v1024 = vunpack.c.h.b16 %v241
  %v1025 = vunpack.c.l.b16 %v242
  %v1026 = vunpack.c.h.b16 %v242
  %v1027 = vunpack.c.l.b16 %v243
  %v1028 = vunpack.c.h.b16 %v243
  %v1029 = vunpack.c.l.b16 %v244
  %v1030 = vunpack.c.h.b16 %v244
  %v1031 = vunpack.c.l.b16 %v245
  %v1032 = vunpack.c.h.b16 %v245
  %v1033 = vunpack.c.l.b16 %v246
  %v1034 = vunpack.c.h.b16 %v246
  %v1035 = vunpack.c.l.b16 %v247
  %v1036 = vunpack.c.h.b16 %v247
  %v1037 = vunpack.c.l.b16 %v248
  %v1038 = vunpack.c.h.b16 %v248
  %v1039 = vunpack.c.l.b16 %v249
  %v1040 = vunpack.c.h.b16 %v249
  %v1041 = vunpack.c.l.b16 %v250
  %v1042 = vunpack.c.h.b16 %v250
  %v1043 = vunpack.c.l.b16 %v251
  %v1044 = vunpack.c.h.b16 %v251
  %v1045 = vunpack.c.l.b16 %v252
  %v1046 = vunpack.c.h.b16 %v252
  %v1047 = vunpack.c.l.b16 %v253
  %v1048 = vunpack.c.h.b16 %v253
  %v1049 = vunpack.c.l.b16 %v254
  %v1050 = vunpack.c.h.b16 %v254
  %v1051 = vunpack.c.l.b16 %v255
  %v1052 = vunpack.c.h.b16 %v255
  %v1053 = vunpack.c.l.b16 %v256
  %v1054 = vunpack.c.h.b16 %v256
  %v1055 = vunpack.c.l.b16 %v257
  %v1056 = vunpack.c.h.b16 %v257
  %v1057 = vunpack.c.l.b16 %v258
  %v1058 = vunpack.c.h.b16 %v258
  %v1059 = vunpack.c.l.b16 %v259
  %v1060 = vunpack.c.h.b16 %v259
  %v1061 = vunpack.c.l.b16 %v260
  %v1062 = vunpack.c.h.b16 %v260
  %v1063 = vunpack.c.l.b16 %v261
  %v1064 = vunpack.c.h.b16 %v261
  %v1065 = vunpack.c.l.b16 %v262
  %v1066 = vunpack.c.h.b16 %v262
  %v1067 = vunpack.c.l.b16 %v263
  %v1068 = vunpack.c.h.b16 %v263
  %v1069 = vunpack.c.l.b16 %v264
  %v1070 = vunpack.c.h.b16 %v264
  %v1071 = vunpack.c.l.b16 %v265
  %v1072 = vunpack.c.h.b16 %v265
  %v1073 = vunpack.c.l.b16 %v266
  %v1074 = vunpack.c.h.b16 %v266
  %v1075 = vunpack.c.l.b16 %v267
  %v1076 = vunpack.c.h.b16 %v267
  %v1077 = vunpack.c.l.b16 %v268
  %v1078 = vunpack.c.h.b16 %v268
  %v1079 = vunpack.c.l.b16 %v269
  %v1080 = vunpack.c.h.b16 %v269
  %v1081 = vunpack.c.l.b16 %v270
  %v1082 = vunpack.c.h.b16 %v270
  %v1083 = vunpack.c.l.b16 %v271
  %v1084 = vunpack.c.h.b16 %v271
  %v1085 = vunpack.c.l.b16 %v272
  %v1086 = vunpack.c.h.b16 %v272
  %v1087 = vunpack.c.l.b16 %v273
  %v1088 = vunpack.c.h.b16 %v273
  %v1089 = vunpack.c.l.b16 %v274
  %v1090 = vunpack.c.h.b16 %v274
  %v1091 = vunpack.c.l.b16 %v275
  %v1092 = vunpack.c.h.b16 %v275
  %v1093 = vunpack.c.l.b16 %v276
  %v1094 = vunpack.c.h.b16 %v276
  %v1095 = vunpack.c.l.b16 %v277
  %v1096 = vunpack.c.h.b16 %v277
  %v1097 = vunpack.c.l.b16 %v278
  %v1098 = vunpack.c.h.b16 %v278
  %v1099 = vunpack.c.l.b16 %v279
  %v1100 = vunpack.c.h.b16 %v279
  %v1101 = vunpack.c.l.b16 %v280
  %v1102 = vunpack.c.h.b16 %v280
  %v1103 = vunpack.c.l.b16 %v281
  %v1104 = vunpack.c.h.b16 %v281
  %v1105 = vunpack.c.l.b16 %v282
  %v1106 = vunpack.c.h.b16 %v282
  %v1107 = vunpack.c.l.b16 %v283
  %v1108 = vunpack.c.h.b16 %v283
  %v1109 = vunpack.c.l.b16 %v284
  %v1110 = vunpack.c.h.b16 %v284
  %v1111 = vunpack.c.l.b16 %v285
  %v1112 = vunpack.c.h.b16 %v285
  %v1113 = vunpack.c.l.b16 %v286
  %v1114 = vunpack.c.h.b16 %v286
  %v1115 = vunpack.c.l.b16 %v287
  %v1116 = vunpack.c.h.b16 %v287
  %v1117 = vunpack.c.l.b16 %v288
  %v1118 = vunpack.c.h.b16 %v288
  %v1119 = vunpack.c.l.b16 %v289
  %v1120 = vunpack.c.h.b16 %v289
  %v1121 = vunpack.c.l.b16 %v290
  %v1122 = vunpack.c.h.b16 %v290
  %v1123 = vunpack.c.l.b16 %v291
  %v1124 = vunpack.c.h.b16 %v291
  %v1125 = vunpack.c.l.b16 %v292
  %v1126 = vunpack.c.h.b16 %v292
  %v1127 = vunpack.c.l.b16 %v293
  %v1128 = vunpack.c.h.b16 %v293
  %v1129 = vunpack.c.l.b16 %v294
  %v1130 = vunpack.c.h.b16 %v294
  %v1131 = vunpack.c.l.b16 %v295
  %v1132 = vunpack.c.h.b16 %v295
  %v1133 = vunpack.c.l.b16 %v296
  %v1134 = vunpack.c.h.b16 %v296
  %v1135 = vunpack.c.l.b16 %v297
  %v1136 = vunpack.c.h.b16 %v297
  %v1137 = vunpack.c.l.b16 %v298
  %v1138 = vunpack.c.h.b16 %v298
  %v1139 = vunpack.c.l.b16 %v299
  %v1140 = vunpack.c.h.b16 %v299
  %v1141 = vunpack.c.l.b16 %v300
  %v1142 = vunpack.c.h.b16 %v300
  %v1143 = vunpack.c.l.b16 %v301
  %v1144 = vunpack.c.h.b16 %v301
  %v1145 = vunpack.c.l.b16 %v302
  %v1146 = vunpack.c.h.b16 %v302
  %v1147 = vunpack.c.l.b16 %v303
  %v1148 = vunpack.c.h.b16 %v303
  %v1149 = vunpack.c.l.b16 %v304
  %v1150 = vunpack.c.h.b16 %v304
  %v1151 = vunpack.c.l.b16 %v305
  %v1152 = vunpack.c.h.b16 %v305
  %v1153 = vunpack.c.l.b16 %v306
  %v1154 = vunpack.c.h.b16 %v306
  %v1155 = vunpack.c.l.b16 %v307
  %v1156 = vunpack.c.h.b16 %v307
  %v1157 = vunpack.c.l.b16 %v308
  %v1158 = vunpack.c.h.b16 %v308
  %v1159 = vunpack.c.l.b16 %v309
  %v1160 = vunpack.c.h.b16 %v309
  %v1161 = vunpack.c.l.b16 %v310
  %v1162 = vunpack.c.h.b16 %v310
  %v1163 = vunpack.c.l.b16 %v311
  %v1164 = vunpack.c.h.b16 %v311
  %v1165 = vunpack.c.l.b16 %v312
  %v1166 = vunpack.c.h.b16 %v312
  %v1167 = vunpack.c.l.b16 %v313
  %v1168 = vunpack.c.h.b16 %v313
  %v1169 = vunpack.c.l.b16 %v314
  %v1170 = vunpack.c.h.b16 %v314
  %v1171 = vunpack.c.l.b16 %v315
  %v1172 = vunpack.c.h.b16 %v315
  %v1173 = vunpack.c.l.b16 %v316
  %v1174 = vunpack.c.h.b16 %v316
  %v1175 = vunpack.c.l.b16 %v317
  %v1176 = vunpack.c.h.b16 %v317
  %v1177 = vunpack.c.l.b16 %v318
  %v1178 = vunpack.c.h.b16 %v318
  %v1179 = vunpack.c.l.b16 %v319
  %v1180 = vunpack.c.h.b16 %v319
  %v1181 = vunpack.c.l.b16 %v320
  %v1182 = vunpack.c.h.b16 %v320
  %v1183 = vunpack.c.l.b16 %v321
  %v1184 = vunpack.c.h.b16 %v321
  %v1185 = vunpack.c.l.b16 %v322
  %v1186 = vunpack.c.h.b16 %v322
  %v1187 = vunpack.c.l.b16 %v323
  %v1188 = vunpack.c.h.b16 %v323
  %v1189 = vunpack.c.l.b16 %v324
  %v1190 = vunpack.c.h.b16 %v324
  %v1191 = vunpack.c.l.b16 %v325
  %v1192 = vunpack.c.h.b16 %v325
  %v1193 = vunpack.c.l.b16 %v326
  %v1194 = vunpack.c.h.b16 %v326
  %v1195 = vunpack.c.l.b16 %v327
  %v1196 = vunpack.c.h.b16 %v327
  %v1197 = vunpack.c.l.b16 %v328
  %v1198 = vunpack.c.h.b16 %v328
  %v1199 = vunpack.c.l.b16 %v329
  %v1200 = vunpack.c.h.b16 %v329
  %v1201 = vunpack.c.l.b16 %v330
  %v1202 = vunpack.c.h.b16 %v330
  %v1203 = vunpack.c.l.b16 %v331
  %v1204 = vunpack.c.h.b16 %v331
  %v1205 = vunpack.c.l.b16 %v332
  %v1206 = vunpack.c.h.b16 %v332
  %v1207 = vunpack.c.l.b16 %v333
  %v1208 = vunpack.c.h.b16 %v333
  %v1209 = vunpack.c.l.b16 %v334
  %v1210 = vunpack.c.h.b16 %v334
  %v1211 = vunpack.c.l.b16 %v335
  %v1212 = vunpack.c.h.b16 %v335
  %v1213 = vunpack.c.l.b16 %v336
  %v1214 = vunpack.c.h.b16 %v336
  %v1215 = vunpack.c.l.b16 %v337
  %v1216 = vunpack.c.h.b16 %v337
  %v1217 = vunpack.c.l.b16 %v338
  %v1218 = vunpack.c.h.b16 %v338
  %v1219 = vunpack.c.l.b16 %v339
  %v1220 = vunpack.c.h.b16 %v339
  %v1221 = vunpack.c.l.b16 %v340
  %v1222 = vunpack.c.h.b16 %v340
  %v1223 = vunpack.c.l.b16 %v341
  %v1224 = vunpack.c.h.b16 %v341
  %v1225 = vunpack.c.l.b16 %v342
  %v1226 = vunpack.c.h.b16 %v342
  %v1227 = vunpack.c.l.b16 %v343
  %v1228 = vunpack.c.h.b16 %v343
  %v1229 = vunpack.c.l.b16 %v344
  %v1230 = vunpack.c.h.b16 %v344
  %v1231 = vunpack.c.l.b16 %v345
  %v1232 = vunpack.c.h.b16 %v345
  %v1233 = vunpack.c.l.b16 %v346
  %v1234 = vunpack.c.h.b16 %v346
  %v1235 = vunpack.c.l.b16 %v347
  %v1236 = vunpack.c.h.b16 %v347
  %v1237 = vunpack.c.l.b16 %v348
  %v1238 = vunpack.c.h.b16 %v348
  %v1239 = vunpack.c.l.b16 %v349
  %v1240 = vunpack.c.h.b16 %v349
  %v1241 = vunpack.c.l.b16 %v350
  %v1242 = vunpack.c.h.b16 %v350
  %v1243 = vunpack.c.l.b16 %v351
  %v1244 = vunpack.c.h.b16 %v351
  %v1245 = vunpack.c.l.b16 %v352
  %v1246 = vunpack.c.h.b16 %v352
  %v1247 = vunpack.c.l.b16 %v353
  %v1248 = vunpack.c.h.b16 %v353
  %v1249 = vunpack.c.l.b16 %v354
  %v1250 = vunpack.c.h.b16 %v354
  %v1251 = vunpack.c.l.b16 %v355
  %v1252 = vunpack.c.h.b16 %v355
  %v1253 = vunpack.c.l.b16 %v356
  %v1254 = vunpack.c.h.b16 %v356
  %v1255 = vunpack.c.l.b16 %v357
  %v1256 = vunpack.c.h.b16 %v357
  %v1257 = vunpack.c.l.b16 %v358
  %v1258 = vunpack.c.h.b16 %v358
  %v1259 = vunpack.c.l.b16 %v359
  %v1260 = vunpack.c.h.b16 %v359
  %v1261 = vunpack.c.l.b16 %v360
  %v1262 = vunpack.c.h.b16 %v360
  %v1263 = vunpack.c.l.b16 %v361
  %v1264 = vunpack.c.h.b16 %v361
  %v1265 = vunpack.c.l.b16 %v362
  %v1266 = vunpack.c.h.b16 %v362
  %v1267 = vunpack.c.l.b16 %v363
  %v1268 = vunpack.c.h.b16 %v363
  %v1269 = vunpack.c.l.b16 %v364
  %v1270 = vunpack.c.h.b16 %v364
  %v1271 = vunpack.c.l.b16 %v365
  %v1272 = vunpack.c.h.b16 %v365
  %v1273 = vunpack.c.l.b16 %v366
  %v1274 = vunpack.c.h.b16 %v366
  %v1275 = vunpack.c.l.b16 %v367
  %v1276 = vunpack.c.h.b16 %v367
  %v1277 = vunpack.c.l.b16 %v368
  %v1278 = vunpack.c.h.b16 %v368
  %v1279 = vunpack.c.l.b16 %v369
  %v1280 = vunpack.c.h.b16 %v369
  %v1281 = vunpack.c.l.b16 %v370
  %v1282 = vunpack.c.h.b16 %v370
  %v1283 = vunpack.c.l.b16 %v371
  %v1284 = vunpack.c.h.b16 %v371
  %v1285 = vunpack.c.l.b16 %v372
  %v1286 = vunpack.c.h.b16 %v372
  %v1287 = vunpack.c.l.b16 %v373
  %v1288 = vunpack.c.h.b16 %v373
  %v1289 = vunpack.c.l.b16 %v374
  %v1290 = vunpack.c.h.b16 %v374
  %v1291 = vunpack.c.l.b16 %v375
  %v1292 = vunpack.c.h.b16 %v375
  %v1293 = vunpack.c.l.b16 %v376
  %v1294 = vunpack.c.h.b16 %v376
  %v1295 = vunpack.c.l.b16 %v377
  %v1296 = vunpack.c.h.b16 %v377
  %v1297 = vunpack.c.l.b16 %v378
  %v1298 = vunpack.c.h.b16 %v378
  %v1299 = vunpack.c.l.b16 %v379
  %v1300 = vunpack.c.h.b16 %v379
  %v1301 = vunpack.c.l.b16 %v380
  %v1302 = vunpack.c.h.b16 %v380
  %v1303 = vunpack.c.l.b16 %v381
  %v1304 = vunpack.c.h.b16 %v381
  %v1305 = vunpack.c.l.b16 %v382
  %v1306 = vunpack.c.h.b16 %v382
  %v1307 = vunpack.c.l.b16 %v383
  %v1308 = vunpack.c.h.b16 %v383
  %v1309 = vunpack.c.l.b16 %v384
  %v1310 = vunpack.c.h.b16 %v384
  %v1311 = vunpack.c.l.b16 %v385
  %v1312 = vunpack.c.h.b16 %v385
  %v1313 = vunpack.c.l.b16 %v386
  %v1314 = vunpack.c.h.b16 %v386
  %v1315 = vunpack.c.l.b16 %v387
  %v1316 = vunpack.c.h.b16 %v387
  %v1317 = vunpack.c.l.b16 %v388
  %v1318 = vunpack.c.h.b16 %v388
  %v1319 = vunpack.c.l.b16 %v389
  %v1320 = vunpack.c.h.b16 %v389
  %v1321 = vunpack.c.l.b16 %v390
  %v1322 = vunpack.c.h.b16 %v390
  %v1323 = vunpack.c.l.b16 %v391
  %v1324 = vunpack.c.h.b16 %v391
  %v1325 = vunpack.c.l.b16 %v392
  %v1326 = vunpack.c.h.b16 %v392
  %v1327 = vunpack.c.l.b16 %v393
  %v1328 = vunpack.c.h.b16 %v393
  %v1329 = vunpack.c.l.b16 %v394
  %v1330 = vunpack.c.h.b16 %v394
  %v1331 = vunpack.c.l.b16 %v395
  %v1332 = vunpack.c.h.b16 %v395
  %v1333 = vunpack.c.l.b16 %v396
  %v1334 = vunpack.c.h.b16 %v396
  %v1335 = vunpack.c.l.b16 %v397
  %v1336 = vunpack.c.h.b16 %v397
  %v1337 = vunpack.c.l.b16 %v398
  %v1338 = vunpack.c.h.b16 %v398
  %v1339 = vunpack.c.l.b16 %v399
  %v1340 = vunpack.c.h.b16 %v399
  %v1341 = vunpack.c.l.b16 %v400
  %v1342 = vunpack.c.h.b16 %v400
  %v1343 = vunpack.c.l.b16 %v401
  %v1344 = vunpack.c.h.b16 %v401
  %v1345 = vunpack.c.l.b16 %v402
  %v1346 = vunpack.c.h.b16 %v402
  %v1347 = vunpack.c.l.b16 %v403
  %v1348 = vunpack.c.h.b16 %v403
  %v1349 = vunpack.c.l.b16 %v404
  %v1350 = vunpack.c.h.b16 %v404
  %v1351 = vunpack.c.l.b16 %v405
  %v1352 = vunpack.c.h.b16 %v405
  %v1353 = vunpack.c.l.b16 %v406
  %v1354 = vunpack.c.h.b16 %v406
  %v1355 = vunpack.c.l.b16 %v407
  %v1356 = vunpack.c.h.b16 %v407
  %v1357 = vunpack.c.l.b16 %v408
  %v1358 = vunpack.c.h.b16 %v408
  %v1359 = vunpack.c.l.b16 %v409
  %v1360 = vunpack.c.h.b16 %v409
  %v1361 = vunpack.c.l.b16 %v410
  %v1362 = vunpack.c.h.b16 %v410
  %v1363 = vunpack.c.l.b16 %v411
  %v1364 = vunpack.c.h.b16 %v411
  %v1365 = vunpack.c.l.b16 %v412
  %v1366 = vunpack.c.h.b16 %v412
  %v1367 = vunpack.c.l.b16 %v413
  %v1368 = vunpack.c.h.b16 %v413
  %v1369 = vunpack.c.l.b16 %v414
  %v1370 = vunpack.c.h.b16 %v414
  %v1371 = vunpack.c.l.b16 %v415
  %v1372 = vunpack.c.h.b16 %v415
  %v1373 = vunpack.c.l.b16 %v416
  %v1374 = vunpack.c.h.b16 %v416
  %v1375 = vunpack.c.l.b16 %v417
  %v1376 = vunpack.c.h.b16 %v417
  %v1377 = vunpack.c.l.b16 %v418
  %v1378 = vunpack.c.h.b16 %v418
  %v1379 = vunpack.c.l.b16 %v419
  %v1380 = vunpack.c.h.b16 %v419
  %v1381 = vunpack.c.l.b16 %v420
  %v1382 = vunpack.c.h.b16 %v420
  %v1383 = vunpack.c.l.b16 %v421
  %v1384 = vunpack.c.h.b16 %v421
  %v1385 = vunpack.c.l.b16 %v422
  %v1386 = vunpack.c.h.b16 %v422
  %v1387 = vunpack.c.l.b16 %v423
  %v1388 = vunpack.c.h.b16 %v423
  %v1389 = vunpack.c.l.b16 %v424
  %v1390 = vunpack.c.h.b16 %v424
  %v1391 = vunpack.c.l.b16 %v425
  %v1392 = vunpack.c.h.b16 %v425
  %v1393 = vunpack.c.l.b16 %v426
  %v1394 = vunpack.c.h.b16 %v426
  %v1395 = vunpack.c.l.b16 %v427
  %v1396 = vunpack.c.h.b16 %v427
  %v1397 = vunpack.c.l.b16 %v428
  %v1398 = vunpack.c.h.b16 %v428
  %v1399 = vunpack.c.l.b16 %v429
  %v1400 = vunpack.c.h.b16 %v429
  %v1401 = vunpack.c.l.b16 %v430
  %v1402 = vunpack.c.h.b16 %v430
  %v1403 = vunpack.c.l.b16 %v431
  %v1404 = vunpack.c.h.b16 %v431
  %v1405 = vunpack.c.l.b16 %v432
  %v1406 = vunpack.c.h.b16 %v432
  %v1407 = vunpack.c.l.b16 %v433
  %v1408 = vunpack.c.h.b16 %v433
  %v1409 = vunpack.c.l.b16 %v434
  %v1410 = vunpack.c.h.b16 %v434
  %v1411 = vunpack.c.l.b16 %v435
  %v1412 = vunpack.c.h.b16 %v435
  %v1413 = vunpack.c.l.b16 %v436
  %v1414 = vunpack.c.h.b16 %v436
  %v1415 = vunpack.c.l.b16 %v437
  %v1416 = vunpack.c.h.b16 %v437
  %v1417 = vunpack.c.l.b16 %v438
  %v1418 = vunpack.c.h.b16 %v438
  %v1419 = vunpack.c.l.b16 %v439
  %v1420 = vunpack.c.h.b16 %v439
  %v1421 = vunpack.c.l.b16 %v440
  %v1422 = vunpack.c.h.b16 %v440
  %v1423 = vunpack.c.l.b16 %v441
  %v1424 = vunpack.c.h.b16 %v441
  %v1425 = vunpack.c.l.b16 %v442
  %v1426 = vunpack.c.h.b16 %v442
  %v1427 = vunpack.c.l.b16 %v443
  %v1428 = vunpack.c.h.b16 %v443
  %v1429 = vunpack.c.l.b16 %v444
  %v1430 = vunpack.c.h.b16 %v444
  %v1431 = vunpack.c.l.b16 %v445
  %v1432 = vunpack.c.h.b16 %v445
  %v1433 = vunpack.c.l.b16 %v446
  %v1434 = vunpack.c.h.b16 %v446
  %v1435 = vunpack.c.l.b16 %v447
  %v1436 = vunpack.c.h.b16 %v447
  %v1437 = vunpack.c.l.b16 %v448
  %v1438 = vunpack.c.h.b16 %v448
  %v1439 = vunpack.c.l.b16 %v449
  %v1440 = vunpack.c.h.b16 %v449
  %v1441 = vunpack.c.l.b16 %v450
  %v1442 = vunpack.c.h.b16 %v450
  %v1443 = vunpack.c.l.b16 %v451
  %v1444 = vunpack.c.h.b16 %v451
  %v1445 = vunpack.c.l.b16 %v452
  %v1446 = vunpack.c.h.b16 %v452
  %v1447 = vunpack.c.l.b16 %v453
  %v1448 = vunpack.c.h.b16 %v453
  %v1449 = vunpack.c.l.b16 %v454
  %v1450 = vunpack.c.h.b16 %v454
  %v1451 = vunpack.c.l.b16 %v455
  %v1452 = vunpack.c.h.b16 %v455
  %v1453 = vunpack.c.l.b16 %v456
  %v1454 = vunpack.c.h.b16 %v456
  %v1455 = vunpack.c.l.b16 %v457
  %v1456 = vunpack.c.h.b16 %v457
  %v1457 = vunpack.c.l.b16 %v458
  %v1458 = vunpack.c.h.b16 %v458
  %v1459 = vunpack.c.l.b16 %v459
  %v1460 = vunpack.c.h.b16 %v459
  %v1461 = vunpack.c.l.b16 %v460
  %v1462 = vunpack.c.h.b16 %v460
  %v1463 = vunpack.c.l.b16 %v461
  %v1464 = vunpack.c.h.b16 %v461
  %v1465 = vunpack.c.l.b16 %v462
  %v1466 = vunpack.c.h.b16 %v462
  %v1467 = vunpack.c.l.b16 %v463
  %v1468 = vunpack.c.h.b16 %v463
  %v1469 = vunpack.c.l.b16 %v464
  %v1470 = vunpack.c.h.b16 %v464
  %v1471 = vunpack.c.l.b16 %v465
  %v1472 = vunpack.c.h.b16 %v465
  %v1473 = vunpack.c.l.b16 %v466
  %v1474 = vunpack.c.h.b16 %v466
  %v1475 = vunpack.c.l.b16 %v467
  %v1476 = vunpack.c.h.b16 %v467
  %v1477 = vunpack.c.l.b16 %v468
  %v1478 = vunpack.c.h.b16 %v468
  %v1479 = vunpack.c.l.b16 %v469
  %v1480 = vunpack.c.h.b16 %v469
  %v1481 = vunpack.c.l.b16 %v470
  %v1482 = vunpack.c.h.b16 %v470
  %v1483 = vunpack.c.l.b16 %v471
  %v1484 = vunpack.c.h.b16 %v471
  %v1485 = vunpack.c.l.b16 %v472
  %v1486 = vunpack.c.h.b16 %v472
  %v1487 = vunpack.c.l.b16 %v473
  %v1488 = vunpack.c.h.b16 %v473
  %v1489 = vunpack.c.l.b16 %v474
  %v1490 = vunpack.c.h.b16 %v474
  %v1491 = vunpack.c.l.b16 %v475
  %v1492 = vunpack.c.h.b16 %v475
  %v1493 = vunpack.c.l.b16 %v476
  %v1494 = vunpack.c.h.b16 %v476
  %v1495 = vunpack.c.l.b16 %v477
  %v1496 = vunpack.c.h.b16 %v477
  %v1497 = vunpack.c.l.b16 %v478
  %v1498 = vunpack.c.h.b16 %v478
  %v1499 = vunpack.c.l.b16 %v479
  %v1500 = vunpack.c.h.b16 %v479
  %v1501 = vunpack.c.l.b16 %v480
  %v1502 = vunpack.c.h.b16 %v480
  %v1503 = vunpack.c.l.b16 %v481
  %v1504 = vunpack.c.h.b16 %v481
  %v1505 = vunpack.c.l.b16 %v482
  %v1506 = vunpack.c.h.b16 %v482
  %v1507 = vunpack.c.l.b16 %v483
  %v1508 = vunpack.c.h.b16 %v483
  %v1509 = vunpack.c.l.b16 %v484
  %v1510 = vunpack.c.h.b16 %v484
  %v1511 = vunpack.c.l.b16 %v485
  %v1512 = vunpack.c.h.b16 %v485
  %v1513 = vunpack.c.l.b16 %v486
  %v1514 = vunpack.c.h.b16 %v486
  %v1515 = vunpack.c.l.b16 %v487
  %v1516 = vunpack.c.h.b16 %v487
  %v1517 = vunpack.c.l.b16 %v488
  %v1518 = vunpack.c.h.b16 %v488
  %v1519 = vunpack.c.l.b16 %v489
  %v1520 = vunpack.c.h.b16 %v489
  %v1521 = vunpack.c.l.b16 %v490
  %v1522 = vunpack.c.h.b16 %v490
  %v1523 = vunpack.c.l.b16 %v491
  %v1524 = vunpack.c.h.b16 %v491
  %v1525 = vunpack.c.l.b16 %v492
  %v1526 = vunpack.c.h.b16 %v492
  %v1527 = vunpack.c.l.b16 %v493
  %v1528 = vunpack.c.h.b16 %v493
  %v1529 = vunpack.c.l.b16 %v494
  %v1530 = vunpack.c.h.b16 %v494
  %v1531 = vunpack.c.l.b16 %v495
  %v1532 = vunpack.c.h.b16 %v495
  %v1533 = vunpack.c.l.b16 %v496
  %v1534 = vunpack.c.h.b16 %v496
  %v1535 = vunpack.c.l.b16 %v497
  %v1536 = vunpack.c.h.b16 %v497
  %v1537 = vunpack.c.l.b16 %v498
  %v1538 = vunpack.c.h.b16 %v498
  %v1539 = vunpack.c.l.b16 %v499
  %v1540 = vunpack.c.h.b16 %v499
  %v1541 = vunpack.c.l.b16 %v500
  %v1542 = vunpack.c.h.b16 %v500
  %v1543 = vunpack.c.l.b16 %v501
  %v1544 = vunpack.c.h.b16 %v501
  %v1545 = vunpack.c.l.b16 %v502
  %v1546 = vunpack.c.h.b16 %v502
  %v1547 = vunpack.c.l.b16 %v503
  %v1548 = vunpack.c.h.b16 %v503
  %v1549 = vunpack.c.l.b16 %v504
  %v1550 = vunpack.c.h.b16 %v504
  %v1551 = vunpack.c.l.b16 %v505
  %v1552 = vunpack.c.h.b16 %v505
  %v1553 = vunpack.c.l.b16 %v506
  %v1554 = vunpack.c.h.b16 %v506
  %v1555 = vunpack.c.l.b16 %v507
  %v1556 = vunpack.c.h.b16 %v507
  %v1557 = vunpack.c.l.b16 %v508
  %v1558 = vunpack.c.h.b16 %v508
  %v1559 = vunpack.c.l.b16 %v509
  %v1560 = vunpack.c.h.b16 %v509
  %v1561 = vunpack.c.l.b16 %v510
  %v1562 = vunpack.c.h.b16 %v510
  %v1563 = vunpack.c.l.b16 %v511
  %v1564 = vunpack.c.h.b16 %v511
  %v1565 = vunpack.c.l.b16 %v512
  %v1566 = vunpack.c.h.b16 %v512
  %v1567 = vunpack.c.l.b16 %v513
  %v1568 = vunpack.c.h.b16 %v513
  %v1569 = vunpack.c.l.b16 %v514
  %v1570 = vunpack.c.h.b16 %v514
  %v1571 = vunpack.c.l.b16 %v515
  %v1572 = vunpack.c.h.b16 %v515
  %v1573 = vunpack.c.l.b16 %v516
  %v1574 = vunpack.c.h.b16 %v516
  %v1575 = vunpack.c.l.b16 %v517
  %v1576 = vunpack.c.h.b16 %v517
  %v1577 = vunpack.c.l.b16 %v518
  %v1578 = vunpack.c.h.b16 %v518
  %v1579 = vunpack.c.l.b16 %v519
  %v1580 = vunpack.c.h.b16 %v519
  %v1581 = vunpack.c.l.b16 %v520
  %v1582 = vunpack.c.h.b16 %v520
  %v1583 = vunpack.c.l.b16 %v521
  %v1584 = vunpack.c.h.b16 %v521
  %v1585 = vunpack.c.l.b16 %v522
  %v1586 = vunpack.c.h.b16 %v522
  %v1587 = vunpack.c.l.b16 %v523
  %v1588 = vunpack.c.h.b16 %v523
  %v1589 = vunpack.c.l.b16 %v524
  %v1590 = vunpack.c.h.b16 %v524
  %v1591 = vunpack.c.l.b16 %v525
  %v1592 = vunpack.c.h.b16 %v525
  %v1593 = vunpack.c.l.b16 %v526
  %v1594 = vunpack.c.h.b16 %v526
  %v1595 = vunpack.c.l.b16 %v527
  %v1596 = vunpack.c.h.b16 %v527
  %v1597 = vunpack.c.l.b16 %v528
  %v1598 = vunpack.c.h.b16 %v528
  %v1599 = vunpack.c.l.b16 %v529
  %v1600 = vunpack.c.h.b16 %v529
  %v1601 = vunpack.c.l.b16 %v530
  %v1602 = vunpack.c.h.b16 %v530
  %v1603 = vunpack.c.l.b16 %v531
  %v1604 = vunpack.c.h.b16 %v531
  %v1605 = vunpack.c.l.b16 %v532
  %v1606 = vunpack.c.h.b16 %v532
  %v1607 = vunpack.c.l.b16 %v533
  %v1608 = vunpack.c.h.b16 %v533
  %v1609 = vunpack.c.l.b16 %v534
  %v1610 = vunpack.c.h.b16 %v534
  %v1611 = vunpack.c.l.b16 %v535
  %v1612 = vunpack.c.h.b16 %v535
  %v1613 = vunpack.c.l.b16 %v536
  %v1614 = vunpack.c.h.b16 %v536
  %v1615 = vunpack.c.l.b16 %v537
  %v1616 = vunpack.c.h.b16 %v537
  %v1617 = vunpack.c.l.b16 %v538
  %v1618 = vunpack.c.h.b16 %v538
  %v1619 = vunpack.c.l.b16 %v539
  %v1620 = vunpack.c.h.b16 %v539
  %v1621 = vunpack.c.l.b16 %v540
  %v1622 = vunpack.c.h.b16 %v540
  %v1623 = vunpack.c.l.b16 %v541
  %v1624 = vunpack.c.h.b16 %v541
  %v1625 = vunpack.c.l.b16 %v542
  %v1626 = vunpack.c.h.b16 %v542
  %v1627 = vunpack.c.l.b16 %v543
  %v1628 = vunpack.c.h.b16 %v543
  %v1629 = vunpack.c.l.b16 %v544
  %v1630 = vunpack.c.h.b16 %v544
  %v1631 = vunpack.c.l.b16 %v545
  %v1632 = vunpack.c.h.b16 %v545
  %v1633 = vunpack.c.l.b16 %v546
  %v1634 = vunpack.c.h.b16 %v546
  %v1635 = vunpack.c.l.b16 %v547
  %v1636 = vunpack.c.h.b16 %v547
  %v1637 = vunpack.c.l.b16 %v548
  %v1638 = vunpack.c.h.b16 %v548
  %v1639 = vunpack.c.l.b16 %v549
  %v1640 = vunpack.c.h.b16 %v549
  %v1641 = vunpack.c.l.b16 %v550
  %v1642 = vunpack.c.h.b16 %v550
  %v1643 = vunpack.c.l.b16 %v551
  %v1644 = vunpack.c.h.b16 %v551
  %v1645 = vunpack.c.l.b16 %v552
  %v1646 = vunpack.c.h.b16 %v552
  %v1647 = vunpack.c.l.b16 %v553
  %v1648 = vunpack.c.h.b16 %v553
  %v1649 = vunpack.c.l.b16 %v554
  %v1650 = vunpack.c.h.b16 %v554
  %v1651 = vunpack.c.l.b16 %v555
  %v1652 = vunpack.c.h.b16 %v555
  %v1653 = vunpack.c.l.b16 %v556
  %v1654 = vunpack.c.h.b16 %v556
  %v1655 = vunpack.c.l.b16 %v557
  %v1656 = vunpack.c.h.b16 %v557
  %v1657 = vunpack.c.l.b16 %v558
  %v1658 = vunpack.c.h.b16 %v558
  %v1659 = vunpack.c.l.b16 %v559
  %v1660 = vunpack.c.h.b16 %v559
  %v1661 = vunpack.c.l.b16 %v560
  %v1662 = vunpack.c.h.b16 %v560
  %v1663 = vunpack.c.l.b16 %v561
  %v1664 = vunpack.c.h.b16 %v561
  %v1665 = vunpack.c.l.b16 %v562
  %v1666 = vunpack.c.h.b16 %v562
  %v1667 = vunpack.c.l.b16 %v563
  %v1668 = vunpack.c.h.b16 %v563
  %v1669 = vunpack.c.l.b16 %v564
  %v1670 = vunpack.c.h.b16 %v564
  %v1671 = vunpack.c.l.b16 %v565
  %v1672 = vunpack.c.h.b16 %v565
  %v1673 = vunpack.c.l.b16 %v566
  %v1674 = vunpack.c.h.b16 %v566
  %v1675 = vunpack.c.l.b16 %v567
  %v1676 = vunpack.c.h.b16 %v567
  %v1677 = vunpack.c.l.b16 %v568
  %v1678 = vunpack.c.h.b16 %v568
  %v1679 = vunpack.c.l.b16 %v569
  %v1680 = vunpack.c.h.b16 %v569
  %v1681 = vunpack.c.l.b16 %v570
  %v1682 = vunpack.c.h.b16 %v570
  %v1683 = vunpack.c.l.b16 %v571
  %v1684 = vunpack.c.h.b16 %v571
  %v1685 = vunpack.c.l.b16 %v572
  %v1686 = vunpack.c.h.b16 %v572
  %v1687 = vunpack.c.l.b16 %v573
  %v1688 = vunpack.c.h.b16 %v573
  %v1689 = vunpack.c.l.b16 %v574
  %v1690 = vunpack.c.h.b16 %v574
  %v1691 = vunpack.c.l.b16 %v575
  %v1692 = vunpack.c.h.b16 %v575
  %v1693 = vunpack.c.l.b16 %v576
  %v1694 = vunpack.c.h.b16 %v576
  %v1695 = vunpack.c.l.b16 %v577
  %v1696 = vunpack.c.h.b16 %v577
  %v1697 = vunpack.c.l.b16 %v578
  %v1698 = vunpack.c.h.b16 %v578
  %v1699 = vunpack.c.l.b16 %v579
  %v1700 = vunpack.c.h.b16 %v579
  %v1701 = vunpack.c.l.b16 %v580
  %v1702 = vunpack.c.h.b16 %v580
  %v1703 = vunpack.c.l.b16 %v581
  %v1704 = vunpack.c.h.b16 %v581
  %v1705 = vunpack.c.l.b16 %v582
  %v1706 = vunpack.c.h.b16 %v582
  %v1707 = vunpack.c.l.b16 %v583
  %v1708 = vunpack.c.h.b16 %v583
  %v1709 = vunpack.c.l.b16 %v584
  %v1710 = vunpack.c.h.b16 %v584
  %v1711 = vunpack.c.l.b16 %v585
  %v1712 = vunpack.c.h.b16 %v585
  %v1713 = vunpack.c.l.b16 %v586
  %v1714 = vunpack.c.h.b16 %v586
  %v1715 = vunpack.c.l.b16 %v587
  %v1716 = vunpack.c.h.b16 %v587
  %v1717 = vunpack.c.l.b16 %v588
  %v1718 = vunpack.c.h.b16 %v588
  %v1719 = vunpack.c.l.b16 %v589
  %v1720 = vunpack.c.h.b16 %v589
  %v1721 = vunpack.c.l.b16 %v590
  %v1722 = vunpack.c.h.b16 %v590
  %v1723 = vunpack.c.l.b16 %v591
  %v1724 = vunpack.c.h.b16 %v591
  %v1725 = vunpack.c.l.b16 %v592
  %v1726 = vunpack.c.h.b16 %v592
  %v1727 = vunpack.c.l.b16 %v593
  %v1728 = vunpack.c.h.b16 %v593
  %v1729 = vunpack.c.l.b16 %v594
  %v1730 = vunpack.c.h.b16 %v594
  %v1731 = vunpack.c.l.b16 %v595
  %v1732 = vunpack.c.h.b16 %v595
  %v1733 = vunpack.c.l.b16 %v596
  %v1734 = vunpack.c.h.b16 %v596
  %v1735 = vunpack.c.l.b16 %v597
  %v1736 = vunpack.c.h.b16 %v597
  %v1737 = vunpack.c.l.b16 %v598
  %v1738 = vunpack.c.h.b16 %v598
  %v1739 = vunpack.c.l.b16 %v599
  %v1740 = vunpack.c.h.b16 %v599
  %v1741 = vunpack.c.l.b16 %v600
  %v1742 = vunpack.c.h.b16 %v600
  %v1743 = vunpack.c.l.b16 %v601
  %v1744 = vunpack.c.h.b16 %v601
  %v1745 = vunpack.c.l.b16 %v602
  %v1746 = vunpack.c.h.b16 %v602
  %v1747 = vunpack.c.l.b16 %v603
  %v1748 = vunpack.c.h.b16 %v603
  %v1749 = vunpack.c.l.b16 %v604
  %v1750 = vunpack.c.h.b16 %v604
  %v1751 = vunpack.c.l.b16 %v605
  %v1752 = vunpack.c.h.b16 %v605
  %v1753 = vunpack.c.l.b16 %v606
  %v1754 = vunpack.c.h.b16 %v606
  %v1755 = vunpack.c.l.b16 %v607
  %v1756 = vunpack.c.h.b16 %v607
  %v1757 = vunpack.c.l.b16 %v608
  %v1758 = vunpack.c.h.b16 %v608
  %v1759 = vunpack.c.l.b16 %v609
  %v1760 = vunpack.c.h.b16 %v609
  %v1761 = vunpack.c.l.b16 %v610
  %v1762 = vunpack.c.h.b16 %v610
  %v1763 = vpack.c.b16 %v999, %v995
  %v1764 = vpack.c.b16 %v1000, %v996
  %v1765 = vpack.c.b16 %v1001, %v997
  %v1766 = vpack.c.b16 %v1002, %v998
  %v1767 = vpack.c.b16 %v1007, %v1003
  %v1768 = vpack.c.b16 %v1008, %v1004
  %v1769 = vpack.c.b16 %v1009, %v1005
  %v1770 = vpack.c.b16 %v1010, %v1006
  %v1771 = vpack.c.b16 %v1015, %v1011
  %v1772 = vpack.c.b16 %v1016, %v1012
  %v1773 = vpack.c.b16 %v1017, %v1013
  %v1774 = vpack.c.b16 %v1018, %v1014
  %v1775 = vpack.c.b16 %v1023, %v1019
  %v1776 = vpack.c.b16 %v1024, %v1020
  %v1777 = vpack.c.b16 %v1025, %v1021
  %v1778 = vpack.c.b16 %v1026, %v1022
  %v1779 = vpack.c.b16 %v1031, %v1027
  %v1780 = vpack.c.b16 %v1032, %v1028
  %v1781 = vpack.c.b16 %v1033, %v1029
  %v1782 = vpack.c.b16 %v1034, %v1030
  %v1783 = vpack.c.b16 %v1039, %v1035
  %v1784 = vpack.c.b16 %v1040, %v1036
  %v1785 = vpack.c.b16 %v1041, %v1037
  %v1786 = vpack.c.b16 %v1042, %v1038
  %v1787 = vpack.c.b16 %v1047, %v1043
  %v1788 = vpack.c.b16 %v1048, %v1044
  %v1789 = vpack.c.b16 %v1049, %v1045
  %v1790 = vpack.c.b16 %v1050, %v1046
  %v1791 = vpack.c.b16 %v1055, %v1051
  %v1792 = vpack.c.b16 %v1056, %v1052
  %v1793 = vpack.c.b16 %v1057, %v1053
  %v1794 = vpack.c.b16 %v1058, %v1054
  %v1795 = vpack.c.b16 %v1063, %v1059
  %v1796 = vpack.c.b16 %v1064, %v1060
  %v1797 = vpack.c.b16 %v1065, %v1061
  %v1798 = vpack.c.b16 %v1066, %v1062
  %v1799 = vpack.c.b16 %v1071, %v1067
  %v1800 = vpack.c.b16 %v1072, %v1068
  %v1801 = vpack.c.b16 %v1073, %v1069
  %v1802 = vpack.c.b16 %v1074, %v1070
  %v1803 = vpack.c.b16 %v1079, %v1075
  %v1804 = vpack.c.b16 %v1080, %v1076
  %v1805 = vpack.c.b16 %v1081, %v1077
  %v1806 = vpack.c.b16 %v1082, %v1078
  %v1807 = vpack.c.b16 %v1087, %v1083
  %v1808 = vpack.c.b16 %v1088, %v1084
  %v1809 = vpack.c.b16 %v1089, %v1085
  %v1810 = vpack.c.b16 %v1090, %v1086
  %v1811 = vpack.c.b16 %v1095, %v1091
  %v1812 = vpack.c.b16 %v1096, %v1092
  %v1813 = vpack.c.b16 %v1097, %v1093
  %v1814 = vpack.c.b16 %v1098, %v1094
  %v1815 = vpack.c.b16 %v1103, %v1099
  %v1816 = vpack.c.b16 %v1104, %v1100
  %v1817 = vpack.c.b16 %v1105, %v1101
  %v1818 = vpack.c.b16 %v1106, %v1102
  %v1819 = vpack.c.b16 %v1111, %v1107
  %v1820 = vpack.c.b16 %v1112, %v1108
  %v1821 = vpack.c.b16 %v1113, %v1109
  %v1822 = vpack.c.b16 %v1114, %v1110
  %v1823 = vpack.c.b16 %v1119, %v1115
  %v1824 = vpack.c.b16 %v1120, %v1116
  %v1825 = vpack.c.b16 %v1121, %v1117
  %v1826 = vpack.c.b16 %v1122, %v1118
  %v1827 = vpack.c.b16 %v1127, %v1123
  %v1828 = vpack.c.b16 %v1128, %v1124
  %v1829 = vpack.c.b16 %v1129, %v1125
  %v1830 = vpack.c.b16 %v1130, %v1126
  %v1831 = vpack.c.b16 %v1135, %v1131
  %v1832 = vpack.c.b16 %v1136, %v1132
  %v1833 = vpack.c.b16 %v1137, %v1133
  %v1834 = vpack.c.b16 %v1138, %v1134
  %v1835 = vpack.c.b16 %v1143, %v1139
  %v1836 = vpack.c.b16 %v1144, %v1140
  %v1837 = vpack.c.b16 %v1145, %v1141
  %v1838 = vpack.c.b16 %v1146, %v1142
  %v1839 = vpack.c.b16 %v1151, %v1147
  %v1840 = vpack.c.b16 %v1152, %v1148
  %v1841 = vpack.c.b16 %v1153, %v1149
  %v1842 = vpack.c.b16 %v1154, %v1150
  %v1843 = vpack.c.b16 %v1159, %v1155
  %v1844 = vpack.c.b16 %v1160, %v1156
  %v1845 = vpack.c.b16 %v1161, %v1157
  %v1846 = vpack.c.b16 %v1162, %v1158
  %v1847 = vpack.c.b16 %v1167, %v1163
  %v1848 = vpack.c.b16 %v1168, %v1164
  %v1849 = vpack.c.b16 %v1169, %v1165
  %v1850 = vpack.c.b16 %v1170, %v1166
  %v1851 = vpack.c.b16 %v1175, %v1171
  %v1852 = vpack.c.b16 %v1176, %v1172
  %v1853 = vpack.c.b16 %v1177, %v1173
  %v1854 = vpack.c.b16 %v1178, %v1174
  %v1855 = vpack.c.b16 %v1183, %v1179
  %v1856 = vpack.c.b16 %v1184, %v1180
  %v1857 = vpack.c.b16 %v1185, %v1181
  %v1858 = vpack.c.b16 %v1186, %v1182
  %v1859 = vpack.c.b16 %v1191, %v1187
  %v1860 = vpack.c.b16 %v1192, %v1188
  %v1861 = vpack.c.b16 %v1193, %v1189
  %v1862 = vpack.c.b16 %v1194, %v1190
  %v1863 = vpack.c.b16 %v1199, %v1195
  %v1864 = vpack.c.b16 %v1200, %v1196
  %v1865 = vpack.c.b16 %v1201, %v1197
  %v1866 = vpack.c.b16 %v1202, %v1198
  %v1867 = vpack.c.b16 %v1207, %v1203
  %v1868 = vpack.c.b16 %v1208, %v1204
  %v1869 = vpack.c.b16 %v1209, %v1205
  %v1870 = vpack.c.b16 %v1210, %v1206
  %v1871 = vpack.c.b16 %v1215, %v1211
  %v1872 = vpack.c.b16 %v1216, %v1212
  %v1873 = vpack.c.b16 %v1217, %v1213
  %v1874 = vpack.c.b16 %v1218, %v1214
  %v1875 = vpack.c.b16 %v1223, %v1219
  %v1876 = vpack.c.b16 %v1224, %v1220
  %v1877 = vpack.c.b16 %v1225, %v1221
  %v1878 = vpack.c.b16 %v1226, %v1222
  %v1879 = vpack.c.b16 %v1231, %v1227
  %v1880 = vpack.c.b16 %v1232, %v1228
  %v1881 = vpack.c.b16 %v1233, %v1229
  %v1882 = vpack.c.b16 %v1234, %v1230
  %v1883 = vpack.c.b16 %v1239, %v1235
  %v1884 = vpack.c.b16 %v1240, %v1236
  %v1885 = vpack.c.b16 %v1241, %v1237
  %v1886 = vpack.c.b16 %v1242, %v1238
  %v1887 = vpack.c.b16 %v1247, %v1243
  %v1888 = vpack.c.b16 %v1248, %v1244
  %v1889 = vpack.c.b16 %v1249, %v1245
  %v1890 = vpack.c.b16 %v1250, %v1246
  %v1891 = vpack.c.b16 %v1255, %v1251
  %v1892 = vpack.c.b16 %v1256, %v1252
  %v1893 = vpack.c.b16 %v1257, %v1253
  %v1894 = vpack.c.b16 %v1258, %v1254
  %v1895 = vpack.c.b16 %v1263, %v1259
  %v1896 = vpack.c.b16 %v1264, %v1260
  %v1897 = vpack.c.b16 %v1265, %v1261
  %v1898 = vpack.c.b16 %v1266, %v1262
  %v1899 = vpack.c.b16 %v1271, %v1267
  %v1900 = vpack.c.b16 %v1272, %v1268
  %v1901 = vpack.c.b16 %v1273, %v1269
  %v1902 = vpack.c.b16 %v1274, %v1270
  %v1903 = vpack.c.b16 %v1279, %v1275
  %v1904 = vpack.c.b16 %v1280, %v1276
  %v1905 = vpack.c.b16 %v1281, %v1277
  %v1906 = vpack.c.b16 %v1282, %v1278
  %v1907 = vpack.c.b16 %v1287, %v1283
  %v1908 = vpack.c.b16 %v1288, %v1284
  %v1909 = vpack.c.b16 %v1289, %v1285
  %v1910 = vpack.c.b16 %v1290, %v1286
  %v1911 = vpack.c.b16 %v1295, %v1291
  %v1912 = vpack.c.b16 %v1296, %v1292
  %v1913 = vpack.c.b16 %v1297, %v1293
  %v1914 = vpack.c.b16 %v1298, %v1294
  %v1915 = vpack.c.b16 %v1303, %v1299
  %v1916 = vpack.c.b16 %v1304, %v1300
  %v1917 = vpack.c.b16 %v1305, %v1301
  %v1918 = vpack.c.b16 %v1306, %v1302
  %v1919 = vpack.c.b16 %v1311, %v1307
  %v1920 = vpack.c.b16 %v1312, %v1308
  %v1921 = vpack.c.b16 %v1313, %v1309
  %v1922 = vpack.c.b16 %v1314, %v1310
  %v1923 = vpack.c.b16 %v1319, %v1315
  %v1924 = vpack.c.b16 %v1320, %v1316
  %v1925 = vpack.c.b16 %v1321, %v1317
  %v1926 = vpack.c.b16 %v1322, %v1318
  %v1927 = vpack.c.b16 %v1327, %v1323
  %v1928 = vpack.c.b16 %v1328, %v1324
  %v1929 = vpack.c.b16 %v1329, %v1325
  %v1930 = vpack.c.b16 %v1330, %v1326
  %v1931 = vpack.c.b16 %v1335, %v1331
  %v1932 = vpack.c.b16 %v1336, %v1332
  %v1933 = vpack.c.b16 %v1337, %v1333
  %v1934 = vpack.c.b16 %v1338, %v1334
  %v1935 = vpack.c.b16 %v1343, %v1339
  %v1936 = vpack.c.b16 %v1344, %v1340
  %v1937 = vpack.c.b16 %v1345, %v1341
  %v1938 = vpack.c.b16 %v1346, %v1342
  %v1939 = vpack.c.b16 %v1351, %v1347
  %v1940 = vpack.c.b16 %v1352, %v1348
  %v1941 = vpack.c.b16 %v1353, %v1349
  %v1942 = vpack.c.b16 %v1354, %v1350
  %v1943 = vpack.c.b16 %v1359, %v1355
  %v1944 = vpack.c.b16 %v1360, %v1356
  %v1945 = vpack.c.b16 %v1361, %v1357
  %v1946 = vpack.c.b16 %v1362, %v1358
  %v1947 = vpack.c.b16 %v1367, %v1363
  %v1948 = vpack.c.b16 %v1368, %v1364
  %v1949 = vpack.c.b16 %v1369, %v1365
  %v1950 = vpack.c.b16 %v1370, %v1366
  %v1951 = vpack.c.b16 %v1375, %v1371
  %v1952 = vpack.c.b16 %v1376, %v1372
  %v1953 = vpack.c.b16 %v1377, %v1373
  %v1954 = vpack.c.b16 %v1378, %v1374
  %v1955 = vpack.c.b16 %v1383, %v1379
  %v1956 = vpack.c.b16 %v1384, %v1380
  %v1957 = vpack.c.b16 %v1385, %v1381
  %v1958 = vpack.c.b16 %v1386, %v1382
  %v1959 = vpack.c.b16 %v1391, %v1387
  %v1960 = vpack.c.b16 %v1392, %v1388
  %v1961 = vpack.c.b16 %v1393, %v1389
  %v1962 = vpack.c.b16 %v1394, %v1390
  %v1963 = vpack.c.b16 %v1399, %v1395
  %v1964 = vpack.c.b16 %v1400, %v1396
  %v1965 = vpack.c.b16 %v1401, %v1397
  %v1966 = vpack.c.b16 %v1402, %v1398
  %v1967 = vpack.c.b16 %v1407, %v1403
  %v1968 = vpack.c.b16 %v1408, %v1404
  %v1969 = vpack.c.b16 %v1409, %v1405
  %v1970 = vpack.c.b16 %v1410, %v1406
  %v1971 = vpack.c.b16 %v1415, %v1411
  %v1972 = vpack.c.b16 %v1416, %v1412
  %v1973 = vpack.c.b16 %v1417, %v1413
  %v1974 = vpack.c.b16 %v1418, %v1414
  %v1975 = vpack.c.b16 %v1423, %v1419
  %v1976 = vpack.c.b16 %v1424, %v1420
  %v1977 = vpack.c.b16 %v1425, %v1421
  %v1978 = vpack.c.b16 %v1426, %v1422
  %v1979 = vpack.c.b16 %v1431, %v1427
  %v1980 = vpack.c.b16 %v1432, %v1428
  %v1981 = vpack.c.b16 %v1433, %v1429
  %v1982 = vpack.c.b16 %v1434, %v1430
  %v1983 = vpack.c.b16 %v1439, %v1435
  %v1984 = vpack.c.b16 %v1440, %v1436
  %v1985 = vpack.c.b16 %v1441, %v1437
  %v1986 = vpack.c.b16 %v1442, %v1438
  %v1987 = vpack.c.b16 %v1447, %v1443
  %v1988 = vpack.c.b16 %v1448, %v1444
  %v1989 = vpack.c.b16 %v1449, %v1445
  %v1990 = vpack.c.b16 %v1450, %v1446
  %v1991 = vpack.c.b16 %v1455, %v1451
  %v1992 = vpack.c.b16 %v1456, %v1452
  %v1993 = vpack.c.b16 %v1457, %v1453
  %v1994 = vpack.c.b16 %v1458, %v1454
  %v1995 = vpack.c.b16 %v1463, %v1459
  %v1996 = vpack.c.b16 %v1464, %v1460
  %v1997 = vpack.c.b16 %v1465, %v1461
  %v1998 = vpack.c.b16 %v1466, %v1462
  %v1999 = vpack.c.b16 %v1471, %v1467
  %v2000 = vpack.c.b16 %v1472, %v1468
  %v2001 = vpack.c.b16 %v1473, %v1469
  %v2002 = vpack.c.b16 %v1474, %v1470
  %v2003 = vpack.c.b16 %v1479, %v1475
  %v2004 = vpack.c.b16 %v1480, %v1476
  %v2005 = vpack.c.b16 %v1481, %v1477
  %v2006 = vpack.c.b16 %v1482, %v1478
  %v2007 = vpack.c.b16 %v1487, %v1483
  %v2008 = vpack.c.b16 %v1488, %v1484
  %v2009 = vpack.c.b16 %v1489, %v1485
  %v2010 = vpack.c.b16 %v1490, %v1486
  %v2011 = vpack.c.b16 %v1495, %v1491
  %v2012 = vpack.c.b16 %v1496, %v1492
  %v2013 = vpack.c.b16 %v1497, %v1493
  %v2014 = vpack.c.b16 %v1498, %v1494
  %v2015 = vpack.c.b16 %v1503, %v1499
  %v2016 = vpack.c.b16 %v1504, %v1500
  %v2017 = vpack.c.b16 %v1505, %v1501
  %v2018 = vpack.c.b16 %v1506, %v1502
  %v2019 = vpack.c.b16 %v1511, %v1507
  %v2020 = vpack.c.b16 %v1512, %v1508
  %v2021 = vpack.c.b16 %v1513, %v1509
  %v2022 = vpack.c.b16 %v1514, %v1510
  %v2023 = vpack.c.b16 %v1519, %v1515
  %v2024 = vpack.c.b16 %v1520, %v1516
  %v2025 = vpack.c.b16 %v1521, %v1517
  %v2026 = vpack.c.b16 %v1522, %v1518
  %v2027 = vpack.c.b16 %v1527, %v1523
  %v2028 = vpack.c.b16 %v1528, %v1524
  %v2029 = vpack.c.b16 %v1529, %v1525
  %v2030 = vpack.c.b16 %v1530, %v1526
  %v2031 = vpack.c.b16 %v1535, %v1531
  %v2032 = vpack.c.b16 %v1536, %v1532
  %v2033 = vpack.c.b16 %v1537, %v1533
  %v2034 = vpack.c.b16 %v1538, %v1534
  %v2035 = vpack.c.b16 %v1543, %v1539
  %v2036 = vpack.c.b16 %v1544, %v1540
  %v2037 = vpack.c.b16 %v1545, %v1541
  %v2038 = vpack.c.b16 %v1546, %v1542
  %v2039 = vpack.c.b16 %v1551, %v1547
  %v2040 = vpack.c.b16 %v1552, %v1548
  %v2041 = vpack.c.b16 %v1553, %v1549
  %v2042 = vpack.c.b16 %v1554, %v1550
  %v2043 = vpack.c.b16 %v1559, %v1555
  %v2044 = vpack.c.b16 %v1560, %v1556
  %v2045 = vpack.c.b16 %v1561, %v1557
  %v2046 = vpack.c.b16 %v1562, %v1558
  %v2047 = vpack.c.b16 %v1567, %v1563
  %v2048 = vpack.c.b16 %v1568, %v1564
  %v2049 = vpack.c.b16 %v1569, %v1565
  %v2050 = vpack.c.b16 %v1570, %v1566
  %v2051 = vpack.c.b16 %v1575, %v1571
  %v2052 = vpack.c.b16 %v1576, %v1572
  %v2053 = vpack.c.b16 %v1577, %v1573
  %v2054 = vpack.c.b16 %v1578, %v1574
  %v2055 = vpack.c.b16 %v1583, %v1579
  %v2056 = vpack.c.b16 %v1584, %v1580
  %v2057 = vpack.c.b16 %v1585, %v1581
  %v2058 = vpack.c.b16 %v1586, %v1582
  %v2059 = vpack.c.b16 %v1591, %v1587
  %v2060 = vpack.c.b16 %v1592, %v1588
  %v2061 = vpack.c.b16 %v1593, %v1589
  %v2062 = vpack.c.b16 %v1594, %v1590
  %v2063 = vpack.c.b16 %v1599, %v1595
  %v2064 = vpack.c.b16 %v1600, %v1596
  %v2065 = vpack.c.b16 %v1601, %v1597
  %v2066 = vpack.c.b16 %v1602, %v1598
  %v2067 = vpack.c.b16 %v1607, %v1603
  %v2068 = vpack.c.b16 %v1608, %v1604
  %v2069 = vpack.c.b16 %v1609, %v1605
  %v2070 = vpack.c.b16 %v1610, %v1606
  %v2071 = vpack.c.b16 %v1615, %v1611
  %v2072 = vpack.c.b16 %v1616, %v1612
  %v2073 = vpack.c.b16 %v1617, %v1613
  %v2074 = vpack.c.b16 %v1618, %v1614
  %v2075 = vpack.c.b16 %v1623, %v1619
  %v2076 = vpack.c.b16 %v1624, %v1620
  %v2077 = vpack.c.b16 %v1625, %v1621
  %v2078 = vpack.c.b16 %v1626, %v1622
  %v2079 = vpack.c.b16 %v1631, %v1627
  %v2080 = vpack.c.b16 %v1632, %v1628
  %v2081 = vpack.c.b16 %v1633, %v1629
  %v2082 = vpack.c.b16 %v1634, %v1630
  %v2083 = vpack.c.b16 %v1639, %v1635
  %v2084 = vpack.c.b16 %v1640, %v1636
  %v2085 = vpack.c.b16 %v1641, %v1637
  %v2086 = vpack.c.b16 %v1642, %v1638
  %v2087 = vpack.c.b16 %v1647, %v1643
  %v2088 = vpack.c.b16 %v1648, %v1644
  %v2089 = vpack.c.b16 %v1649, %v1645
  %v2090 = vpack.c.b16 %v1650, %v1646
  %v2091 = vpack.c.b16 %v1655, %v1651
  %v2092 = vpack.c.b16 %v1656, %v1652
  %v2093 = vpack.c.b16 %v1657, %v1653
  %v2094 = vpack.c.b16 %v1658, %v1654
  %v2095 = vpack.c.b16 %v1663, %v1659
  %v2096 = vpack.c.b16 %v1664, %v1660
  %v2097 = vpack.c.b16 %v1665, %v1661
  %v2098 = vpack.c.b16 %v1666, %v1662
  %v2099 = vpack.c.b16 %v1671, %v1667
  %v2100 = vpack.c.b16 %v1672, %v1668
  %v2101 = vpack.c.b16 %v1673, %v1669
  %v2102 = vpack.c.b16 %v1674, %v1670
  %v2103 = vpack.c.b16 %v1679, %v1675
  %v2104 = vpack.c.b16 %v1680, %v1676
  %v2105 = vpack.c.b16 %v1681, %v1677
  %v2106 = vpack.c.b16 %v1682, %v1678
  %v2107 = vpack.c.b16 %v1687, %v1683
  %v2108 = vpack.c.b16 %v1688, %v1684
  %v2109 = vpack.c.b16 %v1689, %v1685
  %v2110 = vpack.c.b16 %v1690, %v1686
  %v2111 = vpack.c.b16 %v1695, %v1691
  %v2112 = vpack.c.b16 %v1696, %v1692
  %v2113 = vpack.c.b16 %v1697, %v1693
  %v2114 = vpack.c.b16 %v1698, %v1694
  %v2115 = vpack.c.b16 %v1703, %v1699
  %v2116 = vpack.c.b16 %v1704, %v1700
  %v2117 = vpack.c.b16 %v1705, %v1701
  %v2118 = vpack.c.b16 %v1706, %v1702
  %v2119 = vpack.c.b16 %v1711, %v1707
  %v2120 = vpack.c.b16 %v1712, %v1708
  %v2121 = vpack.c.b16 %v1713, %v1709
  %v2122 = vpack.c.b16 %v1714, %v1710
  %v2123 = vpack.c.b16 %v1719, %v1715
  %v2124 = vpack.c.b16 %v1720, %v1716
  %v2125 = vpack.c.b16 %v1721, %v1717
  %v2126 = vpack.c.b16 %v1722, %v1718
  %v2127 = vpack.c.b16 %v1727, %v1723
  %v2128 = vpack.c.b16 %v1728, %v1724
  %v2129 = vpack.c.b16 %v1729, %v1725
  %v2130 = vpack.c.b16 %v1730, %v1726
  %v2131 = vpack.c.b16 %v1735, %v1731
  %v2132 = vpack.c.b16 %v1736, %v1732
  %v2133 = vpack.c.b16 %v1737, %v1733
  %v2134 = vpack.c.b16 %v1738, %v1734
  %v2135 = vpack.c.b16 %v1743, %v1739
  %v2136 = vpack.c.b16 %v1744, %v1740
  %v2137 = vpack.c.b16 %v1745, %v1741
  %v2138 = vpack.c.b16 %v1746, %v1742
  %v2139 = vpack.c.b16 %v1751, %v1747
  %v2140 = vpack.c.b16 %v1752, %v1748
  %v2141 = vpack.c.b16 %v1753, %v1749
  %v2142 = vpack.c.b16 %v1754, %v1750
  %v2143 = vpack.c.b16 %v1759, %v1755
  %v2144 = vpack.c.b16 %v1760, %v1756
  %v2145 = vpack.c.b16 %v1761, %v1757
  %v2146 = vpack.c.b16 %v1762, %v1758
  %2531 = vmatprep.subr.bf16.mxu0 %v1792
  %2532 = vmatpush1.bf16.msra.mxu0 %v1791
  %2533 = vmatprep.subr.bf16.mxu0 %v1788
  %2534 = vmatpush1.bf16.msra.mxu0 %v1787
  %2535 = vmatprep.subr.bf16.mxu0 %v1784
  %2536 = vmatpush1.bf16.msra.mxu0 %v1783
  %2537 = vmatprep.subr.bf16.mxu0 %v1780
  %2538 = vmatpush1.bf16.msra.mxu0 %v1779
  %2539 = vmatprep.subr.bf16.mxu0 %v1776
  %2540 = vmatpush1.bf16.msra.mxu0 %v1775
  %2541 = vmatprep.subr.bf16.mxu0 %v1772
  %2542 = vmatpush1.bf16.msra.mxu0 %v1771
  %2543 = vmatprep.subr.bf16.mxu0 %v1768
  %2544 = vmatpush1.bf16.msra.mxu0 %v1767
  %2545 = vmatprep.subr.bf16.mxu0 %v1764
  %2546 = vmatpush1.bf16.msra.mxu0 %v1763
  %2547 = vmatprep.subr.bf16.mxu0 %v1824
  %2548 = vmatpush2.bf16.msra.mxu0 %v1823
  %2549 = vmatprep.subr.bf16.mxu0 %v1820
  %2550 = vmatpush2.bf16.msra.mxu0 %v1819
  %2551 = vmatprep.subr.bf16.mxu0 %v1816
  %2552 = vmatpush2.bf16.msra.mxu0 %v1815
  %2553 = vmatprep.subr.bf16.mxu0 %v1812
  %2554 = vmatpush2.bf16.msra.mxu0 %v1811
  %2555 = vmatprep.subr.bf16.mxu0 %v1808
  %2556 = vmatpush2.bf16.msra.mxu0 %v1807
  %2557 = vmatprep.subr.bf16.mxu0 %v1804
  %2558 = vmatpush2.bf16.msra.mxu0 %v1803
  %2559 = vmatprep.subr.bf16.mxu0 %v1800
  %2560 = vmatpush2.bf16.msra.mxu0 %v1799
  %2561 = vmatprep.subr.bf16.mxu0 %v1796
  %2562 = vmatpush2.bf16.msra.mxu0 %v1795
  %2563 = vmatprep.mubr.bf16.mxu0 %v216
  %2564 = vmatmul.mubr.bf16.gmra.mxu0 %v215
  %v2565 = vpop.f32.mrf.mxu0
  %v2566 = vadd.f32 0.0, %v2565
  %v2567 = vpop.f32.mrf.mxu0
  %v2568 = vadd.f32 0.0, %v2567
  %v2569 = vpop.f32.mrf.mxu0
  %v2570 = vadd.f32 0.0, %v2569
  %v2571 = vpop.f32.mrf.mxu0
  %v2572 = vadd.f32 0.0, %v2571
  %2573 = vdwg.mxu0
  %2574 = vmatprep.subr.bf16.mxu0 %v1856
  %2575 = vmatpush1.bf16.msra.mxu0 %v1855
  %2576 = vmatprep.subr.bf16.mxu0 %v1852
  %2577 = vmatpush1.bf16.msra.mxu0 %v1851
  %2578 = vmatprep.subr.bf16.mxu0 %v1848
  %2579 = vmatpush1.bf16.msra.mxu0 %v1847
  %2580 = vmatprep.subr.bf16.mxu0 %v1844
  %2581 = vmatpush1.bf16.msra.mxu0 %v1843
  %2582 = vmatprep.subr.bf16.mxu0 %v1840
  %2583 = vmatpush1.bf16.msra.mxu0 %v1839
  %2584 = vmatprep.subr.bf16.mxu0 %v1836
  %2585 = vmatpush1.bf16.msra.mxu0 %v1835
  %2586 = vmatprep.subr.bf16.mxu0 %v1832
  %2587 = vmatpush1.bf16.msra.mxu0 %v1831
  %2588 = vmatprep.subr.bf16.mxu0 %v1828
  %2589 = vmatpush1.bf16.msra.mxu0 %v1827
  %2590 = vmatprep.subr.bf16.mxu0 %v1888
  %2591 = vmatpush2.bf16.msra.mxu0 %v1887
  %2592 = vmatprep.subr.bf16.mxu0 %v1884
  %2593 = vmatpush2.bf16.msra.mxu0 %v1883
  %2594 = vmatprep.subr.bf16.mxu0 %v1880
  %2595 = vmatpush2.bf16.msra.mxu0 %v1879
  %2596 = vmatprep.subr.bf16.mxu0 %v1876
  %2597 = vmatpush2.bf16.msra.mxu0 %v1875
  %2598 = vmatprep.subr.bf16.mxu0 %v1872
  %2599 = vmatpush2.bf16.msra.mxu0 %v1871
  %2600 = vmatprep.subr.bf16.mxu0 %v1868
  %2601 = vmatpush2.bf16.msra.mxu0 %v1867
  %2602 = vmatprep.subr.bf16.mxu0 %v1864
  %2603 = vmatpush2.bf16.msra.mxu0 %v1863
  %2604 = vmatprep.subr.bf16.mxu0 %v1860
  %2605 = vmatpush2.bf16.msra.mxu0 %v1859
  %2606 = vmatprep.mubr.bf16.mxu0 %v218
  %2607 = vmatmul.mubr.bf16.gmra.mxu0 %v217
  %v2608 = vpop.f32.mrf.mxu0
  %v2609 = vadd.f32 %v2566, %v2608
  %v2610 = vpop.f32.mrf.mxu0
  %v2611 = vadd.f32 %v2568, %v2610
  %v2612 = vpop.f32.mrf.mxu0
  %v2613 = vadd.f32 %v2570, %v2612
  %v2614 = vpop.f32.mrf.mxu0
  %v2615 = vadd.f32 %v2572, %v2614
  %2616 = vdwg.mxu0
  %2617 = vmatprep.subr.bf16.mxu0 %v1920
  %2618 = vmatpush1.bf16.msra.mxu0 %v1919
  %2619 = vmatprep.subr.bf16.mxu0 %v1916
  %2620 = vmatpush1.bf16.msra.mxu0 %v1915
  %2621 = vmatprep.subr.bf16.mxu0 %v1912
  %2622 = vmatpush1.bf16.msra.mxu0 %v1911
  %2623 = vmatprep.subr.bf16.mxu0 %v1908
  %2624 = vmatpush1.bf16.msra.mxu0 %v1907
  %2625 = vmatprep.subr.bf16.mxu0 %v1904
  %2626 = vmatpush1.bf16.msra.mxu0 %v1903
  %2627 = vmatprep.subr.bf16.mxu0 %v1900
  %2628 = vmatpush1.bf16.msra.mxu0 %v1899
  %2629 = vmatprep.subr.bf16.mxu0 %v1896
  %2630 = vmatpush1.bf16.msra.mxu0 %v1895
  %2631 = vmatprep.subr.bf16.mxu0 %v1892
  %2632 = vmatpush1.bf16.msra.mxu0 %v1891
  %2633 = vmatprep.subr.bf16.mxu0 %v1952
  %2634 = vmatpush2.bf16.msra.mxu0 %v1951
  %2635 = vmatprep.subr.bf16.mxu0 %v1948
  %2636 = vmatpush2.bf16.msra.mxu0 %v1947
  %2637 = vmatprep.subr.bf16.mxu0 %v1944
  %2638 = vmatpush2.bf16.msra.mxu0 %v1943
  %2639 = vmatprep.subr.bf16.mxu0 %v1940
  %2640 = vmatpush2.bf16.msra.mxu0 %v1939
  %2641 = vmatprep.subr.bf16.mxu0 %v1936
  %2642 = vmatpush2.bf16.msra.mxu0 %v1935
  %2643 = vmatprep.subr.bf16.mxu0 %v1932
  %2644 = vmatpush2.bf16.msra.mxu0 %v1931
  %2645 = vmatprep.subr.bf16.mxu0 %v1928
  %2646 = vmatpush2.bf16.msra.mxu0 %v1927
  %2647 = vmatprep.subr.bf16.mxu0 %v1924
  %2648 = vmatpush2.bf16.msra.mxu0 %v1923
  %2649 = vmatprep.mubr.bf16.mxu0 %v220
  %2650 = vmatmul.mubr.bf16.gmra.mxu0 %v219
  %v2651 = vpop.f32.mrf.mxu0
  %v2652 = vadd.f32 %v2609, %v2651
  %v2653 = vpop.f32.mrf.mxu0
  %v2654 = vadd.f32 %v2611, %v2653
  %v2655 = vpop.f32.mrf.mxu0
  %v2656 = vadd.f32 %v2613, %v2655
  %v2657 = vpop.f32.mrf.mxu0
  %v2658 = vadd.f32 %v2615, %v2657
  %2659 = vdwg.mxu0
  %2660 = vmatprep.subr.bf16.mxu0 %v1984
  %2661 = vmatpush1.bf16.msra.mxu0 %v1983
  %2662 = vmatprep.subr.bf16.mxu0 %v1980
  %2663 = vmatpush1.bf16.msra.mxu0 %v1979
  %2664 = vmatprep.subr.bf16.mxu0 %v1976
  %2665 = vmatpush1.bf16.msra.mxu0 %v1975
  %2666 = vmatprep.subr.bf16.mxu0 %v1972
  %2667 = vmatpush1.bf16.msra.mxu0 %v1971
  %2668 = vmatprep.subr.bf16.mxu0 %v1968
  %2669 = vmatpush1.bf16.msra.mxu0 %v1967
  %2670 = vmatprep.subr.bf16.mxu0 %v1964
  %2671 = vmatpush1.bf16.msra.mxu0 %v1963
  %2672 = vmatprep.subr.bf16.mxu0 %v1960
  %2673 = vmatpush1.bf16.msra.mxu0 %v1959
  %2674 = vmatprep.subr.bf16.mxu0 %v1956
  %2675 = vmatpush1.bf16.msra.mxu0 %v1955
  %2676 = vmatprep.subr.bf16.mxu0 %v2016
  %2677 = vmatpush2.bf16.msra.mxu0 %v2015
  %2678 = vmatprep.subr.bf16.mxu0 %v2012
  %2679 = vmatpush2.bf16.msra.mxu0 %v2011
  %2680 = vmatprep.subr.bf16.mxu0 %v2008
  %2681 = vmatpush2.bf16.msra.mxu0 %v2007
  %2682 = vmatprep.subr.bf16.mxu0 %v2004
  %2683 = vmatpush2.bf16.msra.mxu0 %v2003
  %2684 = vmatprep.subr.bf16.mxu0 %v2000
  %2685 = vmatpush2.bf16.msra.mxu0 %v1999
  %2686 = vmatprep.subr.bf16.mxu0 %v1996
  %2687 = vmatpush2.bf16.msra.mxu0 %v1995
  %2688 = vmatprep.subr.bf16.mxu0 %v1992
  %2689 = vmatpush2.bf16.msra.mxu0 %v1991
  %2690 = vmatprep.subr.bf16.mxu0 %v1988
  %2691 = vmatpush2.bf16.msra.mxu0 %v1987
  %2692 = vmatprep.mubr.bf16.mxu0 %v222
  %2693 = vmatmul.mubr.bf16.gmra.mxu0 %v221
  %v2694 = vpop.f32.mrf.mxu0
  %v2695 = vadd.f32 %v2652, %v2694
  %v2696 = vpop.f32.mrf.mxu0
  %v2697 = vadd.f32 %v2654, %v2696
  %v2698 = vpop.f32.mrf.mxu0
  %v2699 = vadd.f32 %v2656, %v2698
  %v2700 = vpop.f32.mrf.mxu0
  %v2701 = vadd.f32 %v2658, %v2700
  %2702 = vdwg.mxu0
  %2703 = vmatprep.subr.bf16.mxu0 %v2048
  %2704 = vmatpush1.bf16.msra.mxu0 %v2047
  %2705 = vmatprep.subr.bf16.mxu0 %v2044
  %2706 = vmatpush1.bf16.msra.mxu0 %v2043
  %2707 = vmatprep.subr.bf16.mxu0 %v2040
  %2708 = vmatpush1.bf16.msra.mxu0 %v2039
  %2709 = vmatprep.subr.bf16.mxu0 %v2036
  %2710 = vmatpush1.bf16.msra.mxu0 %v2035
  %2711 = vmatprep.subr.bf16.mxu0 %v2032
  %2712 = vmatpush1.bf16.msra.mxu0 %v2031
  %2713 = vmatprep.subr.bf16.mxu0 %v2028
  %2714 = vmatpush1.bf16.msra.mxu0 %v2027
  %2715 = vmatprep.subr.bf16.mxu0 %v2024
  %2716 = vmatpush1.bf16.msra.mxu0 %v2023
  %2717 = vmatprep.subr.bf16.mxu0 %v2020
  %2718 = vmatpush1.bf16.msra.mxu0 %v2019
  %2719 = vmatprep.subr.bf16.mxu0 %v2080
  %2720 = vmatpush2.bf16.msra.mxu0 %v2079
  %2721 = vmatprep.subr.bf16.mxu0 %v2076
  %2722 = vmatpush2.bf16.msra.mxu0 %v2075
  %2723 = vmatprep.subr.bf16.mxu0 %v2072
  %2724 = vmatpush2.bf16.msra.mxu0 %v2071
  %2725 = vmatprep.subr.bf16.mxu0 %v2068
  %2726 = vmatpush2.bf16.msra.mxu0 %v2067
  %2727 = vmatprep.subr.bf16.mxu0 %v2064
  %2728 = vmatpush2.bf16.msra.mxu0 %v2063
  %2729 = vmatprep.subr.bf16.mxu0 %v2060
  %2730 = vmatpush2.bf16.msra.mxu0 %v2059
  %2731 = vmatprep.subr.bf16.mxu0 %v2056
  %2732 = vmatpush2.bf16.msra.mxu0 %v2055
  %2733 = vmatprep.subr.bf16.mxu0 %v2052
  %2734 = vmatpush2.bf16.msra.mxu0 %v2051
  %2735 = vmatprep.mubr.bf16.mxu0 %v224
  %2736 = vmatmul.mubr.bf16.gmra.mxu0 %v223
  %v2737 = vpop.f32.mrf.mxu0
  %v2738 = vadd.f32 %v2695, %v2737
  %v2739 = vpop.f32.mrf.mxu0
  %v2740 = vadd.f32 %v2697, %v2739
  %v2741 = vpop.f32.mrf.mxu0
  %v2742 = vadd.f32 %v2699, %v2741
  %v2743 = vpop.f32.mrf.mxu0
  %v2744 = vadd.f32 %v2701, %v2743
  %2745 = vdwg.mxu0
  %2746 = vmatprep.subr.bf16.mxu0 %v2112
  %2747 = vmatpush1.bf16.msra.mxu0 %v2111
  %2748 = vmatprep.subr.bf16.mxu0 %v2108
  %2749 = vmatpush1.bf16.msra.mxu0 %v2107
  %2750 = vmatprep.subr.bf16.mxu0 %v2104
  %2751 = vmatpush1.bf16.msra.mxu0 %v2103
  %2752 = vmatprep.subr.bf16.mxu0 %v2100
  %2753 = vmatpush1.bf16.msra.mxu0 %v2099
  %2754 = vmatprep.subr.bf16.mxu0 %v2096
  %2755 = vmatpush1.bf16.msra.mxu0 %v2095
  %2756 = vmatprep.subr.bf16.mxu0 %v2092
  %2757 = vmatpush1.bf16.msra.mxu0 %v2091
  %2758 = vmatprep.subr.bf16.mxu0 %v2088
  %2759 = vmatpush1.bf16.msra.mxu0 %v2087
  %2760 = vmatprep.subr.bf16.mxu0 %v2084
  %2761 = vmatpush1.bf16.msra.mxu0 %v2083
  %2762 = vmatprep.subr.bf16.mxu0 %v2144
  %2763 = vmatpush2.bf16.msra.mxu0 %v2143
  %2764 = vmatprep.subr.bf16.mxu0 %v2140
  %2765 = vmatpush2.bf16.msra.mxu0 %v2139
  %2766 = vmatprep.subr.bf16.mxu0 %v2136
  %2767 = vmatpush2.bf16.msra.mxu0 %v2135
  %2768 = vmatprep.subr.bf16.mxu0 %v2132
  %2769 = vmatpush2.bf16.msra.mxu0 %v2131
  %2770 = vmatprep.subr.bf16.mxu0 %v2128
  %2771 = vmatpush2.bf16.msra.mxu0 %v2127
  %2772 = vmatprep.subr.bf16.mxu0 %v2124
  %2773 = vmatpush2.bf16.msra.mxu0 %v2123
  %2774 = vmatprep.subr.bf16.mxu0 %v2120
  %2775 = vmatpush2.bf16.msra.mxu0 %v2119
  %2776 = vmatprep.subr.bf16.mxu0 %v2116
  %2777 = vmatpush2.bf16.msra.mxu0 %v2115
  %2778 = vmatprep.mubr.bf16.mxu0 %v226
  %2779 = vmatmul.mubr.bf16.gmra.mxu0 %v225
  %v2780 = vpop.f32.mrf.mxu0
  %v2781 = vadd.f32 %v2738, %v2780
  %v2782 = vpop.f32.mrf.mxu0
  %v2783 = vadd.f32 %v2740, %v2782
  %v2784 = vpop.f32.mrf.mxu0
  %v2785 = vadd.f32 %v2742, %v2784
  %v2786 = vpop.f32.mrf.mxu0
  %v2787 = vadd.f32 %v2744, %v2786
  %2788 = vdwg.mxu0
  %2789 = vmatprep.subr.bf16.mxu0 %v1794
  %2790 = vmatpush1.bf16.msra.mxu0 %v1793
  %2791 = vmatprep.subr.bf16.mxu0 %v1790
  %2792 = vmatpush1.bf16.msra.mxu0 %v1789
  %2793 = vmatprep.subr.bf16.mxu0 %v1786
  %2794 = vmatpush1.bf16.msra.mxu0 %v1785
  %2795 = vmatprep.subr.bf16.mxu0 %v1782
  %2796 = vmatpush1.bf16.msra.mxu0 %v1781
  %2797 = vmatprep.subr.bf16.mxu0 %v1778
  %2798 = vmatpush1.bf16.msra.mxu0 %v1777
  %2799 = vmatprep.subr.bf16.mxu0 %v1774
  %2800 = vmatpush1.bf16.msra.mxu0 %v1773
  %2801 = vmatprep.subr.bf16.mxu0 %v1770
  %2802 = vmatpush1.bf16.msra.mxu0 %v1769
  %2803 = vmatprep.subr.bf16.mxu0 %v1766
  %2804 = vmatpush1.bf16.msra.mxu0 %v1765
  %2805 = vmatprep.subr.bf16.mxu0 %v1826
  %2806 = vmatpush2.bf16.msra.mxu0 %v1825
  %2807 = vmatprep.subr.bf16.mxu0 %v1822
  %2808 = vmatpush2.bf16.msra.mxu0 %v1821
  %2809 = vmatprep.subr.bf16.mxu0 %v1818
  %2810 = vmatpush2.bf16.msra.mxu0 %v1817
  %2811 = vmatprep.subr.bf16.mxu0 %v1814
  %2812 = vmatpush2.bf16.msra.mxu0 %v1813
  %2813 = vmatprep.subr.bf16.mxu0 %v1810
  %2814 = vmatpush2.bf16.msra.mxu0 %v1809
  %2815 = vmatprep.subr.bf16.mxu0 %v1806
  %2816 = vmatpush2.bf16.msra.mxu0 %v1805
  %2817 = vmatprep.subr.bf16.mxu0 %v1802
  %2818 = vmatpush2.bf16.msra.mxu0 %v1801
  %2819 = vmatprep.subr.bf16.mxu0 %v1798
  %2820 = vmatpush2.bf16.msra.mxu0 %v1797
  %2821 = vmatprep.mubr.bf16.mxu0 %v216
  %2822 = vmatmul.mubr.bf16.gmra.mxu0 %v215
  %v2823 = vpop.f32.mrf.mxu0
  %v2824 = vadd.f32 0.0, %v2823
  %v2825 = vpop.f32.mrf.mxu0
  %v2826 = vadd.f32 0.0, %v2825
  %v2827 = vpop.f32.mrf.mxu0
  %v2828 = vadd.f32 0.0, %v2827
  %v2829 = vpop.f32.mrf.mxu0
  %v2830 = vadd.f32 0.0, %v2829
  %2831 = vdwg.mxu0
  %2832 = vmatprep.subr.bf16.mxu0 %v1858
  %2833 = vmatpush1.bf16.msra.mxu0 %v1857
  %2834 = vmatprep.subr.bf16.mxu0 %v1854
  %2835 = vmatpush1.bf16.msra.mxu0 %v1853
  %2836 = vmatprep.subr.bf16.mxu0 %v1850
  %2837 = vmatpush1.bf16.msra.mxu0 %v1849
  %2838 = vmatprep.subr.bf16.mxu0 %v1846
  %2839 = vmatpush1.bf16.msra.mxu0 %v1845
  %2840 = vmatprep.subr.bf16.mxu0 %v1842
  %2841 = vmatpush1.bf16.msra.mxu0 %v1841
  %2842 = vmatprep.subr.bf16.mxu0 %v1838
  %2843 = vmatpush1.bf16.msra.mxu0 %v1837
  %2844 = vmatprep.subr.bf16.mxu0 %v1834
  %2845 = vmatpush1.bf16.msra.mxu0 %v1833
  %2846 = vmatprep.subr.bf16.mxu0 %v1830
  %2847 = vmatpush1.bf16.msra.mxu0 %v1829
  %2848 = vmatprep.subr.bf16.mxu0 %v1890
  %2849 = vmatpush2.bf16.msra.mxu0 %v1889
  %2850 = vmatprep.subr.bf16.mxu0 %v1886
  %2851 = vmatpush2.bf16.msra.mxu0 %v1885
  %2852 = vmatprep.subr.bf16.mxu0 %v1882
  %2853 = vmatpush2.bf16.msra.mxu0 %v1881
  %2854 = vmatprep.subr.bf16.mxu0 %v1878
  %2855 = vmatpush2.bf16.msra.mxu0 %v1877
  %2856 = vmatprep.subr.bf16.mxu0 %v1874
  %2857 = vmatpush2.bf16.msra.mxu0 %v1873
  %2858 = vmatprep.subr.bf16.mxu0 %v1870
  %2859 = vmatpush2.bf16.msra.mxu0 %v1869
  %2860 = vmatprep.subr.bf16.mxu0 %v1866
  %2861 = vmatpush2.bf16.msra.mxu0 %v1865
  %2862 = vmatprep.subr.bf16.mxu0 %v1862
  %2863 = vmatpush2.bf16.msra.mxu0 %v1861
  %2864 = vmatprep.mubr.bf16.mxu0 %v218
  %2865 = vmatmul.mubr.bf16.gmra.mxu0 %v217
  %v2866 = vpop.f32.mrf.mxu0
  %v2867 = vadd.f32 %v2824, %v2866
  %v2868 = vpop.f32.mrf.mxu0
  %v2869 = vadd.f32 %v2826, %v2868
  %v2870 = vpop.f32.mrf.mxu0
  %v2871 = vadd.f32 %v2828, %v2870
  %v2872 = vpop.f32.mrf.mxu0
  %v2873 = vadd.f32 %v2830, %v2872
  %2874 = vdwg.mxu0
  %2875 = vmatprep.subr.bf16.mxu0 %v1922
  %2876 = vmatpush1.bf16.msra.mxu0 %v1921
  %2877 = vmatprep.subr.bf16.mxu0 %v1918
  %2878 = vmatpush1.bf16.msra.mxu0 %v1917
  %2879 = vmatprep.subr.bf16.mxu0 %v1914
  %2880 = vmatpush1.bf16.msra.mxu0 %v1913
  %2881 = vmatprep.subr.bf16.mxu0 %v1910
  %2882 = vmatpush1.bf16.msra.mxu0 %v1909
  %2883 = vmatprep.subr.bf16.mxu0 %v1906
  %2884 = vmatpush1.bf16.msra.mxu0 %v1905
  %2885 = vmatprep.subr.bf16.mxu0 %v1902
  %2886 = vmatpush1.bf16.msra.mxu0 %v1901
  %2887 = vmatprep.subr.bf16.mxu0 %v1898
  %2888 = vmatpush1.bf16.msra.mxu0 %v1897
  %2889 = vmatprep.subr.bf16.mxu0 %v1894
  %2890 = vmatpush1.bf16.msra.mxu0 %v1893
  %2891 = vmatprep.subr.bf16.mxu0 %v1954
  %2892 = vmatpush2.bf16.msra.mxu0 %v1953
  %2893 = vmatprep.subr.bf16.mxu0 %v1950
  %2894 = vmatpush2.bf16.msra.mxu0 %v1949
  %2895 = vmatprep.subr.bf16.mxu0 %v1946
  %2896 = vmatpush2.bf16.msra.mxu0 %v1945
  %2897 = vmatprep.subr.bf16.mxu0 %v1942
  %2898 = vmatpush2.bf16.msra.mxu0 %v1941
  %2899 = vmatprep.subr.bf16.mxu0 %v1938
  %2900 = vmatpush2.bf16.msra.mxu0 %v1937
  %2901 = vmatprep.subr.bf16.mxu0 %v1934
  %2902 = vmatpush2.bf16.msra.mxu0 %v1933
  %2903 = vmatprep.subr.bf16.mxu0 %v1930
  %2904 = vmatpush2.bf16.msra.mxu0 %v1929
  %2905 = vmatprep.subr.bf16.mxu0 %v1926
  %2906 = vmatpush2.bf16.msra.mxu0 %v1925
  %2907 = vmatprep.mubr.bf16.mxu0 %v220
  %2908 = vmatmul.mubr.bf16.gmra.mxu0 %v219
  %v2909 = vpop.f32.mrf.mxu0
  %v2910 = vadd.f32 %v2867, %v2909
  %v2911 = vpop.f32.mrf.mxu0
  %v2912 = vadd.f32 %v2869, %v2911
  %v2913 = vpop.f32.mrf.mxu0
  %v2914 = vadd.f32 %v2871, %v2913
  %v2915 = vpop.f32.mrf.mxu0
  %v2916 = vadd.f32 %v2873, %v2915
  %2917 = vdwg.mxu0
  %2918 = vmatprep.subr.bf16.mxu0 %v1986
  %2919 = vmatpush1.bf16.msra.mxu0 %v1985
  %2920 = vmatprep.subr.bf16.mxu0 %v1982
  %2921 = vmatpush1.bf16.msra.mxu0 %v1981
  %2922 = vmatprep.subr.bf16.mxu0 %v1978
  %2923 = vmatpush1.bf16.msra.mxu0 %v1977
  %2924 = vmatprep.subr.bf16.mxu0 %v1974
  %2925 = vmatpush1.bf16.msra.mxu0 %v1973
  %2926 = vmatprep.subr.bf16.mxu0 %v1970
  %2927 = vmatpush1.bf16.msra.mxu0 %v1969
  %2928 = vmatprep.subr.bf16.mxu0 %v1966
  %2929 = vmatpush1.bf16.msra.mxu0 %v1965
  %2930 = vmatprep.subr.bf16.mxu0 %v1962
  %2931 = vmatpush1.bf16.msra.mxu0 %v1961
  %2932 = vmatprep.subr.bf16.mxu0 %v1958
  %2933 = vmatpush1.bf16.msra.mxu0 %v1957
  %2934 = vmatprep.subr.bf16.mxu0 %v2018
  %2935 = vmatpush2.bf16.msra.mxu0 %v2017
  %2936 = vmatprep.subr.bf16.mxu0 %v2014
  %2937 = vmatpush2.bf16.msra.mxu0 %v2013
  %2938 = vmatprep.subr.bf16.mxu0 %v2010
  %2939 = vmatpush2.bf16.msra.mxu0 %v2009
  %2940 = vmatprep.subr.bf16.mxu0 %v2006
  %2941 = vmatpush2.bf16.msra.mxu0 %v2005
  %2942 = vmatprep.subr.bf16.mxu0 %v2002
  %2943 = vmatpush2.bf16.msra.mxu0 %v2001
  %2944 = vmatprep.subr.bf16.mxu0 %v1998
  %2945 = vmatpush2.bf16.msra.mxu0 %v1997
  %2946 = vmatprep.subr.bf16.mxu0 %v1994
  %2947 = vmatpush2.bf16.msra.mxu0 %v1993
  %2948 = vmatprep.subr.bf16.mxu0 %v1990
  %2949 = vmatpush2.bf16.msra.mxu0 %v1989
  %2950 = vmatprep.mubr.bf16.mxu0 %v222
  %2951 = vmatmul.mubr.bf16.gmra.mxu0 %v221
  %v2952 = vpop.f32.mrf.mxu0
  %v2953 = vadd.f32 %v2910, %v2952
  %v2954 = vpop.f32.mrf.mxu0
  %v2955 = vadd.f32 %v2912, %v2954
  %v2956 = vpop.f32.mrf.mxu0
  %v2957 = vadd.f32 %v2914, %v2956
  %v2958 = vpop.f32.mrf.mxu0
  %v2959 = vadd.f32 %v2916, %v2958
  %2960 = vdwg.mxu0
  %2961 = vmatprep.subr.bf16.mxu0 %v2050
  %2962 = vmatpush1.bf16.msra.mxu0 %v2049
  %2963 = vmatprep.subr.bf16.mxu0 %v2046
  %2964 = vmatpush1.bf16.msra.mxu0 %v2045
  %2965 = vmatprep.subr.bf16.mxu0 %v2042
  %2966 = vmatpush1.bf16.msra.mxu0 %v2041
  %2967 = vmatprep.subr.bf16.mxu0 %v2038
  %2968 = vmatpush1.bf16.msra.mxu0 %v2037
  %2969 = vmatprep.subr.bf16.mxu0 %v2034
  %2970 = vmatpush1.bf16.msra.mxu0 %v2033
  %2971 = vmatprep.subr.bf16.mxu0 %v2030
  %2972 = vmatpush1.bf16.msra.mxu0 %v2029
  %2973 = vmatprep.subr.bf16.mxu0 %v2026
  %2974 = vmatpush1.bf16.msra.mxu0 %v2025
  %2975 = vmatprep.subr.bf16.mxu0 %v2022
  %2976 = vmatpush1.bf16.msra.mxu0 %v2021
  %2977 = vmatprep.subr.bf16.mxu0 %v2082
  %2978 = vmatpush2.bf16.msra.mxu0 %v2081
  %2979 = vmatprep.subr.bf16.mxu0 %v2078
  %2980 = vmatpush2.bf16.msra.mxu0 %v2077
  %2981 = vmatprep.subr.bf16.mxu0 %v2074
  %2982 = vmatpush2.bf16.msra.mxu0 %v2073
  %2983 = vmatprep.subr.bf16.mxu0 %v2070
  %2984 = vmatpush2.bf16.msra.mxu0 %v2069
  %2985 = vmatprep.subr.bf16.mxu0 %v2066
  %2986 = vmatpush2.bf16.msra.mxu0 %v2065
  %2987 = vmatprep.subr.bf16.mxu0 %v2062
  %2988 = vmatpush2.bf16.msra.mxu0 %v2061
  %2989 = vmatprep.subr.bf16.mxu0 %v2058
  %2990 = vmatpush2.bf16.msra.mxu0 %v2057
  %2991 = vmatprep.subr.bf16.mxu0 %v2054
  %2992 = vmatpush2.bf16.msra.mxu0 %v2053
  %2993 = vmatprep.mubr.bf16.mxu0 %v224
  %2994 = vmatmul.mubr.bf16.gmra.mxu0 %v223
  %v2995 = vpop.f32.mrf.mxu0
  %v2996 = vadd.f32 %v2953, %v2995
  %v2997 = vpop.f32.mrf.mxu0
  %v2998 = vadd.f32 %v2955, %v2997
  %v2999 = vpop.f32.mrf.mxu0
  %v3000 = vadd.f32 %v2957, %v2999
  %v3001 = vpop.f32.mrf.mxu0
  %v3002 = vadd.f32 %v2959, %v3001
  %3003 = vdwg.mxu0
  %3004 = vmatprep.subr.bf16.mxu0 %v2114
  %3005 = vmatpush1.bf16.msra.mxu0 %v2113
  %3006 = vmatprep.subr.bf16.mxu0 %v2110
  %3007 = vmatpush1.bf16.msra.mxu0 %v2109
  %3008 = vmatprep.subr.bf16.mxu0 %v2106
  %3009 = vmatpush1.bf16.msra.mxu0 %v2105
  %3010 = vmatprep.subr.bf16.mxu0 %v2102
  %3011 = vmatpush1.bf16.msra.mxu0 %v2101
  %3012 = vmatprep.subr.bf16.mxu0 %v2098
  %3013 = vmatpush1.bf16.msra.mxu0 %v2097
  %3014 = vmatprep.subr.bf16.mxu0 %v2094
  %3015 = vmatpush1.bf16.msra.mxu0 %v2093
  %3016 = vmatprep.subr.bf16.mxu0 %v2090
  %3017 = vmatpush1.bf16.msra.mxu0 %v2089
  %3018 = vmatprep.subr.bf16.mxu0 %v2086
  %3019 = vmatpush1.bf16.msra.mxu0 %v2085
  %3020 = vmatprep.subr.bf16.mxu0 %v2146
  %3021 = vmatpush2.bf16.msra.mxu0 %v2145
  %3022 = vmatprep.subr.bf16.mxu0 %v2142
  %3023 = vmatpush2.bf16.msra.mxu0 %v2141
  %3024 = vmatprep.subr.bf16.mxu0 %v2138
  %3025 = vmatpush2.bf16.msra.mxu0 %v2137
  %3026 = vmatprep.subr.bf16.mxu0 %v2134
  %3027 = vmatpush2.bf16.msra.mxu0 %v2133
  %3028 = vmatprep.subr.bf16.mxu0 %v2130
  %3029 = vmatpush2.bf16.msra.mxu0 %v2129
  %3030 = vmatprep.subr.bf16.mxu0 %v2126
  %3031 = vmatpush2.bf16.msra.mxu0 %v2125
  %3032 = vmatprep.subr.bf16.mxu0 %v2122
  %3033 = vmatpush2.bf16.msra.mxu0 %v2121
  %3034 = vmatprep.subr.bf16.mxu0 %v2118
  %3035 = vmatpush2.bf16.msra.mxu0 %v2117
  %3036 = vmatprep.mubr.bf16.mxu0 %v226
  %3037 = vmatmul.mubr.bf16.gmra.mxu0 %v225
  %v3038 = vpop.f32.mrf.mxu0
  %v3039 = vadd.f32 %v2996, %v3038
  %v3040 = vpop.f32.mrf.mxu0
  %v3041 = vadd.f32 %v2998, %v3040
  %v3042 = vpop.f32.mrf.mxu0
  %v3043 = vadd.f32 %v3000, %v3042
  %v3044 = vpop.f32.mrf.mxu0
  %v3045 = vadd.f32 %v3002, %v3044
  %3046 = vdwg.mxu0
  %v3047 = vld [vmem:[%s4] sm:$0xf]
  %v3049 = vlaneseq
  %v3050 = vshrl.u32 %v3049, 7
  %v3051 = vsub.s32 0, %v3050
  %v3052 = vrot.slane %v3047, %v3051
  %v3053 = vlaneseq
  %v3054 = vshrl.u32 %v3053, 7
  %v3055 = vsub.s32 1, %v3054
  %v3056 = vrot.slane %v3047, %v3055
  %v3057 = vlaneseq
  %v3058 = vshrl.u32 %v3057, 7
  %v3059 = vsub.s32 2, %v3058
  %v3060 = vrot.slane %v3047, %v3059
  %v3061 = vlaneseq
  %v3062 = vshrl.u32 %v3061, 7
  %v3063 = vsub.s32 3, %v3062
  %v3064 = vrot.slane %v3047, %v3063
  %v3069 = vmul.f32 %v2781, %v3052
  %v3070 = vmul.f32 %v2783, %v3056
  %v3071 = vmul.f32 %v3039, %v3060
  %v3072 = vmul.f32 %v3041, %v3064
  %v3073 = vmul.f32 %v2785, %v3052
  %v3074 = vmul.f32 %v2787, %v3056
  %v3075 = vmul.f32 %v3043, %v3060
  %v3076 = vmul.f32 %v3045, %v3064
  %v3077 = vld [vmem:[%s5] sm:$0xf]
  %v3079 = vlaneseq
  %v3080 = vshrl.u32 %v3079, 7
  %v3081 = vsub.s32 0, %v3080
  %v3082 = vrot.slane %v3077, %v3081
  %v3083 = vlaneseq
  %v3084 = vshrl.u32 %v3083, 7
  %v3085 = vsub.s32 1, %v3084
  %v3086 = vrot.slane %v3077, %v3085
  %v3087 = vlaneseq
  %v3088 = vshrl.u32 %v3087, 7
  %v3089 = vsub.s32 2, %v3088
  %v3090 = vrot.slane %v3077, %v3089
  %v3091 = vlaneseq
  %v3092 = vshrl.u32 %v3091, 7
  %v3093 = vsub.s32 3, %v3092
  %v3094 = vrot.slane %v3077, %v3093
  %v3099 = vadd.f32 %v3069, %v3082
  %v3100 = vadd.f32 %v3070, %v3086
  %v3101 = vadd.f32 %v3071, %v3090
  %v3102 = vadd.f32 %v3072, %v3094
  %v3103 = vadd.f32 %v3073, %v3082
  %v3104 = vadd.f32 %v3074, %v3086
  %v3105 = vadd.f32 %v3075, %v3090
  %v3106 = vadd.f32 %v3076, %v3094
  %v3107 = vmax.f32 %v3099, 0.0
  %v3108 = vmax.f32 %v3100, 0.0
  %v3109 = vmax.f32 %v3101, 0.0
  %v3110 = vmax.f32 %v3102, 0.0
  %v3111 = vmax.f32 %v3103, 0.0
  %v3112 = vmax.f32 %v3104, 0.0
  %v3113 = vmax.f32 %v3105, 0.0
  %v3114 = vmax.f32 %v3106, 0.0
  %v3119 = vrot.slane %v3111, 7
  %v3120 = vrot.slane %v3112, 7
  %v3121 = vrot.slane %v3113, 7
  %v3122 = vrot.slane %v3114, 7
  %v3131 = vrot.slane %v3107, 7
  %v3132 = vrot.slane %v3108, 7
  %v3133 = vrot.slane %v3109, 7
  %v3134 = vrot.slane %v3110, 7
  %v3135 = vsel %vm149, %v3131, %v3119
  %v3136 = vsel %vm149, %v3132, %v3120
  %v3137 = vsel %vm149, %v3133, %v3121
  %v3138 = vsel %vm149, %v3134, %v3122
  %v3147 = vsel %vm149, %v3119, %v3131
  %v3148 = vsel %vm149, %v3120, %v3132
  %v3149 = vsel %vm149, %v3121, %v3133
  %v3150 = vsel %vm149, %v3122, %v3134
  %v3151 = vsel %vm53, %v3147, 0.0
  %v3152 = vsel %vm53, %v3148, 0.0
  %v3153 = vsel %vm53, %v3149, 0.0
  %v3154 = vsel %vm53, %v3150, 0.0
  %v3155 = vsel %vm54, %v3135, 0.0
  %v3156 = vsel %vm54, %v3136, 0.0
  %v3157 = vsel %vm54, %v3137, 0.0
  %v3158 = vsel %vm54, %v3138, 0.0
  %v3159 = vrot.slane %v3107, 1
  %v3160 = vrot.slane %v3111, 1
  %v3161 = vsel %vm178, %v3159, %v3160
  %v3162 = vrot.slane %v3108, 1
  %v3163 = vrot.slane %v3112, 1
  %v3164 = vsel %vm178, %v3162, %v3163
  %v3165 = vrot.slane %v3109, 1
  %v3166 = vrot.slane %v3113, 1
  %v3167 = vsel %vm178, %v3165, %v3166
  %v3168 = vrot.slane %v3110, 1
  %v3169 = vrot.slane %v3114, 1
  %v3170 = vsel %vm178, %v3168, %v3169
  %v3183 = vsel %vm178, %v3160, %v3159
  %v3184 = vsel %vm178, %v3163, %v3162
  %v3185 = vsel %vm178, %v3166, %v3165
  %v3186 = vsel %vm178, %v3169, %v3168
  %v3187 = vsel %vm55, %v3161, 0.0
  %v3188 = vsel %vm55, %v3164, 0.0
  %v3189 = vsel %vm55, %v3167, 0.0
  %v3190 = vsel %vm55, %v3170, 0.0
  %v3191 = vsel %vm56, %v3183, 0.0
  %v3192 = vsel %vm56, %v3184, 0.0
  %v3193 = vsel %vm56, %v3185, 0.0
  %v3194 = vsel %vm56, %v3186, 0.0
  %v3195 = vpack.c.bf16 %v3155, %v3151
  %v3196 = vpack.c.bf16 %v3156, %v3152
  %v3197 = vpack.c.bf16 %v3157, %v3153
  %v3198 = vpack.c.bf16 %v3158, %v3154
  %v3199 = vpack.c.bf16 %v3111, %v3107
  %v3200 = vpack.c.bf16 %v3112, %v3108
  %v3201 = vpack.c.bf16 %v3113, %v3109
  %v3202 = vpack.c.bf16 %v3114, %v3110
  %v3203 = vpack.c.bf16 %v3191, %v3187
  %v3204 = vpack.c.bf16 %v3192, %v3188
  %v3205 = vpack.c.bf16 %v3193, %v3189
  %v3206 = vpack.c.bf16 %v3194, %v3190
  %v3207 = vld [vmem:[%s6] sm:$0xff]
  %v3208 = vld [vmem:[%s6 + $0x8] sm:$0xff]
  %v3209 = vld [vmem:[%s6 + $0x10] sm:$0xff]
  %v3210 = vld [vmem:[%s6 + $0x18] sm:$0xff]
  %v3211 = vld [vmem:[%s6 + $0x20] sm:$0xff]
  %v3212 = vld [vmem:[%s6 + $0x28] sm:$0xff]
  %v3213 = vld [vmem:[%s6 + $0x30] sm:$0xff]
  %v3214 = vld [vmem:[%s6 + $0x38] sm:$0xff]
  %v3215 = vld [vmem:[%s6 + $0x40] sm:$0xff]
  %v3216 = vld [vmem:[%s6 + $0x48] sm:$0xff]
  %v3217 = vld [vmem:[%s6 + $0x50] sm:$0xff]
  %v3218 = vld [vmem:[%s6 + $0x58] sm:$0xff]
  %v3219 = vld [vmem:[%s6 + $0x60] sm:$0xff]
  %v3220 = vld [vmem:[%s6 + $0x68] sm:$0xff]
  %v3221 = vld [vmem:[%s6 + $0x70] sm:$0xff]
  %v3222 = vld [vmem:[%s6 + $0x78] sm:$0xff]
  %v3223 = vld [vmem:[%s6 + $0x80] sm:$0xff]
  %v3224 = vld [vmem:[%s6 + $0x88] sm:$0xff]
  %v3225 = vld [vmem:[%s6 + $0x90] sm:$0xff]
  %v3226 = vld [vmem:[%s6 + $0x98] sm:$0xff]
  %v3227 = vld [vmem:[%s6 + $0xa0] sm:$0xff]
  %v3228 = vld [vmem:[%s6 + $0xa8] sm:$0xff]
  %v3229 = vld [vmem:[%s6 + $0xb0] sm:$0xff]
  %v3230 = vld [vmem:[%s6 + $0xb8] sm:$0xff]
  %v3231 = vld [vmem:[%s6 + $0xc0] sm:$0xff]
  %v3232 = vld [vmem:[%s6 + $0xc8] sm:$0xff]
  %v3233 = vld [vmem:[%s6 + $0xd0] sm:$0xff]
  %v3234 = vld [vmem:[%s6 + $0xd8] sm:$0xff]
  %v3235 = vld [vmem:[%s6 + $0xe0] sm:$0xff]
  %v3236 = vld [vmem:[%s6 + $0xe8] sm:$0xff]
  %v3237 = vld [vmem:[%s6 + $0xf0] sm:$0xff]
  %v3238 = vld [vmem:[%s6 + $0xf8] sm:$0xff]
  %v3239 = vld [vmem:[%s6 + $0x100] sm:$0xff]
  %v3240 = vld [vmem:[%s6 + $0x108] sm:$0xff]
  %v3241 = vld [vmem:[%s6 + $0x110] sm:$0xff]
  %v3242 = vld [vmem:[%s6 + $0x118] sm:$0xff]
  %v3243 = vld [vmem:[%s6 + $0x120] sm:$0xff]
  %v3244 = vld [vmem:[%s6 + $0x128] sm:$0xff]
  %v3245 = vld [vmem:[%s6 + $0x130] sm:$0xff]
  %v3246 = vld [vmem:[%s6 + $0x138] sm:$0xff]
  %v3247 = vld [vmem:[%s6 + $0x140] sm:$0xff]
  %v3248 = vld [vmem:[%s6 + $0x148] sm:$0xff]
  %v3249 = vld [vmem:[%s6 + $0x150] sm:$0xff]
  %v3250 = vld [vmem:[%s6 + $0x158] sm:$0xff]
  %v3251 = vld [vmem:[%s6 + $0x160] sm:$0xff]
  %v3252 = vld [vmem:[%s6 + $0x168] sm:$0xff]
  %v3253 = vld [vmem:[%s6 + $0x170] sm:$0xff]
  %v3254 = vld [vmem:[%s6 + $0x178] sm:$0xff]
  %v3255 = vld [vmem:[%s6 + $0x180] sm:$0xff]
  %v3256 = vld [vmem:[%s6 + $0x188] sm:$0xff]
  %v3257 = vld [vmem:[%s6 + $0x190] sm:$0xff]
  %v3258 = vld [vmem:[%s6 + $0x198] sm:$0xff]
  %v3259 = vld [vmem:[%s6 + $0x1a0] sm:$0xff]
  %v3260 = vld [vmem:[%s6 + $0x1a8] sm:$0xff]
  %v3261 = vld [vmem:[%s6 + $0x1b0] sm:$0xff]
  %v3262 = vld [vmem:[%s6 + $0x1b8] sm:$0xff]
  %v3263 = vld [vmem:[%s6 + $0x1c0] sm:$0xff]
  %v3264 = vld [vmem:[%s6 + $0x1c8] sm:$0xff]
  %v3265 = vld [vmem:[%s6 + $0x1d0] sm:$0xff]
  %v3266 = vld [vmem:[%s6 + $0x1d8] sm:$0xff]
  %v3267 = vld [vmem:[%s6 + $0x1e0] sm:$0xff]
  %v3268 = vld [vmem:[%s6 + $0x1e8] sm:$0xff]
  %v3269 = vld [vmem:[%s6 + $0x1f0] sm:$0xff]
  %v3270 = vld [vmem:[%s6 + $0x1f8] sm:$0xff]
  %v3271 = vld [vmem:[%s6 + $0x200] sm:$0xff]
  %v3272 = vld [vmem:[%s6 + $0x208] sm:$0xff]
  %v3273 = vld [vmem:[%s6 + $0x210] sm:$0xff]
  %v3274 = vld [vmem:[%s6 + $0x218] sm:$0xff]
  %v3275 = vld [vmem:[%s6 + $0x220] sm:$0xff]
  %v3276 = vld [vmem:[%s6 + $0x228] sm:$0xff]
  %v3277 = vld [vmem:[%s6 + $0x230] sm:$0xff]
  %v3278 = vld [vmem:[%s6 + $0x238] sm:$0xff]
  %v3279 = vld [vmem:[%s6 + $0x240] sm:$0xff]
  %v3280 = vld [vmem:[%s6 + $0x248] sm:$0xff]
  %v3281 = vld [vmem:[%s6 + $0x250] sm:$0xff]
  %v3282 = vld [vmem:[%s6 + $0x258] sm:$0xff]
  %v3283 = vld [vmem:[%s6 + $0x260] sm:$0xff]
  %v3284 = vld [vmem:[%s6 + $0x268] sm:$0xff]
  %v3285 = vld [vmem:[%s6 + $0x270] sm:$0xff]
  %v3286 = vld [vmem:[%s6 + $0x278] sm:$0xff]
  %v3287 = vld [vmem:[%s6 + $0x280] sm:$0xff]
  %v3288 = vld [vmem:[%s6 + $0x288] sm:$0xff]
  %v3289 = vld [vmem:[%s6 + $0x290] sm:$0xff]
  %v3290 = vld [vmem:[%s6 + $0x298] sm:$0xff]
  %v3291 = vld [vmem:[%s6 + $0x2a0] sm:$0xff]
  %v3292 = vld [vmem:[%s6 + $0x2a8] sm:$0xff]
  %v3293 = vld [vmem:[%s6 + $0x2b0] sm:$0xff]
  %v3294 = vld [vmem:[%s6 + $0x2b8] sm:$0xff]
  %v3295 = vld [vmem:[%s6 + $0x2c0] sm:$0xff]
  %v3296 = vld [vmem:[%s6 + $0x2c8] sm:$0xff]
  %v3297 = vld [vmem:[%s6 + $0x2d0] sm:$0xff]
  %v3298 = vld [vmem:[%s6 + $0x2d8] sm:$0xff]
  %v3299 = vld [vmem:[%s6 + $0x2e0] sm:$0xff]
  %v3300 = vld [vmem:[%s6 + $0x2e8] sm:$0xff]
  %v3301 = vld [vmem:[%s6 + $0x2f0] sm:$0xff]
  %v3302 = vld [vmem:[%s6 + $0x2f8] sm:$0xff]
  %v3303 = vld [vmem:[%s6 + $0x300] sm:$0xff]
  %v3304 = vld [vmem:[%s6 + $0x308] sm:$0xff]
  %v3305 = vld [vmem:[%s6 + $0x310] sm:$0xff]
  %v3306 = vld [vmem:[%s6 + $0x318] sm:$0xff]
  %v3307 = vld [vmem:[%s6 + $0x320] sm:$0xff]
  %v3308 = vld [vmem:[%s6 + $0x328] sm:$0xff]
  %v3309 = vld [vmem:[%s6 + $0x330] sm:$0xff]
  %v3310 = vld [vmem:[%s6 + $0x338] sm:$0xff]
  %v3311 = vld [vmem:[%s6 + $0x340] sm:$0xff]
  %v3312 = vld [vmem:[%s6 + $0x348] sm:$0xff]
  %v3313 = vld [vmem:[%s6 + $0x350] sm:$0xff]
  %v3314 = vld [vmem:[%s6 + $0x358] sm:$0xff]
  %v3315 = vld [vmem:[%s6 + $0x360] sm:$0xff]
  %v3316 = vld [vmem:[%s6 + $0x368] sm:$0xff]
  %v3317 = vld [vmem:[%s6 + $0x370] sm:$0xff]
  %v3318 = vld [vmem:[%s6 + $0x378] sm:$0xff]
  %v3319 = vld [vmem:[%s6 + $0x380] sm:$0xff]
  %v3320 = vld [vmem:[%s6 + $0x388] sm:$0xff]
  %v3321 = vld [vmem:[%s6 + $0x390] sm:$0xff]
  %v3322 = vld [vmem:[%s6 + $0x398] sm:$0xff]
  %v3323 = vld [vmem:[%s6 + $0x3a0] sm:$0xff]
  %v3324 = vld [vmem:[%s6 + $0x3a8] sm:$0xff]
  %v3325 = vld [vmem:[%s6 + $0x3b0] sm:$0xff]
  %v3326 = vld [vmem:[%s6 + $0x3b8] sm:$0xff]
  %v3327 = vld [vmem:[%s6 + $0x3c0] sm:$0xff]
  %v3328 = vld [vmem:[%s6 + $0x3c8] sm:$0xff]
  %v3329 = vld [vmem:[%s6 + $0x3d0] sm:$0xff]
  %v3330 = vld [vmem:[%s6 + $0x3d8] sm:$0xff]
  %v3331 = vld [vmem:[%s6 + $0x3e0] sm:$0xff]
  %v3332 = vld [vmem:[%s6 + $0x3e8] sm:$0xff]
  %v3333 = vld [vmem:[%s6 + $0x3f0] sm:$0xff]
  %v3334 = vld [vmem:[%s6 + $0x3f8] sm:$0xff]
  %v3335 = vld [vmem:[%s6 + $0x400] sm:$0xff]
  %v3336 = vld [vmem:[%s6 + $0x408] sm:$0xff]
  %v3337 = vld [vmem:[%s6 + $0x410] sm:$0xff]
  %v3338 = vld [vmem:[%s6 + $0x418] sm:$0xff]
  %v3339 = vld [vmem:[%s6 + $0x420] sm:$0xff]
  %v3340 = vld [vmem:[%s6 + $0x428] sm:$0xff]
  %v3341 = vld [vmem:[%s6 + $0x430] sm:$0xff]
  %v3342 = vld [vmem:[%s6 + $0x438] sm:$0xff]
  %v3343 = vld [vmem:[%s6 + $0x440] sm:$0xff]
  %v3344 = vld [vmem:[%s6 + $0x448] sm:$0xff]
  %v3345 = vld [vmem:[%s6 + $0x450] sm:$0xff]
  %v3346 = vld [vmem:[%s6 + $0x458] sm:$0xff]
  %v3347 = vld [vmem:[%s6 + $0x460] sm:$0xff]
  %v3348 = vld [vmem:[%s6 + $0x468] sm:$0xff]
  %v3349 = vld [vmem:[%s6 + $0x470] sm:$0xff]
  %v3350 = vld [vmem:[%s6 + $0x478] sm:$0xff]
  %v3351 = vld [vmem:[%s6 + $0x480] sm:$0xff]
  %v3352 = vld [vmem:[%s6 + $0x488] sm:$0xff]
  %v3353 = vld [vmem:[%s6 + $0x490] sm:$0xff]
  %v3354 = vld [vmem:[%s6 + $0x498] sm:$0xff]
  %v3355 = vld [vmem:[%s6 + $0x4a0] sm:$0xff]
  %v3356 = vld [vmem:[%s6 + $0x4a8] sm:$0xff]
  %v3357 = vld [vmem:[%s6 + $0x4b0] sm:$0xff]
  %v3358 = vld [vmem:[%s6 + $0x4b8] sm:$0xff]
  %v3359 = vld [vmem:[%s6 + $0x4c0] sm:$0xff]
  %v3360 = vld [vmem:[%s6 + $0x4c8] sm:$0xff]
  %v3361 = vld [vmem:[%s6 + $0x4d0] sm:$0xff]
  %v3362 = vld [vmem:[%s6 + $0x4d8] sm:$0xff]
  %v3363 = vld [vmem:[%s6 + $0x4e0] sm:$0xff]
  %v3364 = vld [vmem:[%s6 + $0x4e8] sm:$0xff]
  %v3365 = vld [vmem:[%s6 + $0x4f0] sm:$0xff]
  %v3366 = vld [vmem:[%s6 + $0x4f8] sm:$0xff]
  %v3367 = vld [vmem:[%s6 + $0x500] sm:$0xff]
  %v3368 = vld [vmem:[%s6 + $0x508] sm:$0xff]
  %v3369 = vld [vmem:[%s6 + $0x510] sm:$0xff]
  %v3370 = vld [vmem:[%s6 + $0x518] sm:$0xff]
  %v3371 = vld [vmem:[%s6 + $0x520] sm:$0xff]
  %v3372 = vld [vmem:[%s6 + $0x528] sm:$0xff]
  %v3373 = vld [vmem:[%s6 + $0x530] sm:$0xff]
  %v3374 = vld [vmem:[%s6 + $0x538] sm:$0xff]
  %v3375 = vld [vmem:[%s6 + $0x540] sm:$0xff]
  %v3376 = vld [vmem:[%s6 + $0x548] sm:$0xff]
  %v3377 = vld [vmem:[%s6 + $0x550] sm:$0xff]
  %v3378 = vld [vmem:[%s6 + $0x558] sm:$0xff]
  %v3379 = vld [vmem:[%s6 + $0x560] sm:$0xff]
  %v3380 = vld [vmem:[%s6 + $0x568] sm:$0xff]
  %v3381 = vld [vmem:[%s6 + $0x570] sm:$0xff]
  %v3382 = vld [vmem:[%s6 + $0x578] sm:$0xff]
  %v3383 = vld [vmem:[%s6 + $0x580] sm:$0xff]
  %v3384 = vld [vmem:[%s6 + $0x588] sm:$0xff]
  %v3385 = vld [vmem:[%s6 + $0x590] sm:$0xff]
  %v3386 = vld [vmem:[%s6 + $0x598] sm:$0xff]
  %v3387 = vld [vmem:[%s6 + $0x5a0] sm:$0xff]
  %v3388 = vld [vmem:[%s6 + $0x5a8] sm:$0xff]
  %v3389 = vld [vmem:[%s6 + $0x5b0] sm:$0xff]
  %v3390 = vld [vmem:[%s6 + $0x5b8] sm:$0xff]
  %v3391 = vld [vmem:[%s6 + $0x5c0] sm:$0xff]
  %v3392 = vld [vmem:[%s6 + $0x5c8] sm:$0xff]
  %v3393 = vld [vmem:[%s6 + $0x5d0] sm:$0xff]
  %v3394 = vld [vmem:[%s6 + $0x5d8] sm:$0xff]
  %v3395 = vld [vmem:[%s6 + $0x5e0] sm:$0xff]
  %v3396 = vld [vmem:[%s6 + $0x5e8] sm:$0xff]
  %v3397 = vld [vmem:[%s6 + $0x5f0] sm:$0xff]
  %v3398 = vld [vmem:[%s6 + $0x5f8] sm:$0xff]
  %v3399 = vld [vmem:[%s6 + $0x600] sm:$0xff]
  %v3400 = vld [vmem:[%s6 + $0x608] sm:$0xff]
  %v3401 = vld [vmem:[%s6 + $0x610] sm:$0xff]
  %v3402 = vld [vmem:[%s6 + $0x618] sm:$0xff]
  %v3403 = vld [vmem:[%s6 + $0x620] sm:$0xff]
  %v3404 = vld [vmem:[%s6 + $0x628] sm:$0xff]
  %v3405 = vld [vmem:[%s6 + $0x630] sm:$0xff]
  %v3406 = vld [vmem:[%s6 + $0x638] sm:$0xff]
  %v3407 = vld [vmem:[%s6 + $0x640] sm:$0xff]
  %v3408 = vld [vmem:[%s6 + $0x648] sm:$0xff]
  %v3409 = vld [vmem:[%s6 + $0x650] sm:$0xff]
  %v3410 = vld [vmem:[%s6 + $0x658] sm:$0xff]
  %v3411 = vld [vmem:[%s6 + $0x660] sm:$0xff]
  %v3412 = vld [vmem:[%s6 + $0x668] sm:$0xff]
  %v3413 = vld [vmem:[%s6 + $0x670] sm:$0xff]
  %v3414 = vld [vmem:[%s6 + $0x678] sm:$0xff]
  %v3415 = vld [vmem:[%s6 + $0x680] sm:$0xff]
  %v3416 = vld [vmem:[%s6 + $0x688] sm:$0xff]
  %v3417 = vld [vmem:[%s6 + $0x690] sm:$0xff]
  %v3418 = vld [vmem:[%s6 + $0x698] sm:$0xff]
  %v3419 = vld [vmem:[%s6 + $0x6a0] sm:$0xff]
  %v3420 = vld [vmem:[%s6 + $0x6a8] sm:$0xff]
  %v3421 = vld [vmem:[%s6 + $0x6b0] sm:$0xff]
  %v3422 = vld [vmem:[%s6 + $0x6b8] sm:$0xff]
  %v3423 = vld [vmem:[%s6 + $0x6c0] sm:$0xff]
  %v3424 = vld [vmem:[%s6 + $0x6c8] sm:$0xff]
  %v3425 = vld [vmem:[%s6 + $0x6d0] sm:$0xff]
  %v3426 = vld [vmem:[%s6 + $0x6d8] sm:$0xff]
  %v3427 = vld [vmem:[%s6 + $0x6e0] sm:$0xff]
  %v3428 = vld [vmem:[%s6 + $0x6e8] sm:$0xff]
  %v3429 = vld [vmem:[%s6 + $0x6f0] sm:$0xff]
  %v3430 = vld [vmem:[%s6 + $0x6f8] sm:$0xff]
  %v3431 = vld [vmem:[%s6 + $0x700] sm:$0xff]
  %v3432 = vld [vmem:[%s6 + $0x708] sm:$0xff]
  %v3433 = vld [vmem:[%s6 + $0x710] sm:$0xff]
  %v3434 = vld [vmem:[%s6 + $0x718] sm:$0xff]
  %v3435 = vld [vmem:[%s6 + $0x720] sm:$0xff]
  %v3436 = vld [vmem:[%s6 + $0x728] sm:$0xff]
  %v3437 = vld [vmem:[%s6 + $0x730] sm:$0xff]
  %v3438 = vld [vmem:[%s6 + $0x738] sm:$0xff]
  %v3439 = vld [vmem:[%s6 + $0x740] sm:$0xff]
  %v3440 = vld [vmem:[%s6 + $0x748] sm:$0xff]
  %v3441 = vld [vmem:[%s6 + $0x750] sm:$0xff]
  %v3442 = vld [vmem:[%s6 + $0x758] sm:$0xff]
  %v3443 = vld [vmem:[%s6 + $0x760] sm:$0xff]
  %v3444 = vld [vmem:[%s6 + $0x768] sm:$0xff]
  %v3445 = vld [vmem:[%s6 + $0x770] sm:$0xff]
  %v3446 = vld [vmem:[%s6 + $0x778] sm:$0xff]
  %v3447 = vld [vmem:[%s6 + $0x780] sm:$0xff]
  %v3448 = vld [vmem:[%s6 + $0x788] sm:$0xff]
  %v3449 = vld [vmem:[%s6 + $0x790] sm:$0xff]
  %v3450 = vld [vmem:[%s6 + $0x798] sm:$0xff]
  %v3451 = vld [vmem:[%s6 + $0x7a0] sm:$0xff]
  %v3452 = vld [vmem:[%s6 + $0x7a8] sm:$0xff]
  %v3453 = vld [vmem:[%s6 + $0x7b0] sm:$0xff]
  %v3454 = vld [vmem:[%s6 + $0x7b8] sm:$0xff]
  %v3455 = vld [vmem:[%s6 + $0x7c0] sm:$0xff]
  %v3456 = vld [vmem:[%s6 + $0x7c8] sm:$0xff]
  %v3457 = vld [vmem:[%s6 + $0x7d0] sm:$0xff]
  %v3458 = vld [vmem:[%s6 + $0x7d8] sm:$0xff]
  %v3459 = vld [vmem:[%s6 + $0x7e0] sm:$0xff]
  %v3460 = vld [vmem:[%s6 + $0x7e8] sm:$0xff]
  %v3461 = vld [vmem:[%s6 + $0x7f0] sm:$0xff]
  %v3462 = vld [vmem:[%s6 + $0x7f8] sm:$0xff]
  %v3463 = vld [vmem:[%s6 + $0x800] sm:$0xff]
  %v3464 = vld [vmem:[%s6 + $0x808] sm:$0xff]
  %v3465 = vld [vmem:[%s6 + $0x810] sm:$0xff]
  %v3466 = vld [vmem:[%s6 + $0x818] sm:$0xff]
  %v3467 = vld [vmem:[%s6 + $0x820] sm:$0xff]
  %v3468 = vld [vmem:[%s6 + $0x828] sm:$0xff]
  %v3469 = vld [vmem:[%s6 + $0x830] sm:$0xff]
  %v3470 = vld [vmem:[%s6 + $0x838] sm:$0xff]
  %v3471 = vld [vmem:[%s6 + $0x840] sm:$0xff]
  %v3472 = vld [vmem:[%s6 + $0x848] sm:$0xff]
  %v3473 = vld [vmem:[%s6 + $0x850] sm:$0xff]
  %v3474 = vld [vmem:[%s6 + $0x858] sm:$0xff]
  %v3475 = vld [vmem:[%s6 + $0x860] sm:$0xff]
  %v3476 = vld [vmem:[%s6 + $0x868] sm:$0xff]
  %v3477 = vld [vmem:[%s6 + $0x870] sm:$0xff]
  %v3478 = vld [vmem:[%s6 + $0x878] sm:$0xff]
  %v3479 = vld [vmem:[%s6 + $0x880] sm:$0xff]
  %v3480 = vld [vmem:[%s6 + $0x888] sm:$0xff]
  %v3481 = vld [vmem:[%s6 + $0x890] sm:$0xff]
  %v3482 = vld [vmem:[%s6 + $0x898] sm:$0xff]
  %v3483 = vld [vmem:[%s6 + $0x8a0] sm:$0xff]
  %v3484 = vld [vmem:[%s6 + $0x8a8] sm:$0xff]
  %v3485 = vld [vmem:[%s6 + $0x8b0] sm:$0xff]
  %v3486 = vld [vmem:[%s6 + $0x8b8] sm:$0xff]
  %v3487 = vld [vmem:[%s6 + $0x8c0] sm:$0xff]
  %v3488 = vld [vmem:[%s6 + $0x8c8] sm:$0xff]
  %v3489 = vld [vmem:[%s6 + $0x8d0] sm:$0xff]
  %v3490 = vld [vmem:[%s6 + $0x8d8] sm:$0xff]
  %v3491 = vld [vmem:[%s6 + $0x8e0] sm:$0xff]
  %v3492 = vld [vmem:[%s6 + $0x8e8] sm:$0xff]
  %v3493 = vld [vmem:[%s6 + $0x8f0] sm:$0xff]
  %v3494 = vld [vmem:[%s6 + $0x8f8] sm:$0xff]
  %v3495 = vld [vmem:[%s6 + $0x900] sm:$0xff]
  %v3496 = vld [vmem:[%s6 + $0x908] sm:$0xff]
  %v3497 = vld [vmem:[%s6 + $0x910] sm:$0xff]
  %v3498 = vld [vmem:[%s6 + $0x918] sm:$0xff]
  %v3499 = vld [vmem:[%s6 + $0x920] sm:$0xff]
  %v3500 = vld [vmem:[%s6 + $0x928] sm:$0xff]
  %v3501 = vld [vmem:[%s6 + $0x930] sm:$0xff]
  %v3502 = vld [vmem:[%s6 + $0x938] sm:$0xff]
  %v3503 = vld [vmem:[%s6 + $0x940] sm:$0xff]
  %v3504 = vld [vmem:[%s6 + $0x948] sm:$0xff]
  %v3505 = vld [vmem:[%s6 + $0x950] sm:$0xff]
  %v3506 = vld [vmem:[%s6 + $0x958] sm:$0xff]
  %v3507 = vld [vmem:[%s6 + $0x960] sm:$0xff]
  %v3508 = vld [vmem:[%s6 + $0x968] sm:$0xff]
  %v3509 = vld [vmem:[%s6 + $0x970] sm:$0xff]
  %v3510 = vld [vmem:[%s6 + $0x978] sm:$0xff]
  %v3511 = vld [vmem:[%s6 + $0x980] sm:$0xff]
  %v3512 = vld [vmem:[%s6 + $0x988] sm:$0xff]
  %v3513 = vld [vmem:[%s6 + $0x990] sm:$0xff]
  %v3514 = vld [vmem:[%s6 + $0x998] sm:$0xff]
  %v3515 = vld [vmem:[%s6 + $0x9a0] sm:$0xff]
  %v3516 = vld [vmem:[%s6 + $0x9a8] sm:$0xff]
  %v3517 = vld [vmem:[%s6 + $0x9b0] sm:$0xff]
  %v3518 = vld [vmem:[%s6 + $0x9b8] sm:$0xff]
  %v3519 = vld [vmem:[%s6 + $0x9c0] sm:$0xff]
  %v3520 = vld [vmem:[%s6 + $0x9c8] sm:$0xff]
  %v3521 = vld [vmem:[%s6 + $0x9d0] sm:$0xff]
  %v3522 = vld [vmem:[%s6 + $0x9d8] sm:$0xff]
  %v3523 = vld [vmem:[%s6 + $0x9e0] sm:$0xff]
  %v3524 = vld [vmem:[%s6 + $0x9e8] sm:$0xff]
  %v3525 = vld [vmem:[%s6 + $0x9f0] sm:$0xff]
  %v3526 = vld [vmem:[%s6 + $0x9f8] sm:$0xff]
  %v3527 = vld [vmem:[%s6 + $0xa00] sm:$0xff]
  %v3528 = vld [vmem:[%s6 + $0xa08] sm:$0xff]
  %v3529 = vld [vmem:[%s6 + $0xa10] sm:$0xff]
  %v3530 = vld [vmem:[%s6 + $0xa18] sm:$0xff]
  %v3531 = vld [vmem:[%s6 + $0xa20] sm:$0xff]
  %v3532 = vld [vmem:[%s6 + $0xa28] sm:$0xff]
  %v3533 = vld [vmem:[%s6 + $0xa30] sm:$0xff]
  %v3534 = vld [vmem:[%s6 + $0xa38] sm:$0xff]
  %v3535 = vld [vmem:[%s6 + $0xa40] sm:$0xff]
  %v3536 = vld [vmem:[%s6 + $0xa48] sm:$0xff]
  %v3537 = vld [vmem:[%s6 + $0xa50] sm:$0xff]
  %v3538 = vld [vmem:[%s6 + $0xa58] sm:$0xff]
  %v3539 = vld [vmem:[%s6 + $0xa60] sm:$0xff]
  %v3540 = vld [vmem:[%s6 + $0xa68] sm:$0xff]
  %v3541 = vld [vmem:[%s6 + $0xa70] sm:$0xff]
  %v3542 = vld [vmem:[%s6 + $0xa78] sm:$0xff]
  %v3543 = vld [vmem:[%s6 + $0xa80] sm:$0xff]
  %v3544 = vld [vmem:[%s6 + $0xa88] sm:$0xff]
  %v3545 = vld [vmem:[%s6 + $0xa90] sm:$0xff]
  %v3546 = vld [vmem:[%s6 + $0xa98] sm:$0xff]
  %v3547 = vld [vmem:[%s6 + $0xaa0] sm:$0xff]
  %v3548 = vld [vmem:[%s6 + $0xaa8] sm:$0xff]
  %v3549 = vld [vmem:[%s6 + $0xab0] sm:$0xff]
  %v3550 = vld [vmem:[%s6 + $0xab8] sm:$0xff]
  %v3551 = vld [vmem:[%s6 + $0xac0] sm:$0xff]
  %v3552 = vld [vmem:[%s6 + $0xac8] sm:$0xff]
  %v3553 = vld [vmem:[%s6 + $0xad0] sm:$0xff]
  %v3554 = vld [vmem:[%s6 + $0xad8] sm:$0xff]
  %v3555 = vld [vmem:[%s6 + $0xae0] sm:$0xff]
  %v3556 = vld [vmem:[%s6 + $0xae8] sm:$0xff]
  %v3557 = vld [vmem:[%s6 + $0xaf0] sm:$0xff]
  %v3558 = vld [vmem:[%s6 + $0xaf8] sm:$0xff]
  %v3559 = vld [vmem:[%s6 + $0xb00] sm:$0xff]
  %v3560 = vld [vmem:[%s6 + $0xb08] sm:$0xff]
  %v3561 = vld [vmem:[%s6 + $0xb10] sm:$0xff]
  %v3562 = vld [vmem:[%s6 + $0xb18] sm:$0xff]
  %v3563 = vld [vmem:[%s6 + $0xb20] sm:$0xff]
  %v3564 = vld [vmem:[%s6 + $0xb28] sm:$0xff]
  %v3565 = vld [vmem:[%s6 + $0xb30] sm:$0xff]
  %v3566 = vld [vmem:[%s6 + $0xb38] sm:$0xff]
  %v3567 = vld [vmem:[%s6 + $0xb40] sm:$0xff]
  %v3568 = vld [vmem:[%s6 + $0xb48] sm:$0xff]
  %v3569 = vld [vmem:[%s6 + $0xb50] sm:$0xff]
  %v3570 = vld [vmem:[%s6 + $0xb58] sm:$0xff]
  %v3571 = vld [vmem:[%s6 + $0xb60] sm:$0xff]
  %v3572 = vld [vmem:[%s6 + $0xb68] sm:$0xff]
  %v3573 = vld [vmem:[%s6 + $0xb70] sm:$0xff]
  %v3574 = vld [vmem:[%s6 + $0xb78] sm:$0xff]
  %v3575 = vld [vmem:[%s6 + $0xb80] sm:$0xff]
  %v3576 = vld [vmem:[%s6 + $0xb88] sm:$0xff]
  %v3577 = vld [vmem:[%s6 + $0xb90] sm:$0xff]
  %v3578 = vld [vmem:[%s6 + $0xb98] sm:$0xff]
  %v3579 = vld [vmem:[%s6 + $0xba0] sm:$0xff]
  %v3580 = vld [vmem:[%s6 + $0xba8] sm:$0xff]
  %v3581 = vld [vmem:[%s6 + $0xbb0] sm:$0xff]
  %v3582 = vld [vmem:[%s6 + $0xbb8] sm:$0xff]
  %v3583 = vld [vmem:[%s6 + $0xbc0] sm:$0xff]
  %v3584 = vld [vmem:[%s6 + $0xbc8] sm:$0xff]
  %v3585 = vld [vmem:[%s6 + $0xbd0] sm:$0xff]
  %v3586 = vld [vmem:[%s6 + $0xbd8] sm:$0xff]
  %v3587 = vld [vmem:[%s6 + $0xbe0] sm:$0xff]
  %v3588 = vld [vmem:[%s6 + $0xbe8] sm:$0xff]
  %v3589 = vld [vmem:[%s6 + $0xbf0] sm:$0xff]
  %v3590 = vld [vmem:[%s6 + $0xbf8] sm:$0xff]
  %v3975 = vunpack.c.l.b16 %v3207
  %v3976 = vunpack.c.h.b16 %v3207
  %v3977 = vunpack.c.l.b16 %v3208
  %v3978 = vunpack.c.h.b16 %v3208
  %v3979 = vunpack.c.l.b16 %v3209
  %v3980 = vunpack.c.h.b16 %v3209
  %v3981 = vunpack.c.l.b16 %v3210
  %v3982 = vunpack.c.h.b16 %v3210
  %v3983 = vunpack.c.l.b16 %v3211
  %v3984 = vunpack.c.h.b16 %v3211
  %v3985 = vunpack.c.l.b16 %v3212
  %v3986 = vunpack.c.h.b16 %v3212
  %v3987 = vunpack.c.l.b16 %v3213
  %v3988 = vunpack.c.h.b16 %v3213
  %v3989 = vunpack.c.l.b16 %v3214
  %v3990 = vunpack.c.h.b16 %v3214
  %v3991 = vunpack.c.l.b16 %v3215
  %v3992 = vunpack.c.h.b16 %v3215
  %v3993 = vunpack.c.l.b16 %v3216
  %v3994 = vunpack.c.h.b16 %v3216
  %v3995 = vunpack.c.l.b16 %v3217
  %v3996 = vunpack.c.h.b16 %v3217
  %v3997 = vunpack.c.l.b16 %v3218
  %v3998 = vunpack.c.h.b16 %v3218
  %v3999 = vunpack.c.l.b16 %v3219
  %v4000 = vunpack.c.h.b16 %v3219
  %v4001 = vunpack.c.l.b16 %v3220
  %v4002 = vunpack.c.h.b16 %v3220
  %v4003 = vunpack.c.l.b16 %v3221
  %v4004 = vunpack.c.h.b16 %v3221
  %v4005 = vunpack.c.l.b16 %v3222
  %v4006 = vunpack.c.h.b16 %v3222
  %v4007 = vunpack.c.l.b16 %v3223
  %v4008 = vunpack.c.h.b16 %v3223
  %v4009 = vunpack.c.l.b16 %v3224
  %v4010 = vunpack.c.h.b16 %v3224
  %v4011 = vunpack.c.l.b16 %v3225
  %v4012 = vunpack.c.h.b16 %v3225
  %v4013 = vunpack.c.l.b16 %v3226
  %v4014 = vunpack.c.h.b16 %v3226
  %v4015 = vunpack.c.l.b16 %v3227
  %v4016 = vunpack.c.h.b16 %v3227
  %v4017 = vunpack.c.l.b16 %v3228
  %v4018 = vunpack.c.h.b16 %v3228
  %v4019 = vunpack.c.l.b16 %v3229
  %v4020 = vunpack.c.h.b16 %v3229
  %v4021 = vunpack.c.l.b16 %v3230
  %v4022 = vunpack.c.h.b16 %v3230
  %v4023 = vunpack.c.l.b16 %v3231
  %v4024 = vunpack.c.h.b16 %v3231
  %v4025 = vunpack.c.l.b16 %v3232
  %v4026 = vunpack.c.h.b16 %v3232
  %v4027 = vunpack.c.l.b16 %v3233
  %v4028 = vunpack.c.h.b16 %v3233
  %v4029 = vunpack.c.l.b16 %v3234
  %v4030 = vunpack.c.h.b16 %v3234
  %v4031 = vunpack.c.l.b16 %v3235
  %v4032 = vunpack.c.h.b16 %v3235
  %v4033 = vunpack.c.l.b16 %v3236
  %v4034 = vunpack.c.h.b16 %v3236
  %v4035 = vunpack.c.l.b16 %v3237
  %v4036 = vunpack.c.h.b16 %v3237
  %v4037 = vunpack.c.l.b16 %v3238
  %v4038 = vunpack.c.h.b16 %v3238
  %v4039 = vunpack.c.l.b16 %v3239
  %v4040 = vunpack.c.h.b16 %v3239
  %v4041 = vunpack.c.l.b16 %v3240
  %v4042 = vunpack.c.h.b16 %v3240
  %v4043 = vunpack.c.l.b16 %v3241
  %v4044 = vunpack.c.h.b16 %v3241
  %v4045 = vunpack.c.l.b16 %v3242
  %v4046 = vunpack.c.h.b16 %v3242
  %v4047 = vunpack.c.l.b16 %v3243
  %v4048 = vunpack.c.h.b16 %v3243
  %v4049 = vunpack.c.l.b16 %v3244
  %v4050 = vunpack.c.h.b16 %v3244
  %v4051 = vunpack.c.l.b16 %v3245
  %v4052 = vunpack.c.h.b16 %v3245
  %v4053 = vunpack.c.l.b16 %v3246
  %v4054 = vunpack.c.h.b16 %v3246
  %v4055 = vunpack.c.l.b16 %v3247
  %v4056 = vunpack.c.h.b16 %v3247
  %v4057 = vunpack.c.l.b16 %v3248
  %v4058 = vunpack.c.h.b16 %v3248
  %v4059 = vunpack.c.l.b16 %v3249
  %v4060 = vunpack.c.h.b16 %v3249
  %v4061 = vunpack.c.l.b16 %v3250
  %v4062 = vunpack.c.h.b16 %v3250
  %v4063 = vunpack.c.l.b16 %v3251
  %v4064 = vunpack.c.h.b16 %v3251
  %v4065 = vunpack.c.l.b16 %v3252
  %v4066 = vunpack.c.h.b16 %v3252
  %v4067 = vunpack.c.l.b16 %v3253
  %v4068 = vunpack.c.h.b16 %v3253
  %v4069 = vunpack.c.l.b16 %v3254
  %v4070 = vunpack.c.h.b16 %v3254
  %v4071 = vunpack.c.l.b16 %v3255
  %v4072 = vunpack.c.h.b16 %v3255
  %v4073 = vunpack.c.l.b16 %v3256
  %v4074 = vunpack.c.h.b16 %v3256
  %v4075 = vunpack.c.l.b16 %v3257
  %v4076 = vunpack.c.h.b16 %v3257
  %v4077 = vunpack.c.l.b16 %v3258
  %v4078 = vunpack.c.h.b16 %v3258
  %v4079 = vunpack.c.l.b16 %v3259
  %v4080 = vunpack.c.h.b16 %v3259
  %v4081 = vunpack.c.l.b16 %v3260
  %v4082 = vunpack.c.h.b16 %v3260
  %v4083 = vunpack.c.l.b16 %v3261
  %v4084 = vunpack.c.h.b16 %v3261
  %v4085 = vunpack.c.l.b16 %v3262
  %v4086 = vunpack.c.h.b16 %v3262
  %v4087 = vunpack.c.l.b16 %v3263
  %v4088 = vunpack.c.h.b16 %v3263
  %v4089 = vunpack.c.l.b16 %v3264
  %v4090 = vunpack.c.h.b16 %v3264
  %v4091 = vunpack.c.l.b16 %v3265
  %v4092 = vunpack.c.h.b16 %v3265
  %v4093 = vunpack.c.l.b16 %v3266
  %v4094 = vunpack.c.h.b16 %v3266
  %v4095 = vunpack.c.l.b16 %v3267
  %v4096 = vunpack.c.h.b16 %v3267
  %v4097 = vunpack.c.l.b16 %v3268
  %v4098 = vunpack.c.h.b16 %v3268
  %v4099 = vunpack.c.l.b16 %v3269
  %v4100 = vunpack.c.h.b16 %v3269
  %v4101 = vunpack.c.l.b16 %v3270
  %v4102 = vunpack.c.h.b16 %v3270
  %v4103 = vunpack.c.l.b16 %v3271
  %v4104 = vunpack.c.h.b16 %v3271
  %v4105 = vunpack.c.l.b16 %v3272
  %v4106 = vunpack.c.h.b16 %v3272
  %v4107 = vunpack.c.l.b16 %v3273
  %v4108 = vunpack.c.h.b16 %v3273
  %v4109 = vunpack.c.l.b16 %v3274
  %v4110 = vunpack.c.h.b16 %v3274
  %v4111 = vunpack.c.l.b16 %v3275
  %v4112 = vunpack.c.h.b16 %v3275
  %v4113 = vunpack.c.l.b16 %v3276
  %v4114 = vunpack.c.h.b16 %v3276
  %v4115 = vunpack.c.l.b16 %v3277
  %v4116 = vunpack.c.h.b16 %v3277
  %v4117 = vunpack.c.l.b16 %v3278
  %v4118 = vunpack.c.h.b16 %v3278
  %v4119 = vunpack.c.l.b16 %v3279
  %v4120 = vunpack.c.h.b16 %v3279
  %v4121 = vunpack.c.l.b16 %v3280
  %v4122 = vunpack.c.h.b16 %v3280
  %v4123 = vunpack.c.l.b16 %v3281
  %v4124 = vunpack.c.h.b16 %v3281
  %v4125 = vunpack.c.l.b16 %v3282
  %v4126 = vunpack.c.h.b16 %v3282
  %v4127 = vunpack.c.l.b16 %v3283
  %v4128 = vunpack.c.h.b16 %v3283
  %v4129 = vunpack.c.l.b16 %v3284
  %v4130 = vunpack.c.h.b16 %v3284
  %v4131 = vunpack.c.l.b16 %v3285
  %v4132 = vunpack.c.h.b16 %v3285
  %v4133 = vunpack.c.l.b16 %v3286
  %v4134 = vunpack.c.h.b16 %v3286
  %v4135 = vunpack.c.l.b16 %v3287
  %v4136 = vunpack.c.h.b16 %v3287
  %v4137 = vunpack.c.l.b16 %v3288
  %v4138 = vunpack.c.h.b16 %v3288
  %v4139 = vunpack.c.l.b16 %v3289
  %v4140 = vunpack.c.h.b16 %v3289
  %v4141 = vunpack.c.l.b16 %v3290
  %v4142 = vunpack.c.h.b16 %v3290
  %v4143 = vunpack.c.l.b16 %v3291
  %v4144 = vunpack.c.h.b16 %v3291
  %v4145 = vunpack.c.l.b16 %v3292
  %v4146 = vunpack.c.h.b16 %v3292
  %v4147 = vunpack.c.l.b16 %v3293
  %v4148 = vunpack.c.h.b16 %v3293
  %v4149 = vunpack.c.l.b16 %v3294
  %v4150 = vunpack.c.h.b16 %v3294
  %v4151 = vunpack.c.l.b16 %v3295
  %v4152 = vunpack.c.h.b16 %v3295
  %v4153 = vunpack.c.l.b16 %v3296
  %v4154 = vunpack.c.h.b16 %v3296
  %v4155 = vunpack.c.l.b16 %v3297
  %v4156 = vunpack.c.h.b16 %v3297
  %v4157 = vunpack.c.l.b16 %v3298
  %v4158 = vunpack.c.h.b16 %v3298
  %v4159 = vunpack.c.l.b16 %v3299
  %v4160 = vunpack.c.h.b16 %v3299
  %v4161 = vunpack.c.l.b16 %v3300
  %v4162 = vunpack.c.h.b16 %v3300
  %v4163 = vunpack.c.l.b16 %v3301
  %v4164 = vunpack.c.h.b16 %v3301
  %v4165 = vunpack.c.l.b16 %v3302
  %v4166 = vunpack.c.h.b16 %v3302
  %v4167 = vunpack.c.l.b16 %v3303
  %v4168 = vunpack.c.h.b16 %v3303
  %v4169 = vunpack.c.l.b16 %v3304
  %v4170 = vunpack.c.h.b16 %v3304
  %v4171 = vunpack.c.l.b16 %v3305
  %v4172 = vunpack.c.h.b16 %v3305
  %v4173 = vunpack.c.l.b16 %v3306
  %v4174 = vunpack.c.h.b16 %v3306
  %v4175 = vunpack.c.l.b16 %v3307
  %v4176 = vunpack.c.h.b16 %v3307
  %v4177 = vunpack.c.l.b16 %v3308
  %v4178 = vunpack.c.h.b16 %v3308
  %v4179 = vunpack.c.l.b16 %v3309
  %v4180 = vunpack.c.h.b16 %v3309
  %v4181 = vunpack.c.l.b16 %v3310
  %v4182 = vunpack.c.h.b16 %v3310
  %v4183 = vunpack.c.l.b16 %v3311
  %v4184 = vunpack.c.h.b16 %v3311
  %v4185 = vunpack.c.l.b16 %v3312
  %v4186 = vunpack.c.h.b16 %v3312
  %v4187 = vunpack.c.l.b16 %v3313
  %v4188 = vunpack.c.h.b16 %v3313
  %v4189 = vunpack.c.l.b16 %v3314
  %v4190 = vunpack.c.h.b16 %v3314
  %v4191 = vunpack.c.l.b16 %v3315
  %v4192 = vunpack.c.h.b16 %v3315
  %v4193 = vunpack.c.l.b16 %v3316
  %v4194 = vunpack.c.h.b16 %v3316
  %v4195 = vunpack.c.l.b16 %v3317
  %v4196 = vunpack.c.h.b16 %v3317
  %v4197 = vunpack.c.l.b16 %v3318
  %v4198 = vunpack.c.h.b16 %v3318
  %v4199 = vunpack.c.l.b16 %v3319
  %v4200 = vunpack.c.h.b16 %v3319
  %v4201 = vunpack.c.l.b16 %v3320
  %v4202 = vunpack.c.h.b16 %v3320
  %v4203 = vunpack.c.l.b16 %v3321
  %v4204 = vunpack.c.h.b16 %v3321
  %v4205 = vunpack.c.l.b16 %v3322
  %v4206 = vunpack.c.h.b16 %v3322
  %v4207 = vunpack.c.l.b16 %v3323
  %v4208 = vunpack.c.h.b16 %v3323
  %v4209 = vunpack.c.l.b16 %v3324
  %v4210 = vunpack.c.h.b16 %v3324
  %v4211 = vunpack.c.l.b16 %v3325
  %v4212 = vunpack.c.h.b16 %v3325
  %v4213 = vunpack.c.l.b16 %v3326
  %v4214 = vunpack.c.h.b16 %v3326
  %v4215 = vunpack.c.l.b16 %v3327
  %v4216 = vunpack.c.h.b16 %v3327
  %v4217 = vunpack.c.l.b16 %v3328
  %v4218 = vunpack.c.h.b16 %v3328
  %v4219 = vunpack.c.l.b16 %v3329
  %v4220 = vunpack.c.h.b16 %v3329
  %v4221 = vunpack.c.l.b16 %v3330
  %v4222 = vunpack.c.h.b16 %v3330
  %v4223 = vunpack.c.l.b16 %v3331
  %v4224 = vunpack.c.h.b16 %v3331
  %v4225 = vunpack.c.l.b16 %v3332
  %v4226 = vunpack.c.h.b16 %v3332
  %v4227 = vunpack.c.l.b16 %v3333
  %v4228 = vunpack.c.h.b16 %v3333
  %v4229 = vunpack.c.l.b16 %v3334
  %v4230 = vunpack.c.h.b16 %v3334
  %v4231 = vunpack.c.l.b16 %v3335
  %v4232 = vunpack.c.h.b16 %v3335
  %v4233 = vunpack.c.l.b16 %v3336
  %v4234 = vunpack.c.h.b16 %v3336
  %v4235 = vunpack.c.l.b16 %v3337
  %v4236 = vunpack.c.h.b16 %v3337
  %v4237 = vunpack.c.l.b16 %v3338
  %v4238 = vunpack.c.h.b16 %v3338
  %v4239 = vunpack.c.l.b16 %v3339
  %v4240 = vunpack.c.h.b16 %v3339
  %v4241 = vunpack.c.l.b16 %v3340
  %v4242 = vunpack.c.h.b16 %v3340
  %v4243 = vunpack.c.l.b16 %v3341
  %v4244 = vunpack.c.h.b16 %v3341
  %v4245 = vunpack.c.l.b16 %v3342
  %v4246 = vunpack.c.h.b16 %v3342
  %v4247 = vunpack.c.l.b16 %v3343
  %v4248 = vunpack.c.h.b16 %v3343
  %v4249 = vunpack.c.l.b16 %v3344
  %v4250 = vunpack.c.h.b16 %v3344
  %v4251 = vunpack.c.l.b16 %v3345
  %v4252 = vunpack.c.h.b16 %v3345
  %v4253 = vunpack.c.l.b16 %v3346
  %v4254 = vunpack.c.h.b16 %v3346
  %v4255 = vunpack.c.l.b16 %v3347
  %v4256 = vunpack.c.h.b16 %v3347
  %v4257 = vunpack.c.l.b16 %v3348
  %v4258 = vunpack.c.h.b16 %v3348
  %v4259 = vunpack.c.l.b16 %v3349
  %v4260 = vunpack.c.h.b16 %v3349
  %v4261 = vunpack.c.l.b16 %v3350
  %v4262 = vunpack.c.h.b16 %v3350
  %v4263 = vunpack.c.l.b16 %v3351
  %v4264 = vunpack.c.h.b16 %v3351
  %v4265 = vunpack.c.l.b16 %v3352
  %v4266 = vunpack.c.h.b16 %v3352
  %v4267 = vunpack.c.l.b16 %v3353
  %v4268 = vunpack.c.h.b16 %v3353
  %v4269 = vunpack.c.l.b16 %v3354
  %v4270 = vunpack.c.h.b16 %v3354
  %v4271 = vunpack.c.l.b16 %v3355
  %v4272 = vunpack.c.h.b16 %v3355
  %v4273 = vunpack.c.l.b16 %v3356
  %v4274 = vunpack.c.h.b16 %v3356
  %v4275 = vunpack.c.l.b16 %v3357
  %v4276 = vunpack.c.h.b16 %v3357
  %v4277 = vunpack.c.l.b16 %v3358
  %v4278 = vunpack.c.h.b16 %v3358
  %v4279 = vunpack.c.l.b16 %v3359
  %v4280 = vunpack.c.h.b16 %v3359
  %v4281 = vunpack.c.l.b16 %v3360
  %v4282 = vunpack.c.h.b16 %v3360
  %v4283 = vunpack.c.l.b16 %v3361
  %v4284 = vunpack.c.h.b16 %v3361
  %v4285 = vunpack.c.l.b16 %v3362
  %v4286 = vunpack.c.h.b16 %v3362
  %v4287 = vunpack.c.l.b16 %v3363
  %v4288 = vunpack.c.h.b16 %v3363
  %v4289 = vunpack.c.l.b16 %v3364
  %v4290 = vunpack.c.h.b16 %v3364
  %v4291 = vunpack.c.l.b16 %v3365
  %v4292 = vunpack.c.h.b16 %v3365
  %v4293 = vunpack.c.l.b16 %v3366
  %v4294 = vunpack.c.h.b16 %v3366
  %v4295 = vunpack.c.l.b16 %v3367
  %v4296 = vunpack.c.h.b16 %v3367
  %v4297 = vunpack.c.l.b16 %v3368
  %v4298 = vunpack.c.h.b16 %v3368
  %v4299 = vunpack.c.l.b16 %v3369
  %v4300 = vunpack.c.h.b16 %v3369
  %v4301 = vunpack.c.l.b16 %v3370
  %v4302 = vunpack.c.h.b16 %v3370
  %v4303 = vunpack.c.l.b16 %v3371
  %v4304 = vunpack.c.h.b16 %v3371
  %v4305 = vunpack.c.l.b16 %v3372
  %v4306 = vunpack.c.h.b16 %v3372
  %v4307 = vunpack.c.l.b16 %v3373
  %v4308 = vunpack.c.h.b16 %v3373
  %v4309 = vunpack.c.l.b16 %v3374
  %v4310 = vunpack.c.h.b16 %v3374
  %v4311 = vunpack.c.l.b16 %v3375
  %v4312 = vunpack.c.h.b16 %v3375
  %v4313 = vunpack.c.l.b16 %v3376
  %v4314 = vunpack.c.h.b16 %v3376
  %v4315 = vunpack.c.l.b16 %v3377
  %v4316 = vunpack.c.h.b16 %v3377
  %v4317 = vunpack.c.l.b16 %v3378
  %v4318 = vunpack.c.h.b16 %v3378
  %v4319 = vunpack.c.l.b16 %v3379
  %v4320 = vunpack.c.h.b16 %v3379
  %v4321 = vunpack.c.l.b16 %v3380
  %v4322 = vunpack.c.h.b16 %v3380
  %v4323 = vunpack.c.l.b16 %v3381
  %v4324 = vunpack.c.h.b16 %v3381
  %v4325 = vunpack.c.l.b16 %v3382
  %v4326 = vunpack.c.h.b16 %v3382
  %v4327 = vunpack.c.l.b16 %v3383
  %v4328 = vunpack.c.h.b16 %v3383
  %v4329 = vunpack.c.l.b16 %v3384
  %v4330 = vunpack.c.h.b16 %v3384
  %v4331 = vunpack.c.l.b16 %v3385
  %v4332 = vunpack.c.h.b16 %v3385
  %v4333 = vunpack.c.l.b16 %v3386
  %v4334 = vunpack.c.h.b16 %v3386
  %v4335 = vunpack.c.l.b16 %v3387
  %v4336 = vunpack.c.h.b16 %v3387
  %v4337 = vunpack.c.l.b16 %v3388
  %v4338 = vunpack.c.h.b16 %v3388
  %v4339 = vunpack.c.l.b16 %v3389
  %v4340 = vunpack.c.h.b16 %v3389
  %v4341 = vunpack.c.l.b16 %v3390
  %v4342 = vunpack.c.h.b16 %v3390
  %v4343 = vunpack.c.l.b16 %v3391
  %v4344 = vunpack.c.h.b16 %v3391
  %v4345 = vunpack.c.l.b16 %v3392
  %v4346 = vunpack.c.h.b16 %v3392
  %v4347 = vunpack.c.l.b16 %v3393
  %v4348 = vunpack.c.h.b16 %v3393
  %v4349 = vunpack.c.l.b16 %v3394
  %v4350 = vunpack.c.h.b16 %v3394
  %v4351 = vunpack.c.l.b16 %v3395
  %v4352 = vunpack.c.h.b16 %v3395
  %v4353 = vunpack.c.l.b16 %v3396
  %v4354 = vunpack.c.h.b16 %v3396
  %v4355 = vunpack.c.l.b16 %v3397
  %v4356 = vunpack.c.h.b16 %v3397
  %v4357 = vunpack.c.l.b16 %v3398
  %v4358 = vunpack.c.h.b16 %v3398
  %v4359 = vunpack.c.l.b16 %v3399
  %v4360 = vunpack.c.h.b16 %v3399
  %v4361 = vunpack.c.l.b16 %v3400
  %v4362 = vunpack.c.h.b16 %v3400
  %v4363 = vunpack.c.l.b16 %v3401
  %v4364 = vunpack.c.h.b16 %v3401
  %v4365 = vunpack.c.l.b16 %v3402
  %v4366 = vunpack.c.h.b16 %v3402
  %v4367 = vunpack.c.l.b16 %v3403
  %v4368 = vunpack.c.h.b16 %v3403
  %v4369 = vunpack.c.l.b16 %v3404
  %v4370 = vunpack.c.h.b16 %v3404
  %v4371 = vunpack.c.l.b16 %v3405
  %v4372 = vunpack.c.h.b16 %v3405
  %v4373 = vunpack.c.l.b16 %v3406
  %v4374 = vunpack.c.h.b16 %v3406
  %v4375 = vunpack.c.l.b16 %v3407
  %v4376 = vunpack.c.h.b16 %v3407
  %v4377 = vunpack.c.l.b16 %v3408
  %v4378 = vunpack.c.h.b16 %v3408
  %v4379 = vunpack.c.l.b16 %v3409
  %v4380 = vunpack.c.h.b16 %v3409
  %v4381 = vunpack.c.l.b16 %v3410
  %v4382 = vunpack.c.h.b16 %v3410
  %v4383 = vunpack.c.l.b16 %v3411
  %v4384 = vunpack.c.h.b16 %v3411
  %v4385 = vunpack.c.l.b16 %v3412
  %v4386 = vunpack.c.h.b16 %v3412
  %v4387 = vunpack.c.l.b16 %v3413
  %v4388 = vunpack.c.h.b16 %v3413
  %v4389 = vunpack.c.l.b16 %v3414
  %v4390 = vunpack.c.h.b16 %v3414
  %v4391 = vunpack.c.l.b16 %v3415
  %v4392 = vunpack.c.h.b16 %v3415
  %v4393 = vunpack.c.l.b16 %v3416
  %v4394 = vunpack.c.h.b16 %v3416
  %v4395 = vunpack.c.l.b16 %v3417
  %v4396 = vunpack.c.h.b16 %v3417
  %v4397 = vunpack.c.l.b16 %v3418
  %v4398 = vunpack.c.h.b16 %v3418
  %v4399 = vunpack.c.l.b16 %v3419
  %v4400 = vunpack.c.h.b16 %v3419
  %v4401 = vunpack.c.l.b16 %v3420
  %v4402 = vunpack.c.h.b16 %v3420
  %v4403 = vunpack.c.l.b16 %v3421
  %v4404 = vunpack.c.h.b16 %v3421
  %v4405 = vunpack.c.l.b16 %v3422
  %v4406 = vunpack.c.h.b16 %v3422
  %v4407 = vunpack.c.l.b16 %v3423
  %v4408 = vunpack.c.h.b16 %v3423
  %v4409 = vunpack.c.l.b16 %v3424
  %v4410 = vunpack.c.h.b16 %v3424
  %v4411 = vunpack.c.l.b16 %v3425
  %v4412 = vunpack.c.h.b16 %v3425
  %v4413 = vunpack.c.l.b16 %v3426
  %v4414 = vunpack.c.h.b16 %v3426
  %v4415 = vunpack.c.l.b16 %v3427
  %v4416 = vunpack.c.h.b16 %v3427
  %v4417 = vunpack.c.l.b16 %v3428
  %v4418 = vunpack.c.h.b16 %v3428
  %v4419 = vunpack.c.l.b16 %v3429
  %v4420 = vunpack.c.h.b16 %v3429
  %v4421 = vunpack.c.l.b16 %v3430
  %v4422 = vunpack.c.h.b16 %v3430
  %v4423 = vunpack.c.l.b16 %v3431
  %v4424 = vunpack.c.h.b16 %v3431
  %v4425 = vunpack.c.l.b16 %v3432
  %v4426 = vunpack.c.h.b16 %v3432
  %v4427 = vunpack.c.l.b16 %v3433
  %v4428 = vunpack.c.h.b16 %v3433
  %v4429 = vunpack.c.l.b16 %v3434
  %v4430 = vunpack.c.h.b16 %v3434
  %v4431 = vunpack.c.l.b16 %v3435
  %v4432 = vunpack.c.h.b16 %v3435
  %v4433 = vunpack.c.l.b16 %v3436
  %v4434 = vunpack.c.h.b16 %v3436
  %v4435 = vunpack.c.l.b16 %v3437
  %v4436 = vunpack.c.h.b16 %v3437
  %v4437 = vunpack.c.l.b16 %v3438
  %v4438 = vunpack.c.h.b16 %v3438
  %v4439 = vunpack.c.l.b16 %v3439
  %v4440 = vunpack.c.h.b16 %v3439
  %v4441 = vunpack.c.l.b16 %v3440
  %v4442 = vunpack.c.h.b16 %v3440
  %v4443 = vunpack.c.l.b16 %v3441
  %v4444 = vunpack.c.h.b16 %v3441
  %v4445 = vunpack.c.l.b16 %v3442
  %v4446 = vunpack.c.h.b16 %v3442
  %v4447 = vunpack.c.l.b16 %v3443
  %v4448 = vunpack.c.h.b16 %v3443
  %v4449 = vunpack.c.l.b16 %v3444
  %v4450 = vunpack.c.h.b16 %v3444
  %v4451 = vunpack.c.l.b16 %v3445
  %v4452 = vunpack.c.h.b16 %v3445
  %v4453 = vunpack.c.l.b16 %v3446
  %v4454 = vunpack.c.h.b16 %v3446
  %v4455 = vunpack.c.l.b16 %v3447
  %v4456 = vunpack.c.h.b16 %v3447
  %v4457 = vunpack.c.l.b16 %v3448
  %v4458 = vunpack.c.h.b16 %v3448
  %v4459 = vunpack.c.l.b16 %v3449
  %v4460 = vunpack.c.h.b16 %v3449
  %v4461 = vunpack.c.l.b16 %v3450
  %v4462 = vunpack.c.h.b16 %v3450
  %v4463 = vunpack.c.l.b16 %v3451
  %v4464 = vunpack.c.h.b16 %v3451
  %v4465 = vunpack.c.l.b16 %v3452
  %v4466 = vunpack.c.h.b16 %v3452
  %v4467 = vunpack.c.l.b16 %v3453
  %v4468 = vunpack.c.h.b16 %v3453
  %v4469 = vunpack.c.l.b16 %v3454
  %v4470 = vunpack.c.h.b16 %v3454
  %v4471 = vunpack.c.l.b16 %v3455
  %v4472 = vunpack.c.h.b16 %v3455
  %v4473 = vunpack.c.l.b16 %v3456
  %v4474 = vunpack.c.h.b16 %v3456
  %v4475 = vunpack.c.l.b16 %v3457
  %v4476 = vunpack.c.h.b16 %v3457
  %v4477 = vunpack.c.l.b16 %v3458
  %v4478 = vunpack.c.h.b16 %v3458
  %v4479 = vunpack.c.l.b16 %v3459
  %v4480 = vunpack.c.h.b16 %v3459
  %v4481 = vunpack.c.l.b16 %v3460
  %v4482 = vunpack.c.h.b16 %v3460
  %v4483 = vunpack.c.l.b16 %v3461
  %v4484 = vunpack.c.h.b16 %v3461
  %v4485 = vunpack.c.l.b16 %v3462
  %v4486 = vunpack.c.h.b16 %v3462
  %v4487 = vunpack.c.l.b16 %v3463
  %v4488 = vunpack.c.h.b16 %v3463
  %v4489 = vunpack.c.l.b16 %v3464
  %v4490 = vunpack.c.h.b16 %v3464
  %v4491 = vunpack.c.l.b16 %v3465
  %v4492 = vunpack.c.h.b16 %v3465
  %v4493 = vunpack.c.l.b16 %v3466
  %v4494 = vunpack.c.h.b16 %v3466
  %v4495 = vunpack.c.l.b16 %v3467
  %v4496 = vunpack.c.h.b16 %v3467
  %v4497 = vunpack.c.l.b16 %v3468
  %v4498 = vunpack.c.h.b16 %v3468
  %v4499 = vunpack.c.l.b16 %v3469
  %v4500 = vunpack.c.h.b16 %v3469
  %v4501 = vunpack.c.l.b16 %v3470
  %v4502 = vunpack.c.h.b16 %v3470
  %v4503 = vunpack.c.l.b16 %v3471
  %v4504 = vunpack.c.h.b16 %v3471
  %v4505 = vunpack.c.l.b16 %v3472
  %v4506 = vunpack.c.h.b16 %v3472
  %v4507 = vunpack.c.l.b16 %v3473
  %v4508 = vunpack.c.h.b16 %v3473
  %v4509 = vunpack.c.l.b16 %v3474
  %v4510 = vunpack.c.h.b16 %v3474
  %v4511 = vunpack.c.l.b16 %v3475
  %v4512 = vunpack.c.h.b16 %v3475
  %v4513 = vunpack.c.l.b16 %v3476
  %v4514 = vunpack.c.h.b16 %v3476
  %v4515 = vunpack.c.l.b16 %v3477
  %v4516 = vunpack.c.h.b16 %v3477
  %v4517 = vunpack.c.l.b16 %v3478
  %v4518 = vunpack.c.h.b16 %v3478
  %v4519 = vunpack.c.l.b16 %v3479
  %v4520 = vunpack.c.h.b16 %v3479
  %v4521 = vunpack.c.l.b16 %v3480
  %v4522 = vunpack.c.h.b16 %v3480
  %v4523 = vunpack.c.l.b16 %v3481
  %v4524 = vunpack.c.h.b16 %v3481
  %v4525 = vunpack.c.l.b16 %v3482
  %v4526 = vunpack.c.h.b16 %v3482
  %v4527 = vunpack.c.l.b16 %v3483
  %v4528 = vunpack.c.h.b16 %v3483
  %v4529 = vunpack.c.l.b16 %v3484
  %v4530 = vunpack.c.h.b16 %v3484
  %v4531 = vunpack.c.l.b16 %v3485
  %v4532 = vunpack.c.h.b16 %v3485
  %v4533 = vunpack.c.l.b16 %v3486
  %v4534 = vunpack.c.h.b16 %v3486
  %v4535 = vunpack.c.l.b16 %v3487
  %v4536 = vunpack.c.h.b16 %v3487
  %v4537 = vunpack.c.l.b16 %v3488
  %v4538 = vunpack.c.h.b16 %v3488
  %v4539 = vunpack.c.l.b16 %v3489
  %v4540 = vunpack.c.h.b16 %v3489
  %v4541 = vunpack.c.l.b16 %v3490
  %v4542 = vunpack.c.h.b16 %v3490
  %v4543 = vunpack.c.l.b16 %v3491
  %v4544 = vunpack.c.h.b16 %v3491
  %v4545 = vunpack.c.l.b16 %v3492
  %v4546 = vunpack.c.h.b16 %v3492
  %v4547 = vunpack.c.l.b16 %v3493
  %v4548 = vunpack.c.h.b16 %v3493
  %v4549 = vunpack.c.l.b16 %v3494
  %v4550 = vunpack.c.h.b16 %v3494
  %v4551 = vunpack.c.l.b16 %v3495
  %v4552 = vunpack.c.h.b16 %v3495
  %v4553 = vunpack.c.l.b16 %v3496
  %v4554 = vunpack.c.h.b16 %v3496
  %v4555 = vunpack.c.l.b16 %v3497
  %v4556 = vunpack.c.h.b16 %v3497
  %v4557 = vunpack.c.l.b16 %v3498
  %v4558 = vunpack.c.h.b16 %v3498
  %v4559 = vunpack.c.l.b16 %v3499
  %v4560 = vunpack.c.h.b16 %v3499
  %v4561 = vunpack.c.l.b16 %v3500
  %v4562 = vunpack.c.h.b16 %v3500
  %v4563 = vunpack.c.l.b16 %v3501
  %v4564 = vunpack.c.h.b16 %v3501
  %v4565 = vunpack.c.l.b16 %v3502
  %v4566 = vunpack.c.h.b16 %v3502
  %v4567 = vunpack.c.l.b16 %v3503
  %v4568 = vunpack.c.h.b16 %v3503
  %v4569 = vunpack.c.l.b16 %v3504
  %v4570 = vunpack.c.h.b16 %v3504
  %v4571 = vunpack.c.l.b16 %v3505
  %v4572 = vunpack.c.h.b16 %v3505
  %v4573 = vunpack.c.l.b16 %v3506
  %v4574 = vunpack.c.h.b16 %v3506
  %v4575 = vunpack.c.l.b16 %v3507
  %v4576 = vunpack.c.h.b16 %v3507
  %v4577 = vunpack.c.l.b16 %v3508
  %v4578 = vunpack.c.h.b16 %v3508
  %v4579 = vunpack.c.l.b16 %v3509
  %v4580 = vunpack.c.h.b16 %v3509
  %v4581 = vunpack.c.l.b16 %v3510
  %v4582 = vunpack.c.h.b16 %v3510
  %v4583 = vunpack.c.l.b16 %v3511
  %v4584 = vunpack.c.h.b16 %v3511
  %v4585 = vunpack.c.l.b16 %v3512
  %v4586 = vunpack.c.h.b16 %v3512
  %v4587 = vunpack.c.l.b16 %v3513
  %v4588 = vunpack.c.h.b16 %v3513
  %v4589 = vunpack.c.l.b16 %v3514
  %v4590 = vunpack.c.h.b16 %v3514
  %v4591 = vunpack.c.l.b16 %v3515
  %v4592 = vunpack.c.h.b16 %v3515
  %v4593 = vunpack.c.l.b16 %v3516
  %v4594 = vunpack.c.h.b16 %v3516
  %v4595 = vunpack.c.l.b16 %v3517
  %v4596 = vunpack.c.h.b16 %v3517
  %v4597 = vunpack.c.l.b16 %v3518
  %v4598 = vunpack.c.h.b16 %v3518
  %v4599 = vunpack.c.l.b16 %v3519
  %v4600 = vunpack.c.h.b16 %v3519
  %v4601 = vunpack.c.l.b16 %v3520
  %v4602 = vunpack.c.h.b16 %v3520
  %v4603 = vunpack.c.l.b16 %v3521
  %v4604 = vunpack.c.h.b16 %v3521
  %v4605 = vunpack.c.l.b16 %v3522
  %v4606 = vunpack.c.h.b16 %v3522
  %v4607 = vunpack.c.l.b16 %v3523
  %v4608 = vunpack.c.h.b16 %v3523
  %v4609 = vunpack.c.l.b16 %v3524
  %v4610 = vunpack.c.h.b16 %v3524
  %v4611 = vunpack.c.l.b16 %v3525
  %v4612 = vunpack.c.h.b16 %v3525
  %v4613 = vunpack.c.l.b16 %v3526
  %v4614 = vunpack.c.h.b16 %v3526
  %v4615 = vunpack.c.l.b16 %v3527
  %v4616 = vunpack.c.h.b16 %v3527
  %v4617 = vunpack.c.l.b16 %v3528
  %v4618 = vunpack.c.h.b16 %v3528
  %v4619 = vunpack.c.l.b16 %v3529
  %v4620 = vunpack.c.h.b16 %v3529
  %v4621 = vunpack.c.l.b16 %v3530
  %v4622 = vunpack.c.h.b16 %v3530
  %v4623 = vunpack.c.l.b16 %v3531
  %v4624 = vunpack.c.h.b16 %v3531
  %v4625 = vunpack.c.l.b16 %v3532
  %v4626 = vunpack.c.h.b16 %v3532
  %v4627 = vunpack.c.l.b16 %v3533
  %v4628 = vunpack.c.h.b16 %v3533
  %v4629 = vunpack.c.l.b16 %v3534
  %v4630 = vunpack.c.h.b16 %v3534
  %v4631 = vunpack.c.l.b16 %v3535
  %v4632 = vunpack.c.h.b16 %v3535
  %v4633 = vunpack.c.l.b16 %v3536
  %v4634 = vunpack.c.h.b16 %v3536
  %v4635 = vunpack.c.l.b16 %v3537
  %v4636 = vunpack.c.h.b16 %v3537
  %v4637 = vunpack.c.l.b16 %v3538
  %v4638 = vunpack.c.h.b16 %v3538
  %v4639 = vunpack.c.l.b16 %v3539
  %v4640 = vunpack.c.h.b16 %v3539
  %v4641 = vunpack.c.l.b16 %v3540
  %v4642 = vunpack.c.h.b16 %v3540
  %v4643 = vunpack.c.l.b16 %v3541
  %v4644 = vunpack.c.h.b16 %v3541
  %v4645 = vunpack.c.l.b16 %v3542
  %v4646 = vunpack.c.h.b16 %v3542
  %v4647 = vunpack.c.l.b16 %v3543
  %v4648 = vunpack.c.h.b16 %v3543
  %v4649 = vunpack.c.l.b16 %v3544
  %v4650 = vunpack.c.h.b16 %v3544
  %v4651 = vunpack.c.l.b16 %v3545
  %v4652 = vunpack.c.h.b16 %v3545
  %v4653 = vunpack.c.l.b16 %v3546
  %v4654 = vunpack.c.h.b16 %v3546
  %v4655 = vunpack.c.l.b16 %v3547
  %v4656 = vunpack.c.h.b16 %v3547
  %v4657 = vunpack.c.l.b16 %v3548
  %v4658 = vunpack.c.h.b16 %v3548
  %v4659 = vunpack.c.l.b16 %v3549
  %v4660 = vunpack.c.h.b16 %v3549
  %v4661 = vunpack.c.l.b16 %v3550
  %v4662 = vunpack.c.h.b16 %v3550
  %v4663 = vunpack.c.l.b16 %v3551
  %v4664 = vunpack.c.h.b16 %v3551
  %v4665 = vunpack.c.l.b16 %v3552
  %v4666 = vunpack.c.h.b16 %v3552
  %v4667 = vunpack.c.l.b16 %v3553
  %v4668 = vunpack.c.h.b16 %v3553
  %v4669 = vunpack.c.l.b16 %v3554
  %v4670 = vunpack.c.h.b16 %v3554
  %v4671 = vunpack.c.l.b16 %v3555
  %v4672 = vunpack.c.h.b16 %v3555
  %v4673 = vunpack.c.l.b16 %v3556
  %v4674 = vunpack.c.h.b16 %v3556
  %v4675 = vunpack.c.l.b16 %v3557
  %v4676 = vunpack.c.h.b16 %v3557
  %v4677 = vunpack.c.l.b16 %v3558
  %v4678 = vunpack.c.h.b16 %v3558
  %v4679 = vunpack.c.l.b16 %v3559
  %v4680 = vunpack.c.h.b16 %v3559
  %v4681 = vunpack.c.l.b16 %v3560
  %v4682 = vunpack.c.h.b16 %v3560
  %v4683 = vunpack.c.l.b16 %v3561
  %v4684 = vunpack.c.h.b16 %v3561
  %v4685 = vunpack.c.l.b16 %v3562
  %v4686 = vunpack.c.h.b16 %v3562
  %v4687 = vunpack.c.l.b16 %v3563
  %v4688 = vunpack.c.h.b16 %v3563
  %v4689 = vunpack.c.l.b16 %v3564
  %v4690 = vunpack.c.h.b16 %v3564
  %v4691 = vunpack.c.l.b16 %v3565
  %v4692 = vunpack.c.h.b16 %v3565
  %v4693 = vunpack.c.l.b16 %v3566
  %v4694 = vunpack.c.h.b16 %v3566
  %v4695 = vunpack.c.l.b16 %v3567
  %v4696 = vunpack.c.h.b16 %v3567
  %v4697 = vunpack.c.l.b16 %v3568
  %v4698 = vunpack.c.h.b16 %v3568
  %v4699 = vunpack.c.l.b16 %v3569
  %v4700 = vunpack.c.h.b16 %v3569
  %v4701 = vunpack.c.l.b16 %v3570
  %v4702 = vunpack.c.h.b16 %v3570
  %v4703 = vunpack.c.l.b16 %v3571
  %v4704 = vunpack.c.h.b16 %v3571
  %v4705 = vunpack.c.l.b16 %v3572
  %v4706 = vunpack.c.h.b16 %v3572
  %v4707 = vunpack.c.l.b16 %v3573
  %v4708 = vunpack.c.h.b16 %v3573
  %v4709 = vunpack.c.l.b16 %v3574
  %v4710 = vunpack.c.h.b16 %v3574
  %v4711 = vunpack.c.l.b16 %v3575
  %v4712 = vunpack.c.h.b16 %v3575
  %v4713 = vunpack.c.l.b16 %v3576
  %v4714 = vunpack.c.h.b16 %v3576
  %v4715 = vunpack.c.l.b16 %v3577
  %v4716 = vunpack.c.h.b16 %v3577
  %v4717 = vunpack.c.l.b16 %v3578
  %v4718 = vunpack.c.h.b16 %v3578
  %v4719 = vunpack.c.l.b16 %v3579
  %v4720 = vunpack.c.h.b16 %v3579
  %v4721 = vunpack.c.l.b16 %v3580
  %v4722 = vunpack.c.h.b16 %v3580
  %v4723 = vunpack.c.l.b16 %v3581
  %v4724 = vunpack.c.h.b16 %v3581
  %v4725 = vunpack.c.l.b16 %v3582
  %v4726 = vunpack.c.h.b16 %v3582
  %v4727 = vunpack.c.l.b16 %v3583
  %v4728 = vunpack.c.h.b16 %v3583
  %v4729 = vunpack.c.l.b16 %v3584
  %v4730 = vunpack.c.h.b16 %v3584
  %v4731 = vunpack.c.l.b16 %v3585
  %v4732 = vunpack.c.h.b16 %v3585
  %v4733 = vunpack.c.l.b16 %v3586
  %v4734 = vunpack.c.h.b16 %v3586
  %v4735 = vunpack.c.l.b16 %v3587
  %v4736 = vunpack.c.h.b16 %v3587
  %v4737 = vunpack.c.l.b16 %v3588
  %v4738 = vunpack.c.h.b16 %v3588
  %v4739 = vunpack.c.l.b16 %v3589
  %v4740 = vunpack.c.h.b16 %v3589
  %v4741 = vunpack.c.l.b16 %v3590
  %v4742 = vunpack.c.h.b16 %v3590
  %v4743 = vpack.c.b16 %v3979, %v3975
  %v4744 = vpack.c.b16 %v3980, %v3976
  %v4745 = vpack.c.b16 %v3981, %v3977
  %v4746 = vpack.c.b16 %v3982, %v3978
  %v4747 = vpack.c.b16 %v3987, %v3983
  %v4748 = vpack.c.b16 %v3988, %v3984
  %v4749 = vpack.c.b16 %v3989, %v3985
  %v4750 = vpack.c.b16 %v3990, %v3986
  %v4751 = vpack.c.b16 %v3995, %v3991
  %v4752 = vpack.c.b16 %v3996, %v3992
  %v4753 = vpack.c.b16 %v3997, %v3993
  %v4754 = vpack.c.b16 %v3998, %v3994
  %v4755 = vpack.c.b16 %v4003, %v3999
  %v4756 = vpack.c.b16 %v4004, %v4000
  %v4757 = vpack.c.b16 %v4005, %v4001
  %v4758 = vpack.c.b16 %v4006, %v4002
  %v4759 = vpack.c.b16 %v4011, %v4007
  %v4760 = vpack.c.b16 %v4012, %v4008
  %v4761 = vpack.c.b16 %v4013, %v4009
  %v4762 = vpack.c.b16 %v4014, %v4010
  %v4763 = vpack.c.b16 %v4019, %v4015
  %v4764 = vpack.c.b16 %v4020, %v4016
  %v4765 = vpack.c.b16 %v4021, %v4017
  %v4766 = vpack.c.b16 %v4022, %v4018
  %v4767 = vpack.c.b16 %v4027, %v4023
  %v4768 = vpack.c.b16 %v4028, %v4024
  %v4769 = vpack.c.b16 %v4029, %v4025
  %v4770 = vpack.c.b16 %v4030, %v4026
  %v4771 = vpack.c.b16 %v4035, %v4031
  %v4772 = vpack.c.b16 %v4036, %v4032
  %v4773 = vpack.c.b16 %v4037, %v4033
  %v4774 = vpack.c.b16 %v4038, %v4034
  %v4775 = vpack.c.b16 %v4043, %v4039
  %v4776 = vpack.c.b16 %v4044, %v4040
  %v4777 = vpack.c.b16 %v4045, %v4041
  %v4778 = vpack.c.b16 %v4046, %v4042
  %v4779 = vpack.c.b16 %v4051, %v4047
  %v4780 = vpack.c.b16 %v4052, %v4048
  %v4781 = vpack.c.b16 %v4053, %v4049
  %v4782 = vpack.c.b16 %v4054, %v4050
  %v4783 = vpack.c.b16 %v4059, %v4055
  %v4784 = vpack.c.b16 %v4060, %v4056
  %v4785 = vpack.c.b16 %v4061, %v4057
  %v4786 = vpack.c.b16 %v4062, %v4058
  %v4787 = vpack.c.b16 %v4067, %v4063
  %v4788 = vpack.c.b16 %v4068, %v4064
  %v4789 = vpack.c.b16 %v4069, %v4065
  %v4790 = vpack.c.b16 %v4070, %v4066
  %v4791 = vpack.c.b16 %v4075, %v4071
  %v4792 = vpack.c.b16 %v4076, %v4072
  %v4793 = vpack.c.b16 %v4077, %v4073
  %v4794 = vpack.c.b16 %v4078, %v4074
  %v4795 = vpack.c.b16 %v4083, %v4079
  %v4796 = vpack.c.b16 %v4084, %v4080
  %v4797 = vpack.c.b16 %v4085, %v4081
  %v4798 = vpack.c.b16 %v4086, %v4082
  %v4799 = vpack.c.b16 %v4091, %v4087
  %v4800 = vpack.c.b16 %v4092, %v4088
  %v4801 = vpack.c.b16 %v4093, %v4089
  %v4802 = vpack.c.b16 %v4094, %v4090
  %v4803 = vpack.c.b16 %v4099, %v4095
  %v4804 = vpack.c.b16 %v4100, %v4096
  %v4805 = vpack.c.b16 %v4101, %v4097
  %v4806 = vpack.c.b16 %v4102, %v4098
  %v4807 = vpack.c.b16 %v4107, %v4103
  %v4808 = vpack.c.b16 %v4108, %v4104
  %v4809 = vpack.c.b16 %v4109, %v4105
  %v4810 = vpack.c.b16 %v4110, %v4106
  %v4811 = vpack.c.b16 %v4115, %v4111
  %v4812 = vpack.c.b16 %v4116, %v4112
  %v4813 = vpack.c.b16 %v4117, %v4113
  %v4814 = vpack.c.b16 %v4118, %v4114
  %v4815 = vpack.c.b16 %v4123, %v4119
  %v4816 = vpack.c.b16 %v4124, %v4120
  %v4817 = vpack.c.b16 %v4125, %v4121
  %v4818 = vpack.c.b16 %v4126, %v4122
  %v4819 = vpack.c.b16 %v4131, %v4127
  %v4820 = vpack.c.b16 %v4132, %v4128
  %v4821 = vpack.c.b16 %v4133, %v4129
  %v4822 = vpack.c.b16 %v4134, %v4130
  %v4823 = vpack.c.b16 %v4139, %v4135
  %v4824 = vpack.c.b16 %v4140, %v4136
  %v4825 = vpack.c.b16 %v4141, %v4137
  %v4826 = vpack.c.b16 %v4142, %v4138
  %v4827 = vpack.c.b16 %v4147, %v4143
  %v4828 = vpack.c.b16 %v4148, %v4144
  %v4829 = vpack.c.b16 %v4149, %v4145
  %v4830 = vpack.c.b16 %v4150, %v4146
  %v4831 = vpack.c.b16 %v4155, %v4151
  %v4832 = vpack.c.b16 %v4156, %v4152
  %v4833 = vpack.c.b16 %v4157, %v4153
  %v4834 = vpack.c.b16 %v4158, %v4154
  %v4835 = vpack.c.b16 %v4163, %v4159
  %v4836 = vpack.c.b16 %v4164, %v4160
  %v4837 = vpack.c.b16 %v4165, %v4161
  %v4838 = vpack.c.b16 %v4166, %v4162
  %v4839 = vpack.c.b16 %v4171, %v4167
  %v4840 = vpack.c.b16 %v4172, %v4168
  %v4841 = vpack.c.b16 %v4173, %v4169
  %v4842 = vpack.c.b16 %v4174, %v4170
  %v4843 = vpack.c.b16 %v4179, %v4175
  %v4844 = vpack.c.b16 %v4180, %v4176
  %v4845 = vpack.c.b16 %v4181, %v4177
  %v4846 = vpack.c.b16 %v4182, %v4178
  %v4847 = vpack.c.b16 %v4187, %v4183
  %v4848 = vpack.c.b16 %v4188, %v4184
  %v4849 = vpack.c.b16 %v4189, %v4185
  %v4850 = vpack.c.b16 %v4190, %v4186
  %v4851 = vpack.c.b16 %v4195, %v4191
  %v4852 = vpack.c.b16 %v4196, %v4192
  %v4853 = vpack.c.b16 %v4197, %v4193
  %v4854 = vpack.c.b16 %v4198, %v4194
  %v4855 = vpack.c.b16 %v4203, %v4199
  %v4856 = vpack.c.b16 %v4204, %v4200
  %v4857 = vpack.c.b16 %v4205, %v4201
  %v4858 = vpack.c.b16 %v4206, %v4202
  %v4859 = vpack.c.b16 %v4211, %v4207
  %v4860 = vpack.c.b16 %v4212, %v4208
  %v4861 = vpack.c.b16 %v4213, %v4209
  %v4862 = vpack.c.b16 %v4214, %v4210
  %v4863 = vpack.c.b16 %v4219, %v4215
  %v4864 = vpack.c.b16 %v4220, %v4216
  %v4865 = vpack.c.b16 %v4221, %v4217
  %v4866 = vpack.c.b16 %v4222, %v4218
  %v4867 = vpack.c.b16 %v4227, %v4223
  %v4868 = vpack.c.b16 %v4228, %v4224
  %v4869 = vpack.c.b16 %v4229, %v4225
  %v4870 = vpack.c.b16 %v4230, %v4226
  %v4871 = vpack.c.b16 %v4235, %v4231
  %v4872 = vpack.c.b16 %v4236, %v4232
  %v4873 = vpack.c.b16 %v4237, %v4233
  %v4874 = vpack.c.b16 %v4238, %v4234
  %v4875 = vpack.c.b16 %v4243, %v4239
  %v4876 = vpack.c.b16 %v4244, %v4240
  %v4877 = vpack.c.b16 %v4245, %v4241
  %v4878 = vpack.c.b16 %v4246, %v4242
  %v4879 = vpack.c.b16 %v4251, %v4247
  %v4880 = vpack.c.b16 %v4252, %v4248
  %v4881 = vpack.c.b16 %v4253, %v4249
  %v4882 = vpack.c.b16 %v4254, %v4250
  %v4883 = vpack.c.b16 %v4259, %v4255
  %v4884 = vpack.c.b16 %v4260, %v4256
  %v4885 = vpack.c.b16 %v4261, %v4257
  %v4886 = vpack.c.b16 %v4262, %v4258
  %v4887 = vpack.c.b16 %v4267, %v4263
  %v4888 = vpack.c.b16 %v4268, %v4264
  %v4889 = vpack.c.b16 %v4269, %v4265
  %v4890 = vpack.c.b16 %v4270, %v4266
  %v4891 = vpack.c.b16 %v4275, %v4271
  %v4892 = vpack.c.b16 %v4276, %v4272
  %v4893 = vpack.c.b16 %v4277, %v4273
  %v4894 = vpack.c.b16 %v4278, %v4274
  %v4895 = vpack.c.b16 %v4283, %v4279
  %v4896 = vpack.c.b16 %v4284, %v4280
  %v4897 = vpack.c.b16 %v4285, %v4281
  %v4898 = vpack.c.b16 %v4286, %v4282
  %v4899 = vpack.c.b16 %v4291, %v4287
  %v4900 = vpack.c.b16 %v4292, %v4288
  %v4901 = vpack.c.b16 %v4293, %v4289
  %v4902 = vpack.c.b16 %v4294, %v4290
  %v4903 = vpack.c.b16 %v4299, %v4295
  %v4904 = vpack.c.b16 %v4300, %v4296
  %v4905 = vpack.c.b16 %v4301, %v4297
  %v4906 = vpack.c.b16 %v4302, %v4298
  %v4907 = vpack.c.b16 %v4307, %v4303
  %v4908 = vpack.c.b16 %v4308, %v4304
  %v4909 = vpack.c.b16 %v4309, %v4305
  %v4910 = vpack.c.b16 %v4310, %v4306
  %v4911 = vpack.c.b16 %v4315, %v4311
  %v4912 = vpack.c.b16 %v4316, %v4312
  %v4913 = vpack.c.b16 %v4317, %v4313
  %v4914 = vpack.c.b16 %v4318, %v4314
  %v4915 = vpack.c.b16 %v4323, %v4319
  %v4916 = vpack.c.b16 %v4324, %v4320
  %v4917 = vpack.c.b16 %v4325, %v4321
  %v4918 = vpack.c.b16 %v4326, %v4322
  %v4919 = vpack.c.b16 %v4331, %v4327
  %v4920 = vpack.c.b16 %v4332, %v4328
  %v4921 = vpack.c.b16 %v4333, %v4329
  %v4922 = vpack.c.b16 %v4334, %v4330
  %v4923 = vpack.c.b16 %v4339, %v4335
  %v4924 = vpack.c.b16 %v4340, %v4336
  %v4925 = vpack.c.b16 %v4341, %v4337
  %v4926 = vpack.c.b16 %v4342, %v4338
  %v4927 = vpack.c.b16 %v4347, %v4343
  %v4928 = vpack.c.b16 %v4348, %v4344
  %v4929 = vpack.c.b16 %v4349, %v4345
  %v4930 = vpack.c.b16 %v4350, %v4346
  %v4931 = vpack.c.b16 %v4355, %v4351
  %v4932 = vpack.c.b16 %v4356, %v4352
  %v4933 = vpack.c.b16 %v4357, %v4353
  %v4934 = vpack.c.b16 %v4358, %v4354
  %v4935 = vpack.c.b16 %v4363, %v4359
  %v4936 = vpack.c.b16 %v4364, %v4360
  %v4937 = vpack.c.b16 %v4365, %v4361
  %v4938 = vpack.c.b16 %v4366, %v4362
  %v4939 = vpack.c.b16 %v4371, %v4367
  %v4940 = vpack.c.b16 %v4372, %v4368
  %v4941 = vpack.c.b16 %v4373, %v4369
  %v4942 = vpack.c.b16 %v4374, %v4370
  %v4943 = vpack.c.b16 %v4379, %v4375
  %v4944 = vpack.c.b16 %v4380, %v4376
  %v4945 = vpack.c.b16 %v4381, %v4377
  %v4946 = vpack.c.b16 %v4382, %v4378
  %v4947 = vpack.c.b16 %v4387, %v4383
  %v4948 = vpack.c.b16 %v4388, %v4384
  %v4949 = vpack.c.b16 %v4389, %v4385
  %v4950 = vpack.c.b16 %v4390, %v4386
  %v4951 = vpack.c.b16 %v4395, %v4391
  %v4952 = vpack.c.b16 %v4396, %v4392
  %v4953 = vpack.c.b16 %v4397, %v4393
  %v4954 = vpack.c.b16 %v4398, %v4394
  %v4955 = vpack.c.b16 %v4403, %v4399
  %v4956 = vpack.c.b16 %v4404, %v4400
  %v4957 = vpack.c.b16 %v4405, %v4401
  %v4958 = vpack.c.b16 %v4406, %v4402
  %v4959 = vpack.c.b16 %v4411, %v4407
  %v4960 = vpack.c.b16 %v4412, %v4408
  %v4961 = vpack.c.b16 %v4413, %v4409
  %v4962 = vpack.c.b16 %v4414, %v4410
  %v4963 = vpack.c.b16 %v4419, %v4415
  %v4964 = vpack.c.b16 %v4420, %v4416
  %v4965 = vpack.c.b16 %v4421, %v4417
  %v4966 = vpack.c.b16 %v4422, %v4418
  %v4967 = vpack.c.b16 %v4427, %v4423
  %v4968 = vpack.c.b16 %v4428, %v4424
  %v4969 = vpack.c.b16 %v4429, %v4425
  %v4970 = vpack.c.b16 %v4430, %v4426
  %v4971 = vpack.c.b16 %v4435, %v4431
  %v4972 = vpack.c.b16 %v4436, %v4432
  %v4973 = vpack.c.b16 %v4437, %v4433
  %v4974 = vpack.c.b16 %v4438, %v4434
  %v4975 = vpack.c.b16 %v4443, %v4439
  %v4976 = vpack.c.b16 %v4444, %v4440
  %v4977 = vpack.c.b16 %v4445, %v4441
  %v4978 = vpack.c.b16 %v4446, %v4442
  %v4979 = vpack.c.b16 %v4451, %v4447
  %v4980 = vpack.c.b16 %v4452, %v4448
  %v4981 = vpack.c.b16 %v4453, %v4449
  %v4982 = vpack.c.b16 %v4454, %v4450
  %v4983 = vpack.c.b16 %v4459, %v4455
  %v4984 = vpack.c.b16 %v4460, %v4456
  %v4985 = vpack.c.b16 %v4461, %v4457
  %v4986 = vpack.c.b16 %v4462, %v4458
  %v4987 = vpack.c.b16 %v4467, %v4463
  %v4988 = vpack.c.b16 %v4468, %v4464
  %v4989 = vpack.c.b16 %v4469, %v4465
  %v4990 = vpack.c.b16 %v4470, %v4466
  %v4991 = vpack.c.b16 %v4475, %v4471
  %v4992 = vpack.c.b16 %v4476, %v4472
  %v4993 = vpack.c.b16 %v4477, %v4473
  %v4994 = vpack.c.b16 %v4478, %v4474
  %v4995 = vpack.c.b16 %v4483, %v4479
  %v4996 = vpack.c.b16 %v4484, %v4480
  %v4997 = vpack.c.b16 %v4485, %v4481
  %v4998 = vpack.c.b16 %v4486, %v4482
  %v4999 = vpack.c.b16 %v4491, %v4487
  %v5000 = vpack.c.b16 %v4492, %v4488
  %v5001 = vpack.c.b16 %v4493, %v4489
  %v5002 = vpack.c.b16 %v4494, %v4490
  %v5003 = vpack.c.b16 %v4499, %v4495
  %v5004 = vpack.c.b16 %v4500, %v4496
  %v5005 = vpack.c.b16 %v4501, %v4497
  %v5006 = vpack.c.b16 %v4502, %v4498
  %v5007 = vpack.c.b16 %v4507, %v4503
  %v5008 = vpack.c.b16 %v4508, %v4504
  %v5009 = vpack.c.b16 %v4509, %v4505
  %v5010 = vpack.c.b16 %v4510, %v4506
  %v5011 = vpack.c.b16 %v4515, %v4511
  %v5012 = vpack.c.b16 %v4516, %v4512
  %v5013 = vpack.c.b16 %v4517, %v4513
  %v5014 = vpack.c.b16 %v4518, %v4514
  %v5015 = vpack.c.b16 %v4523, %v4519
  %v5016 = vpack.c.b16 %v4524, %v4520
  %v5017 = vpack.c.b16 %v4525, %v4521
  %v5018 = vpack.c.b16 %v4526, %v4522
  %v5019 = vpack.c.b16 %v4531, %v4527
  %v5020 = vpack.c.b16 %v4532, %v4528
  %v5021 = vpack.c.b16 %v4533, %v4529
  %v5022 = vpack.c.b16 %v4534, %v4530
  %v5023 = vpack.c.b16 %v4539, %v4535
  %v5024 = vpack.c.b16 %v4540, %v4536
  %v5025 = vpack.c.b16 %v4541, %v4537
  %v5026 = vpack.c.b16 %v4542, %v4538
  %v5027 = vpack.c.b16 %v4547, %v4543
  %v5028 = vpack.c.b16 %v4548, %v4544
  %v5029 = vpack.c.b16 %v4549, %v4545
  %v5030 = vpack.c.b16 %v4550, %v4546
  %v5031 = vpack.c.b16 %v4555, %v4551
  %v5032 = vpack.c.b16 %v4556, %v4552
  %v5033 = vpack.c.b16 %v4557, %v4553
  %v5034 = vpack.c.b16 %v4558, %v4554
  %v5035 = vpack.c.b16 %v4563, %v4559
  %v5036 = vpack.c.b16 %v4564, %v4560
  %v5037 = vpack.c.b16 %v4565, %v4561
  %v5038 = vpack.c.b16 %v4566, %v4562
  %v5039 = vpack.c.b16 %v4571, %v4567
  %v5040 = vpack.c.b16 %v4572, %v4568
  %v5041 = vpack.c.b16 %v4573, %v4569
  %v5042 = vpack.c.b16 %v4574, %v4570
  %v5043 = vpack.c.b16 %v4579, %v4575
  %v5044 = vpack.c.b16 %v4580, %v4576
  %v5045 = vpack.c.b16 %v4581, %v4577
  %v5046 = vpack.c.b16 %v4582, %v4578
  %v5047 = vpack.c.b16 %v4587, %v4583
  %v5048 = vpack.c.b16 %v4588, %v4584
  %v5049 = vpack.c.b16 %v4589, %v4585
  %v5050 = vpack.c.b16 %v4590, %v4586
  %v5051 = vpack.c.b16 %v4595, %v4591
  %v5052 = vpack.c.b16 %v4596, %v4592
  %v5053 = vpack.c.b16 %v4597, %v4593
  %v5054 = vpack.c.b16 %v4598, %v4594
  %v5055 = vpack.c.b16 %v4603, %v4599
  %v5056 = vpack.c.b16 %v4604, %v4600
  %v5057 = vpack.c.b16 %v4605, %v4601
  %v5058 = vpack.c.b16 %v4606, %v4602
  %v5059 = vpack.c.b16 %v4611, %v4607
  %v5060 = vpack.c.b16 %v4612, %v4608
  %v5061 = vpack.c.b16 %v4613, %v4609
  %v5062 = vpack.c.b16 %v4614, %v4610
  %v5063 = vpack.c.b16 %v4619, %v4615
  %v5064 = vpack.c.b16 %v4620, %v4616
  %v5065 = vpack.c.b16 %v4621, %v4617
  %v5066 = vpack.c.b16 %v4622, %v4618
  %v5067 = vpack.c.b16 %v4627, %v4623
  %v5068 = vpack.c.b16 %v4628, %v4624
  %v5069 = vpack.c.b16 %v4629, %v4625
  %v5070 = vpack.c.b16 %v4630, %v4626
  %v5071 = vpack.c.b16 %v4635, %v4631
  %v5072 = vpack.c.b16 %v4636, %v4632
  %v5073 = vpack.c.b16 %v4637, %v4633
  %v5074 = vpack.c.b16 %v4638, %v4634
  %v5075 = vpack.c.b16 %v4643, %v4639
  %v5076 = vpack.c.b16 %v4644, %v4640
  %v5077 = vpack.c.b16 %v4645, %v4641
  %v5078 = vpack.c.b16 %v4646, %v4642
  %v5079 = vpack.c.b16 %v4651, %v4647
  %v5080 = vpack.c.b16 %v4652, %v4648
  %v5081 = vpack.c.b16 %v4653, %v4649
  %v5082 = vpack.c.b16 %v4654, %v4650
  %v5083 = vpack.c.b16 %v4659, %v4655
  %v5084 = vpack.c.b16 %v4660, %v4656
  %v5085 = vpack.c.b16 %v4661, %v4657
  %v5086 = vpack.c.b16 %v4662, %v4658
  %v5087 = vpack.c.b16 %v4667, %v4663
  %v5088 = vpack.c.b16 %v4668, %v4664
  %v5089 = vpack.c.b16 %v4669, %v4665
  %v5090 = vpack.c.b16 %v4670, %v4666
  %v5091 = vpack.c.b16 %v4675, %v4671
  %v5092 = vpack.c.b16 %v4676, %v4672
  %v5093 = vpack.c.b16 %v4677, %v4673
  %v5094 = vpack.c.b16 %v4678, %v4674
  %v5095 = vpack.c.b16 %v4683, %v4679
  %v5096 = vpack.c.b16 %v4684, %v4680
  %v5097 = vpack.c.b16 %v4685, %v4681
  %v5098 = vpack.c.b16 %v4686, %v4682
  %v5099 = vpack.c.b16 %v4691, %v4687
  %v5100 = vpack.c.b16 %v4692, %v4688
  %v5101 = vpack.c.b16 %v4693, %v4689
  %v5102 = vpack.c.b16 %v4694, %v4690
  %v5103 = vpack.c.b16 %v4699, %v4695
  %v5104 = vpack.c.b16 %v4700, %v4696
  %v5105 = vpack.c.b16 %v4701, %v4697
  %v5106 = vpack.c.b16 %v4702, %v4698
  %v5107 = vpack.c.b16 %v4707, %v4703
  %v5108 = vpack.c.b16 %v4708, %v4704
  %v5109 = vpack.c.b16 %v4709, %v4705
  %v5110 = vpack.c.b16 %v4710, %v4706
  %v5111 = vpack.c.b16 %v4715, %v4711
  %v5112 = vpack.c.b16 %v4716, %v4712
  %v5113 = vpack.c.b16 %v4717, %v4713
  %v5114 = vpack.c.b16 %v4718, %v4714
  %v5115 = vpack.c.b16 %v4723, %v4719
  %v5116 = vpack.c.b16 %v4724, %v4720
  %v5117 = vpack.c.b16 %v4725, %v4721
  %v5118 = vpack.c.b16 %v4726, %v4722
  %v5119 = vpack.c.b16 %v4731, %v4727
  %v5120 = vpack.c.b16 %v4732, %v4728
  %v5121 = vpack.c.b16 %v4733, %v4729
  %v5122 = vpack.c.b16 %v4734, %v4730
  %v5123 = vpack.c.b16 %v4739, %v4735
  %v5124 = vpack.c.b16 %v4740, %v4736
  %v5125 = vpack.c.b16 %v4741, %v4737
  %v5126 = vpack.c.b16 %v4742, %v4738
  %5511 = vmatprep.subr.bf16.mxu0 %v4772
  %5512 = vmatpush1.bf16.msra.mxu0 %v4771
  %5513 = vmatprep.subr.bf16.mxu0 %v4768
  %5514 = vmatpush1.bf16.msra.mxu0 %v4767
  %5515 = vmatprep.subr.bf16.mxu0 %v4764
  %5516 = vmatpush1.bf16.msra.mxu0 %v4763
  %5517 = vmatprep.subr.bf16.mxu0 %v4760
  %5518 = vmatpush1.bf16.msra.mxu0 %v4759
  %5519 = vmatprep.subr.bf16.mxu0 %v4756
  %5520 = vmatpush1.bf16.msra.mxu0 %v4755
  %5521 = vmatprep.subr.bf16.mxu0 %v4752
  %5522 = vmatpush1.bf16.msra.mxu0 %v4751
  %5523 = vmatprep.subr.bf16.mxu0 %v4748
  %5524 = vmatpush1.bf16.msra.mxu0 %v4747
  %5525 = vmatprep.subr.bf16.mxu0 %v4744
  %5526 = vmatpush1.bf16.msra.mxu0 %v4743
  %5527 = vmatprep.subr.bf16.mxu0 %v4804
  %5528 = vmatpush2.bf16.msra.mxu0 %v4803
  %5529 = vmatprep.subr.bf16.mxu0 %v4800
  %5530 = vmatpush2.bf16.msra.mxu0 %v4799
  %5531 = vmatprep.subr.bf16.mxu0 %v4796
  %5532 = vmatpush2.bf16.msra.mxu0 %v4795
  %5533 = vmatprep.subr.bf16.mxu0 %v4792
  %5534 = vmatpush2.bf16.msra.mxu0 %v4791
  %5535 = vmatprep.subr.bf16.mxu0 %v4788
  %5536 = vmatpush2.bf16.msra.mxu0 %v4787
  %5537 = vmatprep.subr.bf16.mxu0 %v4784
  %5538 = vmatpush2.bf16.msra.mxu0 %v4783
  %5539 = vmatprep.subr.bf16.mxu0 %v4780
  %5540 = vmatpush2.bf16.msra.mxu0 %v4779
  %5541 = vmatprep.subr.bf16.mxu0 %v4776
  %5542 = vmatpush2.bf16.msra.mxu0 %v4775
  %5543 = vmatprep.mubr.bf16.mxu0 %v3196
  %5544 = vmatmul.mubr.bf16.gmra.mxu0 %v3195
  %v5545 = vpop.f32.mrf.mxu0
  %v5546 = vadd.f32 %v57, %v5545
  %v5547 = vpop.f32.mrf.mxu0
  %v5548 = vadd.f32 %v58, %v5547
  %v5549 = vpop.f32.mrf.mxu0
  %v5550 = vadd.f32 %v61, %v5549
  %v5551 = vpop.f32.mrf.mxu0
  %v5552 = vadd.f32 %v62, %v5551
  %5553 = vdwg.mxu0
  %5554 = vmatprep.subr.bf16.mxu0 %v4836
  %5555 = vmatpush1.bf16.msra.mxu0 %v4835
  %5556 = vmatprep.subr.bf16.mxu0 %v4832
  %5557 = vmatpush1.bf16.msra.mxu0 %v4831
  %5558 = vmatprep.subr.bf16.mxu0 %v4828
  %5559 = vmatpush1.bf16.msra.mxu0 %v4827
  %5560 = vmatprep.subr.bf16.mxu0 %v4824
  %5561 = vmatpush1.bf16.msra.mxu0 %v4823
  %5562 = vmatprep.subr.bf16.mxu0 %v4820
  %5563 = vmatpush1.bf16.msra.mxu0 %v4819
  %5564 = vmatprep.subr.bf16.mxu0 %v4816
  %5565 = vmatpush1.bf16.msra.mxu0 %v4815
  %5566 = vmatprep.subr.bf16.mxu0 %v4812
  %5567 = vmatpush1.bf16.msra.mxu0 %v4811
  %5568 = vmatprep.subr.bf16.mxu0 %v4808
  %5569 = vmatpush1.bf16.msra.mxu0 %v4807
  %5570 = vmatprep.subr.bf16.mxu0 %v4868
  %5571 = vmatpush2.bf16.msra.mxu0 %v4867
  %5572 = vmatprep.subr.bf16.mxu0 %v4864
  %5573 = vmatpush2.bf16.msra.mxu0 %v4863
  %5574 = vmatprep.subr.bf16.mxu0 %v4860
  %5575 = vmatpush2.bf16.msra.mxu0 %v4859
  %5576 = vmatprep.subr.bf16.mxu0 %v4856
  %5577 = vmatpush2.bf16.msra.mxu0 %v4855
  %5578 = vmatprep.subr.bf16.mxu0 %v4852
  %5579 = vmatpush2.bf16.msra.mxu0 %v4851
  %5580 = vmatprep.subr.bf16.mxu0 %v4848
  %5581 = vmatpush2.bf16.msra.mxu0 %v4847
  %5582 = vmatprep.subr.bf16.mxu0 %v4844
  %5583 = vmatpush2.bf16.msra.mxu0 %v4843
  %5584 = vmatprep.subr.bf16.mxu0 %v4840
  %5585 = vmatpush2.bf16.msra.mxu0 %v4839
  %5586 = vmatprep.mubr.bf16.mxu0 %v3198
  %5587 = vmatmul.mubr.bf16.gmra.mxu0 %v3197
  %v5588 = vpop.f32.mrf.mxu0
  %v5589 = vadd.f32 %v5546, %v5588
  %v5590 = vpop.f32.mrf.mxu0
  %v5591 = vadd.f32 %v5548, %v5590
  %v5592 = vpop.f32.mrf.mxu0
  %v5593 = vadd.f32 %v5550, %v5592
  %v5594 = vpop.f32.mrf.mxu0
  %v5595 = vadd.f32 %v5552, %v5594
  %5596 = vdwg.mxu0
  %5597 = vmatprep.subr.bf16.mxu0 %v4900
  %5598 = vmatpush1.bf16.msra.mxu0 %v4899
  %5599 = vmatprep.subr.bf16.mxu0 %v4896
  %5600 = vmatpush1.bf16.msra.mxu0 %v4895
  %5601 = vmatprep.subr.bf16.mxu0 %v4892
  %5602 = vmatpush1.bf16.msra.mxu0 %v4891
  %5603 = vmatprep.subr.bf16.mxu0 %v4888
  %5604 = vmatpush1.bf16.msra.mxu0 %v4887
  %5605 = vmatprep.subr.bf16.mxu0 %v4884
  %5606 = vmatpush1.bf16.msra.mxu0 %v4883
  %5607 = vmatprep.subr.bf16.mxu0 %v4880
  %5608 = vmatpush1.bf16.msra.mxu0 %v4879
  %5609 = vmatprep.subr.bf16.mxu0 %v4876
  %5610 = vmatpush1.bf16.msra.mxu0 %v4875
  %5611 = vmatprep.subr.bf16.mxu0 %v4872
  %5612 = vmatpush1.bf16.msra.mxu0 %v4871
  %5613 = vmatprep.subr.bf16.mxu0 %v4932
  %5614 = vmatpush2.bf16.msra.mxu0 %v4931
  %5615 = vmatprep.subr.bf16.mxu0 %v4928
  %5616 = vmatpush2.bf16.msra.mxu0 %v4927
  %5617 = vmatprep.subr.bf16.mxu0 %v4924
  %5618 = vmatpush2.bf16.msra.mxu0 %v4923
  %5619 = vmatprep.subr.bf16.mxu0 %v4920
  %5620 = vmatpush2.bf16.msra.mxu0 %v4919
  %5621 = vmatprep.subr.bf16.mxu0 %v4916
  %5622 = vmatpush2.bf16.msra.mxu0 %v4915
  %5623 = vmatprep.subr.bf16.mxu0 %v4912
  %5624 = vmatpush2.bf16.msra.mxu0 %v4911
  %5625 = vmatprep.subr.bf16.mxu0 %v4908
  %5626 = vmatpush2.bf16.msra.mxu0 %v4907
  %5627 = vmatprep.subr.bf16.mxu0 %v4904
  %5628 = vmatpush2.bf16.msra.mxu0 %v4903
  %5629 = vmatprep.mubr.bf16.mxu0 %v3200
  %5630 = vmatmul.mubr.bf16.gmra.mxu0 %v3199
  %v5631 = vpop.f32.mrf.mxu0
  %v5632 = vadd.f32 %v5589, %v5631
  %v5633 = vpop.f32.mrf.mxu0
  %v5634 = vadd.f32 %v5591, %v5633
  %v5635 = vpop.f32.mrf.mxu0
  %v5636 = vadd.f32 %v5593, %v5635
  %v5637 = vpop.f32.mrf.mxu0
  %v5638 = vadd.f32 %v5595, %v5637
  %5639 = vdwg.mxu0
  %5640 = vmatprep.subr.bf16.mxu0 %v4964
  %5641 = vmatpush1.bf16.msra.mxu0 %v4963
  %5642 = vmatprep.subr.bf16.mxu0 %v4960
  %5643 = vmatpush1.bf16.msra.mxu0 %v4959
  %5644 = vmatprep.subr.bf16.mxu0 %v4956
  %5645 = vmatpush1.bf16.msra.mxu0 %v4955
  %5646 = vmatprep.subr.bf16.mxu0 %v4952
  %5647 = vmatpush1.bf16.msra.mxu0 %v4951
  %5648 = vmatprep.subr.bf16.mxu0 %v4948
  %5649 = vmatpush1.bf16.msra.mxu0 %v4947
  %5650 = vmatprep.subr.bf16.mxu0 %v4944
  %5651 = vmatpush1.bf16.msra.mxu0 %v4943
  %5652 = vmatprep.subr.bf16.mxu0 %v4940
  %5653 = vmatpush1.bf16.msra.mxu0 %v4939
  %5654 = vmatprep.subr.bf16.mxu0 %v4936
  %5655 = vmatpush1.bf16.msra.mxu0 %v4935
  %5656 = vmatprep.subr.bf16.mxu0 %v4996
  %5657 = vmatpush2.bf16.msra.mxu0 %v4995
  %5658 = vmatprep.subr.bf16.mxu0 %v4992
  %5659 = vmatpush2.bf16.msra.mxu0 %v4991
  %5660 = vmatprep.subr.bf16.mxu0 %v4988
  %5661 = vmatpush2.bf16.msra.mxu0 %v4987
  %5662 = vmatprep.subr.bf16.mxu0 %v4984
  %5663 = vmatpush2.bf16.msra.mxu0 %v4983
  %5664 = vmatprep.subr.bf16.mxu0 %v4980
  %5665 = vmatpush2.bf16.msra.mxu0 %v4979
  %5666 = vmatprep.subr.bf16.mxu0 %v4976
  %5667 = vmatpush2.bf16.msra.mxu0 %v4975
  %5668 = vmatprep.subr.bf16.mxu0 %v4972
  %5669 = vmatpush2.bf16.msra.mxu0 %v4971
  %5670 = vmatprep.subr.bf16.mxu0 %v4968
  %5671 = vmatpush2.bf16.msra.mxu0 %v4967
  %5672 = vmatprep.mubr.bf16.mxu0 %v3202
  %5673 = vmatmul.mubr.bf16.gmra.mxu0 %v3201
  %v5674 = vpop.f32.mrf.mxu0
  %v5675 = vadd.f32 %v5632, %v5674
  %v5676 = vpop.f32.mrf.mxu0
  %v5677 = vadd.f32 %v5634, %v5676
  %v5678 = vpop.f32.mrf.mxu0
  %v5679 = vadd.f32 %v5636, %v5678
  %v5680 = vpop.f32.mrf.mxu0
  %v5681 = vadd.f32 %v5638, %v5680
  %5682 = vdwg.mxu0
  %5683 = vmatprep.subr.bf16.mxu0 %v5028
  %5684 = vmatpush1.bf16.msra.mxu0 %v5027
  %5685 = vmatprep.subr.bf16.mxu0 %v5024
  %5686 = vmatpush1.bf16.msra.mxu0 %v5023
  %5687 = vmatprep.subr.bf16.mxu0 %v5020
  %5688 = vmatpush1.bf16.msra.mxu0 %v5019
  %5689 = vmatprep.subr.bf16.mxu0 %v5016
  %5690 = vmatpush1.bf16.msra.mxu0 %v5015
  %5691 = vmatprep.subr.bf16.mxu0 %v5012
  %5692 = vmatpush1.bf16.msra.mxu0 %v5011
  %5693 = vmatprep.subr.bf16.mxu0 %v5008
  %5694 = vmatpush1.bf16.msra.mxu0 %v5007
  %5695 = vmatprep.subr.bf16.mxu0 %v5004
  %5696 = vmatpush1.bf16.msra.mxu0 %v5003
  %5697 = vmatprep.subr.bf16.mxu0 %v5000
  %5698 = vmatpush1.bf16.msra.mxu0 %v4999
  %5699 = vmatprep.subr.bf16.mxu0 %v5060
  %5700 = vmatpush2.bf16.msra.mxu0 %v5059
  %5701 = vmatprep.subr.bf16.mxu0 %v5056
  %5702 = vmatpush2.bf16.msra.mxu0 %v5055
  %5703 = vmatprep.subr.bf16.mxu0 %v5052
  %5704 = vmatpush2.bf16.msra.mxu0 %v5051
  %5705 = vmatprep.subr.bf16.mxu0 %v5048
  %5706 = vmatpush2.bf16.msra.mxu0 %v5047
  %5707 = vmatprep.subr.bf16.mxu0 %v5044
  %5708 = vmatpush2.bf16.msra.mxu0 %v5043
  %5709 = vmatprep.subr.bf16.mxu0 %v5040
  %5710 = vmatpush2.bf16.msra.mxu0 %v5039
  %5711 = vmatprep.subr.bf16.mxu0 %v5036
  %5712 = vmatpush2.bf16.msra.mxu0 %v5035
  %5713 = vmatprep.subr.bf16.mxu0 %v5032
  %5714 = vmatpush2.bf16.msra.mxu0 %v5031
  %5715 = vmatprep.mubr.bf16.mxu0 %v3204
  %5716 = vmatmul.mubr.bf16.gmra.mxu0 %v3203
  %v5717 = vpop.f32.mrf.mxu0
  %v5718 = vadd.f32 %v5675, %v5717
  %v5719 = vpop.f32.mrf.mxu0
  %v5720 = vadd.f32 %v5677, %v5719
  %v5721 = vpop.f32.mrf.mxu0
  %v5722 = vadd.f32 %v5679, %v5721
  %v5723 = vpop.f32.mrf.mxu0
  %v5724 = vadd.f32 %v5681, %v5723
  %5725 = vdwg.mxu0
  %5726 = vmatprep.subr.bf16.mxu0 %v5092
  %5727 = vmatpush1.bf16.msra.mxu0 %v5091
  %5728 = vmatprep.subr.bf16.mxu0 %v5088
  %5729 = vmatpush1.bf16.msra.mxu0 %v5087
  %5730 = vmatprep.subr.bf16.mxu0 %v5084
  %5731 = vmatpush1.bf16.msra.mxu0 %v5083
  %5732 = vmatprep.subr.bf16.mxu0 %v5080
  %5733 = vmatpush1.bf16.msra.mxu0 %v5079
  %5734 = vmatprep.subr.bf16.mxu0 %v5076
  %5735 = vmatpush1.bf16.msra.mxu0 %v5075
  %5736 = vmatprep.subr.bf16.mxu0 %v5072
  %5737 = vmatpush1.bf16.msra.mxu0 %v5071
  %5738 = vmatprep.subr.bf16.mxu0 %v5068
  %5739 = vmatpush1.bf16.msra.mxu0 %v5067
  %5740 = vmatprep.subr.bf16.mxu0 %v5064
  %5741 = vmatpush1.bf16.msra.mxu0 %v5063
  %5742 = vmatprep.subr.bf16.mxu0 %v5124
  %5743 = vmatpush2.bf16.msra.mxu0 %v5123
  %5744 = vmatprep.subr.bf16.mxu0 %v5120
  %5745 = vmatpush2.bf16.msra.mxu0 %v5119
  %5746 = vmatprep.subr.bf16.mxu0 %v5116
  %5747 = vmatpush2.bf16.msra.mxu0 %v5115
  %5748 = vmatprep.subr.bf16.mxu0 %v5112
  %5749 = vmatpush2.bf16.msra.mxu0 %v5111
  %5750 = vmatprep.subr.bf16.mxu0 %v5108
  %5751 = vmatpush2.bf16.msra.mxu0 %v5107
  %5752 = vmatprep.subr.bf16.mxu0 %v5104
  %5753 = vmatpush2.bf16.msra.mxu0 %v5103
  %5754 = vmatprep.subr.bf16.mxu0 %v5100
  %5755 = vmatpush2.bf16.msra.mxu0 %v5099
  %5756 = vmatprep.subr.bf16.mxu0 %v5096
  %5757 = vmatpush2.bf16.msra.mxu0 %v5095
  %5758 = vmatprep.mubr.bf16.mxu0 %v3206
  %5759 = vmatmul.mubr.bf16.gmra.mxu0 %v3205
  %v5760 = vpop.f32.mrf.mxu0
  %v5761 = vadd.f32 %v5718, %v5760
  %v5762 = vpop.f32.mrf.mxu0
  %v5763 = vadd.f32 %v5720, %v5762
  %v5764 = vpop.f32.mrf.mxu0
  %v5765 = vadd.f32 %v5722, %v5764
  %v5766 = vpop.f32.mrf.mxu0
  %v5767 = vadd.f32 %v5724, %v5766
  %5768 = vdwg.mxu0
  %5769 = vmatprep.subr.bf16.mxu0 %v4774
  %5770 = vmatpush1.bf16.msra.mxu0 %v4773
  %5771 = vmatprep.subr.bf16.mxu0 %v4770
  %5772 = vmatpush1.bf16.msra.mxu0 %v4769
  %5773 = vmatprep.subr.bf16.mxu0 %v4766
  %5774 = vmatpush1.bf16.msra.mxu0 %v4765
  %5775 = vmatprep.subr.bf16.mxu0 %v4762
  %5776 = vmatpush1.bf16.msra.mxu0 %v4761
  %5777 = vmatprep.subr.bf16.mxu0 %v4758
  %5778 = vmatpush1.bf16.msra.mxu0 %v4757
  %5779 = vmatprep.subr.bf16.mxu0 %v4754
  %5780 = vmatpush1.bf16.msra.mxu0 %v4753
  %5781 = vmatprep.subr.bf16.mxu0 %v4750
  %5782 = vmatpush1.bf16.msra.mxu0 %v4749
  %5783 = vmatprep.subr.bf16.mxu0 %v4746
  %5784 = vmatpush1.bf16.msra.mxu0 %v4745
  %5785 = vmatprep.subr.bf16.mxu0 %v4806
  %5786 = vmatpush2.bf16.msra.mxu0 %v4805
  %5787 = vmatprep.subr.bf16.mxu0 %v4802
  %5788 = vmatpush2.bf16.msra.mxu0 %v4801
  %5789 = vmatprep.subr.bf16.mxu0 %v4798
  %5790 = vmatpush2.bf16.msra.mxu0 %v4797
  %5791 = vmatprep.subr.bf16.mxu0 %v4794
  %5792 = vmatpush2.bf16.msra.mxu0 %v4793
  %5793 = vmatprep.subr.bf16.mxu0 %v4790
  %5794 = vmatpush2.bf16.msra.mxu0 %v4789
  %5795 = vmatprep.subr.bf16.mxu0 %v4786
  %5796 = vmatpush2.bf16.msra.mxu0 %v4785
  %5797 = vmatprep.subr.bf16.mxu0 %v4782
  %5798 = vmatpush2.bf16.msra.mxu0 %v4781
  %5799 = vmatprep.subr.bf16.mxu0 %v4778
  %5800 = vmatpush2.bf16.msra.mxu0 %v4777
  %5801 = vmatprep.mubr.bf16.mxu0 %v3196
  %5802 = vmatmul.mubr.bf16.gmra.mxu0 %v3195
  %v5803 = vpop.f32.mrf.mxu0
  %v5804 = vadd.f32 %v59, %v5803
  %v5805 = vpop.f32.mrf.mxu0
  %v5806 = vadd.f32 %v60, %v5805
  %v5807 = vpop.f32.mrf.mxu0
  %v5808 = vadd.f32 %v63, %v5807
  %v5809 = vpop.f32.mrf.mxu0
  %v5810 = vadd.f32 %v64, %v5809
  %5811 = vdwg.mxu0
  %5812 = vmatprep.subr.bf16.mxu0 %v4838
  %5813 = vmatpush1.bf16.msra.mxu0 %v4837
  %5814 = vmatprep.subr.bf16.mxu0 %v4834
  %5815 = vmatpush1.bf16.msra.mxu0 %v4833
  %5816 = vmatprep.subr.bf16.mxu0 %v4830
  %5817 = vmatpush1.bf16.msra.mxu0 %v4829
  %5818 = vmatprep.subr.bf16.mxu0 %v4826
  %5819 = vmatpush1.bf16.msra.mxu0 %v4825
  %5820 = vmatprep.subr.bf16.mxu0 %v4822
  %5821 = vmatpush1.bf16.msra.mxu0 %v4821
  %5822 = vmatprep.subr.bf16.mxu0 %v4818
  %5823 = vmatpush1.bf16.msra.mxu0 %v4817
  %5824 = vmatprep.subr.bf16.mxu0 %v4814
  %5825 = vmatpush1.bf16.msra.mxu0 %v4813
  %5826 = vmatprep.subr.bf16.mxu0 %v4810
  %5827 = vmatpush1.bf16.msra.mxu0 %v4809
  %5828 = vmatprep.subr.bf16.mxu0 %v4870
  %5829 = vmatpush2.bf16.msra.mxu0 %v4869
  %5830 = vmatprep.subr.bf16.mxu0 %v4866
  %5831 = vmatpush2.bf16.msra.mxu0 %v4865
  %5832 = vmatprep.subr.bf16.mxu0 %v4862
  %5833 = vmatpush2.bf16.msra.mxu0 %v4861
  %5834 = vmatprep.subr.bf16.mxu0 %v4858
  %5835 = vmatpush2.bf16.msra.mxu0 %v4857
  %5836 = vmatprep.subr.bf16.mxu0 %v4854
  %5837 = vmatpush2.bf16.msra.mxu0 %v4853
  %5838 = vmatprep.subr.bf16.mxu0 %v4850
  %5839 = vmatpush2.bf16.msra.mxu0 %v4849
  %5840 = vmatprep.subr.bf16.mxu0 %v4846
  %5841 = vmatpush2.bf16.msra.mxu0 %v4845
  %5842 = vmatprep.subr.bf16.mxu0 %v4842
  %5843 = vmatpush2.bf16.msra.mxu0 %v4841
  %5844 = vmatprep.mubr.bf16.mxu0 %v3198
  %5845 = vmatmul.mubr.bf16.gmra.mxu0 %v3197
  %v5846 = vpop.f32.mrf.mxu0
  %v5847 = vadd.f32 %v5804, %v5846
  %v5848 = vpop.f32.mrf.mxu0
  %v5849 = vadd.f32 %v5806, %v5848
  %v5850 = vpop.f32.mrf.mxu0
  %v5851 = vadd.f32 %v5808, %v5850
  %v5852 = vpop.f32.mrf.mxu0
  %v5853 = vadd.f32 %v5810, %v5852
  %5854 = vdwg.mxu0
  %5855 = vmatprep.subr.bf16.mxu0 %v4902
  %5856 = vmatpush1.bf16.msra.mxu0 %v4901
  %5857 = vmatprep.subr.bf16.mxu0 %v4898
  %5858 = vmatpush1.bf16.msra.mxu0 %v4897
  %5859 = vmatprep.subr.bf16.mxu0 %v4894
  %5860 = vmatpush1.bf16.msra.mxu0 %v4893
  %5861 = vmatprep.subr.bf16.mxu0 %v4890
  %5862 = vmatpush1.bf16.msra.mxu0 %v4889
  %5863 = vmatprep.subr.bf16.mxu0 %v4886
  %5864 = vmatpush1.bf16.msra.mxu0 %v4885
  %5865 = vmatprep.subr.bf16.mxu0 %v4882
  %5866 = vmatpush1.bf16.msra.mxu0 %v4881
  %5867 = vmatprep.subr.bf16.mxu0 %v4878
  %5868 = vmatpush1.bf16.msra.mxu0 %v4877
  %5869 = vmatprep.subr.bf16.mxu0 %v4874
  %5870 = vmatpush1.bf16.msra.mxu0 %v4873
  %5871 = vmatprep.subr.bf16.mxu0 %v4934
  %5872 = vmatpush2.bf16.msra.mxu0 %v4933
  %5873 = vmatprep.subr.bf16.mxu0 %v4930
  %5874 = vmatpush2.bf16.msra.mxu0 %v4929
  %5875 = vmatprep.subr.bf16.mxu0 %v4926
  %5876 = vmatpush2.bf16.msra.mxu0 %v4925
  %5877 = vmatprep.subr.bf16.mxu0 %v4922
  %5878 = vmatpush2.bf16.msra.mxu0 %v4921
  %5879 = vmatprep.subr.bf16.mxu0 %v4918
  %5880 = vmatpush2.bf16.msra.mxu0 %v4917
  %5881 = vmatprep.subr.bf16.mxu0 %v4914
  %5882 = vmatpush2.bf16.msra.mxu0 %v4913
  %5883 = vmatprep.subr.bf16.mxu0 %v4910
  %5884 = vmatpush2.bf16.msra.mxu0 %v4909
  %5885 = vmatprep.subr.bf16.mxu0 %v4906
  %5886 = vmatpush2.bf16.msra.mxu0 %v4905
  %5887 = vmatprep.mubr.bf16.mxu0 %v3200
  %5888 = vmatmul.mubr.bf16.gmra.mxu0 %v3199
  %v5889 = vpop.f32.mrf.mxu0
  %v5890 = vadd.f32 %v5847, %v5889
  %v5891 = vpop.f32.mrf.mxu0
  %v5892 = vadd.f32 %v5849, %v5891
  %v5893 = vpop.f32.mrf.mxu0
  %v5894 = vadd.f32 %v5851, %v5893
  %v5895 = vpop.f32.mrf.mxu0
  %v5896 = vadd.f32 %v5853, %v5895
  %5897 = vdwg.mxu0
  %5898 = vmatprep.subr.bf16.mxu0 %v4966
  %5899 = vmatpush1.bf16.msra.mxu0 %v4965
  %5900 = vmatprep.subr.bf16.mxu0 %v4962
  %5901 = vmatpush1.bf16.msra.mxu0 %v4961
  %5902 = vmatprep.subr.bf16.mxu0 %v4958
  %5903 = vmatpush1.bf16.msra.mxu0 %v4957
  %5904 = vmatprep.subr.bf16.mxu0 %v4954
  %5905 = vmatpush1.bf16.msra.mxu0 %v4953
  %5906 = vmatprep.subr.bf16.mxu0 %v4950
  %5907 = vmatpush1.bf16.msra.mxu0 %v4949
  %5908 = vmatprep.subr.bf16.mxu0 %v4946
  %5909 = vmatpush1.bf16.msra.mxu0 %v4945
  %5910 = vmatprep.subr.bf16.mxu0 %v4942
  %5911 = vmatpush1.bf16.msra.mxu0 %v4941
  %5912 = vmatprep.subr.bf16.mxu0 %v4938
  %5913 = vmatpush1.bf16.msra.mxu0 %v4937
  %5914 = vmatprep.subr.bf16.mxu0 %v4998
  %5915 = vmatpush2.bf16.msra.mxu0 %v4997
  %5916 = vmatprep.subr.bf16.mxu0 %v4994
  %5917 = vmatpush2.bf16.msra.mxu0 %v4993
  %5918 = vmatprep.subr.bf16.mxu0 %v4990
  %5919 = vmatpush2.bf16.msra.mxu0 %v4989
  %5920 = vmatprep.subr.bf16.mxu0 %v4986
  %5921 = vmatpush2.bf16.msra.mxu0 %v4985
  %5922 = vmatprep.subr.bf16.mxu0 %v4982
  %5923 = vmatpush2.bf16.msra.mxu0 %v4981
  %5924 = vmatprep.subr.bf16.mxu0 %v4978
  %5925 = vmatpush2.bf16.msra.mxu0 %v4977
  %5926 = vmatprep.subr.bf16.mxu0 %v4974
  %5927 = vmatpush2.bf16.msra.mxu0 %v4973
  %5928 = vmatprep.subr.bf16.mxu0 %v4970
  %5929 = vmatpush2.bf16.msra.mxu0 %v4969
  %5930 = vmatprep.mubr.bf16.mxu0 %v3202
  %5931 = vmatmul.mubr.bf16.gmra.mxu0 %v3201
  %v5932 = vpop.f32.mrf.mxu0
  %v5933 = vadd.f32 %v5890, %v5932
  %v5934 = vpop.f32.mrf.mxu0
  %v5935 = vadd.f32 %v5892, %v5934
  %v5936 = vpop.f32.mrf.mxu0
  %v5937 = vadd.f32 %v5894, %v5936
  %v5938 = vpop.f32.mrf.mxu0
  %v5939 = vadd.f32 %v5896, %v5938
  %5940 = vdwg.mxu0
  %5941 = vmatprep.subr.bf16.mxu0 %v5030
  %5942 = vmatpush1.bf16.msra.mxu0 %v5029
  %5943 = vmatprep.subr.bf16.mxu0 %v5026
  %5944 = vmatpush1.bf16.msra.mxu0 %v5025
  %5945 = vmatprep.subr.bf16.mxu0 %v5022
  %5946 = vmatpush1.bf16.msra.mxu0 %v5021
  %5947 = vmatprep.subr.bf16.mxu0 %v5018
  %5948 = vmatpush1.bf16.msra.mxu0 %v5017
  %5949 = vmatprep.subr.bf16.mxu0 %v5014
  %5950 = vmatpush1.bf16.msra.mxu0 %v5013
  %5951 = vmatprep.subr.bf16.mxu0 %v5010
  %5952 = vmatpush1.bf16.msra.mxu0 %v5009
  %5953 = vmatprep.subr.bf16.mxu0 %v5006
  %5954 = vmatpush1.bf16.msra.mxu0 %v5005
  %5955 = vmatprep.subr.bf16.mxu0 %v5002
  %5956 = vmatpush1.bf16.msra.mxu0 %v5001
  %5957 = vmatprep.subr.bf16.mxu0 %v5062
  %5958 = vmatpush2.bf16.msra.mxu0 %v5061
  %5959 = vmatprep.subr.bf16.mxu0 %v5058
  %5960 = vmatpush2.bf16.msra.mxu0 %v5057
  %5961 = vmatprep.subr.bf16.mxu0 %v5054
  %5962 = vmatpush2.bf16.msra.mxu0 %v5053
  %5963 = vmatprep.subr.bf16.mxu0 %v5050
  %5964 = vmatpush2.bf16.msra.mxu0 %v5049
  %5965 = vmatprep.subr.bf16.mxu0 %v5046
  %5966 = vmatpush2.bf16.msra.mxu0 %v5045
  %5967 = vmatprep.subr.bf16.mxu0 %v5042
  %5968 = vmatpush2.bf16.msra.mxu0 %v5041
  %5969 = vmatprep.subr.bf16.mxu0 %v5038
  %5970 = vmatpush2.bf16.msra.mxu0 %v5037
  %5971 = vmatprep.subr.bf16.mxu0 %v5034
  %5972 = vmatpush2.bf16.msra.mxu0 %v5033
  %5973 = vmatprep.mubr.bf16.mxu0 %v3204
  %5974 = vmatmul.mubr.bf16.gmra.mxu0 %v3203
  %v5975 = vpop.f32.mrf.mxu0
  %v5976 = vadd.f32 %v5933, %v5975
  %v5977 = vpop.f32.mrf.mxu0
  %v5978 = vadd.f32 %v5935, %v5977
  %v5979 = vpop.f32.mrf.mxu0
  %v5980 = vadd.f32 %v5937, %v5979
  %v5981 = vpop.f32.mrf.mxu0
  %v5982 = vadd.f32 %v5939, %v5981
  %5983 = vdwg.mxu0
  %5984 = vmatprep.subr.bf16.mxu0 %v5094
  %5985 = vmatpush1.bf16.msra.mxu0 %v5093
  %5986 = vmatprep.subr.bf16.mxu0 %v5090
  %5987 = vmatpush1.bf16.msra.mxu0 %v5089
  %5988 = vmatprep.subr.bf16.mxu0 %v5086
  %5989 = vmatpush1.bf16.msra.mxu0 %v5085
  %5990 = vmatprep.subr.bf16.mxu0 %v5082
  %5991 = vmatpush1.bf16.msra.mxu0 %v5081
  %5992 = vmatprep.subr.bf16.mxu0 %v5078
  %5993 = vmatpush1.bf16.msra.mxu0 %v5077
  %5994 = vmatprep.subr.bf16.mxu0 %v5074
  %5995 = vmatpush1.bf16.msra.mxu0 %v5073
  %5996 = vmatprep.subr.bf16.mxu0 %v5070
  %5997 = vmatpush1.bf16.msra.mxu0 %v5069
  %5998 = vmatprep.subr.bf16.mxu0 %v5066
  %5999 = vmatpush1.bf16.msra.mxu0 %v5065
  %6000 = vmatprep.subr.bf16.mxu0 %v5126
  %6001 = vmatpush2.bf16.msra.mxu0 %v5125
  %6002 = vmatprep.subr.bf16.mxu0 %v5122
  %6003 = vmatpush2.bf16.msra.mxu0 %v5121
  %6004 = vmatprep.subr.bf16.mxu0 %v5118
  %6005 = vmatpush2.bf16.msra.mxu0 %v5117
  %6006 = vmatprep.subr.bf16.mxu0 %v5114
  %6007 = vmatpush2.bf16.msra.mxu0 %v5113
  %6008 = vmatprep.subr.bf16.mxu0 %v5110
  %6009 = vmatpush2.bf16.msra.mxu0 %v5109
  %6010 = vmatprep.subr.bf16.mxu0 %v5106
  %6011 = vmatpush2.bf16.msra.mxu0 %v5105
  %6012 = vmatprep.subr.bf16.mxu0 %v5102
  %6013 = vmatpush2.bf16.msra.mxu0 %v5101
  %6014 = vmatprep.subr.bf16.mxu0 %v5098
  %6015 = vmatpush2.bf16.msra.mxu0 %v5097
  %6016 = vmatprep.mubr.bf16.mxu0 %v3206
  %6017 = vmatmul.mubr.bf16.gmra.mxu0 %v3205
  %v6018 = vpop.f32.mrf.mxu0
  %v6019 = vadd.f32 %v5976, %v6018
  %v6020 = vpop.f32.mrf.mxu0
  %v6021 = vadd.f32 %v5978, %v6020
  %v6022 = vpop.f32.mrf.mxu0
  %v6023 = vadd.f32 %v5980, %v6022
  %v6024 = vpop.f32.mrf.mxu0
  %v6025 = vadd.f32 %v5982, %v6024
  %6026 = vdwg.mxu0
  %6027 = vst [vmem:[%s7] sm:$0xff] %v5761
  %6028 = vst [vmem:[%s7 + $0x8] sm:$0xff] %v5763
  %6029 = vst [vmem:[%s7 + $0x10] sm:$0xff] %v6019
  %6030 = vst [vmem:[%s7 + $0x18] sm:$0xff] %v6021
  %6031 = vst [vmem:[%s7 + $0x20] sm:$0xff] %v5765
  %6032 = vst [vmem:[%s7 + $0x28] sm:$0xff] %v5767
  %6033 = vst [vmem:[%s7 + $0x30] sm:$0xff] %v6023
  %6034 = vst [vmem:[%s7 + $0x38] sm:$0xff] %v6025
  // Predicated region
  $region30: #{voxrex_forward.1} parent=0 // pred_check
    _
  $region31: #{voxrex_forward.1} parent=0 // pred_check_branch
    %6036 = sbr.rel (0) target = $region33
  $region32: #{voxrex_forward.1} parent=0 // pred_region
    _
  $region33: #{voxrex_forward.1} parent=0 // pred_fallthru
    _
  // Predicated region
  $region34: #{voxrex_forward.1} parent=0 // pred_check
    _
  $region35: #{voxrex_forward.1} parent=0 // pred_check_branch
    %6038 = sbr.rel (0) target = $region37
  $region36: #{voxrex_forward.1} parent=0 // pred_region
    _
  $region37: #{voxrex_forward.1} parent=0 // pred_fallthru
    _

</llo_original>
